<compile_context>
chip_gen: v7x
topology: tpu7x:2x2x1
jax: 0.10.0
libtpu: 0.0.40
codegen_flags: <defaults>
</compile_context>

<pallas_src>
import functools

import jax
import jax.numpy as jnp
from jax.experimental import pallas as pl
from jax.experimental.pallas import tpu as pltpu


# --------------------------------------------------------------------------- helpers

def _layernorm(x, g, b, eps):
    mu = jnp.mean(x, axis=-1, keepdims=True)
    xc = x - mu
    var = jnp.mean(xc * xc, axis=-1, keepdims=True)
    return xc * jax.lax.rsqrt(var + eps) * g + b


# ------------------------------------------------------------------- patch embedding

def _patch_embed_kernel(x_ref, w_ref, b_ref, o_ref):
    acc = jnp.dot(x_ref[...].astype(jnp.bfloat16), w_ref[...],
                  preferred_element_type=jnp.float32)
    o_ref[...] = (acc + b_ref[...]).astype(o_ref.dtype)


def patch_embed(patches, w, b):
    # Conv2d(C, D, kernel=p, stride=p) expressed as unfold (wrapper) + matmul (kernel).
    M, K = patches.shape
    N = w.shape[1]
    tm = 256
    M_pad = ((M + 7) // 8) * 8
    if M_pad <= tm:
        tm = M_pad
    else:
        M_pad = ((M_pad + tm - 1) // tm) * tm
    if M_pad != M:
        patches = jnp.pad(patches, ((0, M_pad - M), (0, 0)))
    out = pl.pallas_call(
        _patch_embed_kernel,
        grid=(M_pad // tm,),
        in_specs=[
            pl.BlockSpec((tm, K), lambda i: (i, 0)),
            pl.BlockSpec((K, N), lambda i: (0, 0)),
            pl.BlockSpec((1, N), lambda i: (0, 0)),
        ],
        out_specs=pl.BlockSpec((tm, N), lambda i: (i, 0)),
        out_shape=jax.ShapeDtypeStruct((M_pad, N), jnp.float32),
        compiler_params=pltpu.CompilerParams(dimension_semantics=("parallel",)),
    )(patches, w, b)
    return out[:M] if M_pad != M else out


# --------------------------------------------------------- fused transformer block stack

def _vit_stack_kernel(x_ref, bias_ref, vec_ref, qkvw_ref, projw_ref, fc1w_ref, fc2w_ref,
                      o_ref, xs, *, heads, eps):
    d_idx = pl.program_id(0)
    B, n_pad, dim = x_ref.shape
    mlp = fc1w_ref.shape[2]
    dh = dim // heads
    scale = dh ** -0.5

    @pl.when(d_idx == 0)
    def _():
        # load the residual stream for the WHOLE batch once; it stays VMEM-resident
        xs[...] = x_ref[...].reshape(B * n_pad, dim).astype(jnp.float32)

    x = xs[...]                                       # (B*N, D) f32

    # packed per-block vectors: one DMA per depth step, sliced here (static row indices)
    vecs = vec_ref[0]                                 # (10, W) f32
    ln1_g, ln1_b = vecs[0:1, :dim], vecs[1:2, :dim]
    qkv_b = vecs[2:3, :3 * dim]
    proj_b = vecs[3:4, :dim]
    ls1 = vecs[4:5, :dim]
    ln2_g, ln2_b = vecs[5:6, :dim], vecs[6:7, :dim]
    fc1_b = vecs[7:8, :mlp]
    fc2_b = vecs[8:9, :dim]
    ls2 = vecs[9:10, :dim]

    key_bias = bias_ref[...]                          # (1, N): 0 real keys, -1e30 padded

    # ---- attention branch: LN -> QKV -> grouped MHSA -> ONE out-projection -> LS -> residual
    h = _layernorm(x, ln1_g, ln1_b, eps)
    qkv = jnp.dot(h.astype(jnp.bfloat16), qkvw_ref[0],
                  preferred_element_type=jnp.float32) + qkv_b          # (B*N, 3D) f32
    qkv3 = qkv.reshape(B, n_pad, 3 * dim)

    # TODO(synk): at ViT-L scale pre-pack qkv_w so per-head q/k/v slices start on 128-aligned
    #             lane offsets (dh=64 slices cause lane relayouts); moot at toy dim=64.
    ctx_heads = []
    for hh in range(heads):                            # static head loop, all in VMEM
        q = qkv3[:, :, hh * dh:(hh + 1) * dh]
        k = qkv3[:, :, dim + hh * dh:dim + (hh + 1) * dh]
        v = qkv3[:, :, 2 * dim + hh * dh:2 * dim + (hh + 1) * dh]
        s = jnp.einsum('bqd,bkd->bqk', q.astype(jnp.bfloat16), k.astype(jnp.bfloat16),
                       preferred_element_type=jnp.float32) * scale
        s = s + key_bias                               # mask padded key tokens
        p = jnp.exp(s - jnp.max(s, axis=-1, keepdims=True))
        p = p * pl.reciprocal(jnp.sum(p, axis=-1, keepdims=True), approx=True)
        ctx_heads.append(jnp.einsum('bqk,bkd->bqd', p.astype(jnp.bfloat16),
                                    v.astype(jnp.bfloat16),
                                    preferred_element_type=jnp.float32))
    ctx = jnp.concatenate(ctx_heads, axis=-1).reshape(B * n_pad, dim)
    attn_out = jnp.dot(ctx.astype(jnp.bfloat16), projw_ref[0],
                       preferred_element_type=jnp.float32) + proj_b    # single D-wide proj
    x = x + ls1 * attn_out

    # ---- MLP branch: LN -> fc1 -> GELU -> fc2 -> LS -> residual
    h = _layernorm(x, ln2_g, ln2_b, eps)
    h = jnp.dot(h.astype(jnp.bfloat16), fc1w_ref[0],
                preferred_element_type=jnp.float32) + fc1_b
    # TODO(synk): timm ViT uses exact (erf) GELU; tanh approximation used for TPU lowering.
    h = jax.nn.gelu(h, approximate=True)
    h = jnp.dot(h.astype(jnp.bfloat16), fc2w_ref[0],
                preferred_element_type=jnp.float32) + fc2_b
    x = x + ls2 * h

    xs[...] = x

    # only the final block's result is stored, and only the sublane tile holding the cls token
    @pl.when(d_idx == pl.num_programs(0) - 1)
    def _():
        o_ref[...] = x.reshape(B, n_pad, dim)[:, :o_ref.shape[1], :].astype(o_ref.dtype)


def vit_blocks(x_tokens, key_bias, params, *, heads, eps=1e-6):
    B, n_pad, dim = x_tokens.shape
    depth = params["qkv_w"].shape[0]
    mlp = params["fc1_w"].shape[-1]
    nvec, vw = params["blk_vec"].shape[1], params["blk_vec"].shape[2]
    out_rows = 8                                       # first sublane tile (contains cls)

    wspec = lambda k, n: pl.BlockSpec((1, k, n), lambda d: (d, 0, 0))

    # grid=(depth,): weights DMA'd once per block and reused across the whole batch.
    # TODO(synk): at B>=4 on v7x, additionally shard a batch grid axis "parallel" across
    #             the 2 TensorCores (each TC then refetches its own weight copy).
    return pl.pallas_call(
        functools.partial(_vit_stack_kernel, heads=heads, eps=eps),
        grid=(depth,),
        in_specs=[
            pl.BlockSpec((B, n_pad, dim), lambda d: (0, 0, 0)),   # tokens (loaded once)
            pl.BlockSpec((1, n_pad), lambda d: (0, 0)),           # key-mask bias
            wspec(nvec, vw),                                      # packed per-block vectors
            wspec(dim, 3 * dim),                                  # qkv weight
            wspec(dim, dim),                                      # out-projection weight
            wspec(dim, mlp),                                      # fc1 weight
            wspec(mlp, dim),                                      # fc2 weight
        ],
        out_specs=pl.BlockSpec((B, out_rows, dim), lambda d: (0, 0, 0)),
        out_shape=jax.ShapeDtypeStruct((B, out_rows, dim), x_tokens.dtype),
        scratch_shapes=[pltpu.VMEM((B * n_pad, dim), jnp.float32)],
        compiler_params=pltpu.CompilerParams(dimension_semantics=("arbitrary",)),
    )(x_tokens, key_bias, params["blk_vec"],
      params["qkv_w"], params["proj_w"], params["fc1_w"], params["fc2_w"])


# ------------------------------------------- fused final-norm + multitask heads + gate

def _head_gate_kernel(x_ref, ng, nb, hw1, hb1, hw2, hb2, gw1, gb1, gw2, gb2,
                      ho_ref, gate_ref, *, eps):
    f = _layernorm(x_ref[...].astype(jnp.float32), ng[...], nb[...], eps)
    fb = f.astype(jnp.bfloat16)

    # all task heads at once: packed first layer, block-diagonal second layer (lane-dense out)
    h = jnp.maximum(jnp.dot(fb, hw1[...], preferred_element_type=jnp.float32) + hb1[...], 0.0)
    out = jnp.dot(h.astype(jnp.bfloat16), hw2[...],
                  preferred_element_type=jnp.float32) + hb2[...]
    ho_ref[...] = out.astype(ho_ref.dtype)

    # task-attention gate: Linear -> ReLU -> Linear -> Softmax(dim=1)  (EXACT reciprocal)
    g = jnp.maximum(jnp.dot(fb, gw1[...], preferred_element_type=jnp.float32) + gb1[...], 0.0)
    logits = jnp.dot(g.astype(jnp.bfloat16), gw2[...],
                     preferred_element_type=jnp.float32) + gb2[...]
    e = jnp.exp(logits - jnp.max(logits, axis=-1, keepdims=True))
    gate_ref[...] = (e / jnp.sum(e, axis=-1, keepdims=True)).astype(gate_ref.dtype)


def heads_and_gate(features, params, eps=1e-6):
    B, dim = features.shape
    t256 = params["head_w1"].shape[1]
    tout = params["head_w2"].shape[1]
    ghid = params["attn_w1"].shape[1]
    ntask = params["attn_w2"].shape[1]

    def full(shape):                  # all 2-D, full-array blocks (tiny at T=3, out=1)
        return pl.BlockSpec(shape, lambda i: (0, 0))

    return pl.pallas_call(
        functools.partial(_head_gate_kernel, eps=eps),
        grid=(1,),
        in_specs=[
            full((B, dim)),
            full((1, dim)), full((1, dim)),
            full((dim, t256)), full((1, t256)),
            full((t256, tout)), full((1, tout)),
            full((dim, ghid)), full((1, ghid)),
            full((ghid, ntask)), full((1, ntask)),
        ],
        out_specs=(full((B, tout)), full((B, ntask))),
        out_shape=(jax.ShapeDtypeStruct((B, tout), features.dtype),
                   jax.ShapeDtypeStruct((B, ntask), features.dtype)),
    )(features, params["norm_g"], params["norm_b"],
      params["head_w1"], params["head_b1"], params["head_w2"], params["head_b2"],
      params["attn_w1"], params["attn_b1"], params["attn_w2"], params["attn_b2"])


# ------------------------------------------------------------------------ params / model

def init_params(key, cfg):
    dim, depth, mlp = cfg["dim"], cfg["depth"], cfg["mlp"]
    p, C, T = cfg["patch"], cfg["in_chans"], cfg["num_tasks"]
    out_dim = cfg["output_dim"]
    n_tok = cfg["num_patches"] + 1
    f32, bf16 = jnp.float32, jnp.bfloat16

    vw = ((max(3 * dim, mlp, dim) + 127) // 128) * 128   # lane-aligned packed-vector width

    def nrm(k, shape, scale=0.02):
        return scale * jax.random.normal(k, shape, f32)

    def row(v):
        return jnp.pad(v, (0, vw - v.shape[0]))

    keys = jax.random.split(key, 7 + depth)

    qkv_w, proj_w, fc1_w, fc2_w, vec_rows = [], [], [], [], []
    for d in range(depth):
        bk = jax.random.split(keys[7 + d], 4)
        qkv_w.append(nrm(bk[0], (dim, 3 * dim)))
        proj_w.append(nrm(bk[1], (dim, dim)))
        fc1_w.append(nrm(bk[2], (dim, mlp)))
        fc2_w.append(nrm(bk[3], (mlp, dim)))
        # all small per-block f32 vectors packed into one (10, W) slab -> one DMA per step
        vec_rows.append(jnp.stack([
            row(jnp.ones((dim,), f32)),                       # 0 ln1_g
            row(jnp.zeros((dim,), f32)),                      # 1 ln1_b
            row(jnp.zeros((3 * dim,), f32)),                  # 2 qkv_b
            row(jnp.zeros((dim,), f32)),                      # 3 proj_b
            row(jnp.full((dim,), cfg["init_values"], f32)),   # 4 ls1
            row(jnp.ones((dim,), f32)),                       # 5 ln2_g
            row(jnp.zeros((dim,), f32)),                      # 6 ln2_b
            row(jnp.zeros((mlp,), f32)),                      # 7 fc1_b
            row(jnp.zeros((dim,), f32)),                      # 8 fc2_b
            row(jnp.full((dim,), cfg["init_values"], f32)),   # 9 ls2
        ]))

    params = {
        "qkv_w": jnp.stack(qkv_w).astype(bf16),
        "proj_w": jnp.stack(proj_w).astype(bf16),
        "fc1_w": jnp.stack(fc1_w).astype(bf16),
        "fc2_w": jnp.stack(fc2_w).astype(bf16),
        "blk_vec": jnp.stack(vec_rows),
    }

    # heads: ModuleList of [Linear(D,256), ReLU, Linear(256,out_dim)] — packed once here:
    # first layers side-by-side along lanes, second layers as one block-diagonal matrix.
    head_w1 = nrm(keys[3], (T, dim, 256))
    head_w2 = nrm(keys[4], (T, 256, out_dim))
    w1_packed = jnp.transpose(head_w1, (1, 0, 2)).reshape(dim, T * 256)
    w2_bd = jnp.zeros((T * 256, T * out_dim), f32)
    for t in range(T):
        w2_bd = w2_bd.at[t * 256:(t + 1) * 256, t * out_dim:(t + 1) * out_dim].set(head_w2[t])

    params.update({
        "patch_w": nrm(keys[0], (C * p * p, dim)).astype(bf16),
        "patch_b": jnp.zeros((1, dim), f32),
        "cls": nrm(keys[1], (1, 1, dim)),
        "pos": nrm(keys[2], (1, n_tok, dim)),
        "norm_g": jnp.ones((1, dim), f32),
        "norm_b": jnp.zeros((1, dim), f32),
        "head_w1": w1_packed.astype(bf16),
        "head_b1": jnp.zeros((1, T * 256), f32),
        "head_w2": w2_bd.astype(bf16),
        "head_b2": jnp.zeros((1, T * out_dim), f32),
        # attention gate: Linear(D,128), ReLU, Linear(128,T), Softmax(dim=1)
        "attn_w1": nrm(keys[5], (dim, 128)).astype(bf16),
        "attn_b1": jnp.zeros((1, 128), f32),
        "attn_w2": nrm(keys[6], (128, T)).astype(bf16),
        "attn_b2": jnp.zeros((1, T), f32),
    })
    return params


def uni_multitask_forward(x_nchw, params, cfg):
    B, C, Himg, Wimg = x_nchw.shape
    p, dim, heads = cfg["patch"], cfg["dim"], cfg["heads"]
    Hp, Wp = Himg // p, Wimg // p
    P = Hp * Wp
    n_tok = P + 1
    n_pad = cfg["n_pad"]

    # patch_embed: Conv2d(C, D, kernel=p, stride=p) == unfold (wrapper) + matmul (Pallas)
    patches = (x_nchw.reshape(B, C, Hp, p, Wp, p)
               .transpose(0, 2, 4, 1, 3, 5)
               .reshape(B * P, C * p * p))
    tok = patch_embed(patches, params["patch_w"], params["patch_b"]).reshape(B, P, dim)

    cls = jnp.broadcast_to(params["cls"], (B, 1, dim))
    x = jnp.concatenate([cls, tok], axis=1) + params["pos"]   # pos_drop == Identity (eval)
    # pad token axis to a 16-multiple (bf16 sublane packing); padded keys get -1e30 bias
    x = jnp.pad(x, ((0, 0), (0, n_pad - n_tok), (0, 0)))
    key_bias = jnp.where(jnp.arange(n_pad) < n_tok, 0.0, -1e30)
    key_bias = key_bias.reshape(1, n_pad).astype(jnp.float32)

    x = vit_blocks(x, key_bias, params, heads=heads)          # (B, 8, dim) — cls tile only

    cls_tok = x[:, 0, :]                                      # class-token pooling; head == Identity
    head_flat, cluster_probs = heads_and_gate(cls_tok, params)  # (B, T*out), (B, T)

    out_dim = cfg["output_dim"]
    outputs = [head_flat[:, t * out_dim:(t + 1) * out_dim] for t in range(cfg["num_tasks"])]
    return outputs, cluster_probs


# ----------------------------------------------------------------------------- main

if __name__ == "__main__":
    cfg = dict(
        img=32, patch=16, in_chans=3,
        dim=64, depth=2, heads=4, mlp=256,       # small synthetic stand-in for ViT-L/16
        init_values=1e-5,
        num_tasks=3, output_dim=1,
    )
    cfg["num_patches"] = (cfg["img"] // cfg["patch"]) ** 2
    cfg["n_pad"] = ((cfg["num_patches"] + 1 + 15) // 16) * 16  # token count padded to 16-multiple

    root = jax.random.PRNGKey(0)
    k_x, k_p = jax.random.split(root)
    params = init_params(k_p, cfg)

    B = 2
    x = jax.random.normal(k_x, (B, cfg["in_chans"], cfg["img"], cfg["img"]), jnp.float32)

    fwd = jax.jit(functools.partial(uni_multitask_forward, cfg=cfg))
    outputs, cluster_probs = fwd(x, params)
    jax.block_until_ready(cluster_probs)
    for o in outputs:
        jax.block_until_ready(o)

    assert cluster_probs.shape == (B, cfg["num_tasks"])
    assert len(outputs) == cfg["num_tasks"]
    assert all(o.shape == (B, cfg["output_dim"]) for o in outputs)
    print("KERNEL_OK")
</pallas_src>

<mosaic_0001>
module attributes {stable_mosaic.version = 11 : i64} {
  func.func @_patch_embed_kernel(%arg0: i32, %arg1: memref<8x768xf32, #tpu.memory_space<vmem>>, %arg2: memref<768x64xbf16, #tpu.memory_space<vmem>>, %arg3: memref<1x64xf32, #tpu.memory_space<vmem>>, %arg4: memref<8x64xf32, #tpu.memory_space<vmem>>) attributes {dimension_semantics = [#tpu.dimension_semantics<parallel>], iteration_bounds = array<i64: 1>, scalar_prefetch = 0 : i64, scratch_operands = 0 : i64, tpu.core_type = #tpu.core_type<tc>, window_params = [{transform_indices = @transform_0, window_bounds = array<i64: 8, 768>}, {pipeline_mode = #tpu.pipeline_mode<synchronous>, transform_indices = @transform_1, window_bounds = array<i64: 768, 64>}, {pipeline_mode = #tpu.pipeline_mode<synchronous>, transform_indices = @transform_2, window_bounds = array<i64: 1, 64>}, {transform_indices = @transform_3, window_bounds = array<i64: 8, 64>}]} {
    %c0 = arith.constant 0 : index
    %c0_0 = arith.constant 0 : index
    %0 = vector.load %arg1[%c0, %c0_0] : memref<8x768xf32, #tpu.memory_space<vmem>>, vector<8x768xf32>
    %1 = arith.truncf %0 : vector<8x768xf32> to vector<8x768xbf16>
    %c0_1 = arith.constant 0 : index
    %c0_2 = arith.constant 0 : index
    %2 = vector.load %arg2[%c0_1, %c0_2] : memref<768x64xbf16, #tpu.memory_space<vmem>>, vector<768x64xbf16>
    %cst = arith.constant dense<0.000000e+00> : vector<8x64xf32>
    %3 = tpu.matmul %1, %2, %cst {dimension_numbers = #tpu.dot_dimension_numbers<[1], [0], [0], [1], [0, 0, 1, 1], [], []>} : vector<8x768xbf16>, vector<768x64xbf16>, vector<8x64xf32> -> vector<8x64xf32>
    %c0_3 = arith.constant 0 : index
    %c0_4 = arith.constant 0 : index
    %4 = vector.load %arg3[%c0_3, %c0_4] : memref<1x64xf32, #tpu.memory_space<vmem>>, vector<1x64xf32>
    %5 = vector.broadcast %4 : vector<1x64xf32> to vector<8x64xf32>
    %6 = arith.addf %3, %5 : vector<8x64xf32>
    %c0_5 = arith.constant 0 : index
    %c0_6 = arith.constant 0 : index
    %7 = vector.load %arg4[%c0_5, %c0_6] : memref<8x64xf32, #tpu.memory_space<vmem>>, vector<8x64xf32>
    tpu.vector_store %arg4[%c0_5, %c0_6], %6 {strides = array<i32>} : memref<8x64xf32, #tpu.memory_space<vmem>>, vector<8x64xf32>,
    return
  }
  func.func @transform_0(%arg0: i32) -> (i32, i32) {
    %c0_i32 = arith.constant 0 : i32
    %c0_i32_0 = arith.constant 0 : i32
    return %arg0, %c0_i32 : i32, i32
  }
  func.func @transform_1(%arg0: i32) -> (i32, i32) {
    %c0_i32 = arith.constant 0 : i32
    %c0_i32_0 = arith.constant 0 : i32
    %c0_i32_1 = arith.constant 0 : i32
    return %c0_i32, %c0_i32_0 : i32, i32
  }
  func.func @transform_2(%arg0: i32) -> (i32, i32) {
    %c0_i32 = arith.constant 0 : i32
    %c0_i32_0 = arith.constant 0 : i32
    %c0_i32_1 = arith.constant 0 : i32
    return %c0_i32, %c0_i32_0 : i32, i32
  }
  func.func @transform_3(%arg0: i32) -> (i32, i32) {
    %c0_i32 = arith.constant 0 : i32
    %c0_i32_0 = arith.constant 0 : i32
    return %arg0, %c0_i32 : i32, i32
  }
}

module attributes {stable_mosaic.version = 11 : i64} {
  func.func @_vit_stack_kernel(%arg0: i32, %arg1: memref<2x16x64xf32, #tpu.memory_space<vmem>>, %arg2: memref<1x16xf32, #tpu.memory_space<vmem>>, %arg3: memref<1x10x256xf32, #tpu.memory_space<vmem>>, %arg4: memref<1x64x192xbf16, #tpu.memory_space<vmem>>, %arg5: memref<1x64x64xbf16, #tpu.memory_space<vmem>>, %arg6: memref<1x64x256xbf16, #tpu.memory_space<vmem>>, %arg7: memref<1x256x64xbf16, #tpu.memory_space<vmem>>, %arg8: memref<2x8x64xf32, #tpu.memory_space<vmem>>, %arg9: memref<32x64xf32, #tpu.memory_space<vmem>>) attributes {dimension_semantics = [#tpu.dimension_semantics<arbitrary>], iteration_bounds = array<i64: 2>, scalar_prefetch = 0 : i64, scratch_operands = 1 : i64, tpu.core_type = #tpu.core_type<tc>, window_params = [{pipeline_mode = #tpu.pipeline_mode<synchronous>, transform_indices = @transform_0, window_bounds = array<i64: 2, 16, 64>}, {pipeline_mode = #tpu.pipeline_mode<synchronous>, transform_indices = @transform_1, window_bounds = array<i64: 1, 16>}, {transform_indices = @transform_2, window_bounds = array<i64: 1, 10, 256>}, {transform_indices = @transform_3, window_bounds = array<i64: 1, 64, 192>}, {transform_indices = @transform_4, window_bounds = array<i64: 1, 64, 64>}, {transform_indices = @transform_5, window_bounds = array<i64: 1, 64, 256>}, {transform_indices = @transform_6, window_bounds = array<i64: 1, 256, 64>}, {pipeline_mode = #tpu.pipeline_mode<synchronous>, transform_indices = @transform_7, window_bounds = array<i64: 2, 8, 64>}]} {
    %c0_i32 = arith.constant 0 : i32
    %0 = arith.cmpi eq, %arg0, %c0_i32 : i32
    %1 = arith.extui %0 : i1 to i32
    %c0_i32_0 = arith.constant 0 : i32
    %2 = arith.cmpi ne, %1, %c0_i32_0 : i32
    scf.if %2 {
      %c0_59 = arith.constant 0 : index
      %c0_60 = arith.constant 0 : index
      %c0_61 = arith.constant 0 : index
      %203 = vector.load %arg1[%c0_59, %c0_60, %c0_61] : memref<2x16x64xf32, #tpu.memory_space<vmem>>, vector<2x16x64xf32>
      %204 = vector.shape_cast %203 : vector<2x16x64xf32> to vector<32x64xf32>
      %c0_62 = arith.constant 0 : index
      %c0_63 = arith.constant 0 : index
      %205 = vector.load %arg9[%c0_62, %c0_63] : memref<32x64xf32, #tpu.memory_space<vmem>>, vector<32x64xf32>
      tpu.vector_store %arg9[%c0_62, %c0_63], %204 {strides = array<i32>} : memref<32x64xf32, #tpu.memory_space<vmem>>, vector<32x64xf32>,
    } else {
    }
    %c0 = arith.constant 0 : index
    %c0_1 = arith.constant 0 : index
    %3 = vector.load %arg9[%c0, %c0_1] : memref<32x64xf32, #tpu.memory_space<vmem>>, vector<32x64xf32>
    %c0_2 = arith.constant 0 : index
    %c0_3 = arith.constant 0 : index
    %c0_4 = arith.constant 0 : index
    %4 = vector.load %arg3[%c0_2, %c0_3, %c0_4] : memref<1x10x256xf32, #tpu.memory_space<vmem>>, vector<1x10x256xf32>
    %5 = vector.shape_cast %4 : vector<1x10x256xf32> to vector<10x256xf32>
    %6 = vector.extract_strided_slice %5 {offsets = [0, 0], sizes = [1, 64], strides = [1, 1]} : vector<10x256xf32> to vector<1x64xf32>
    %7 = vector.extract_strided_slice %5 {offsets = [1, 0], sizes = [1, 64], strides = [1, 1]} : vector<10x256xf32> to vector<1x64xf32>
    %8 = vector.extract_strided_slice %5 {offsets = [2, 0], sizes = [1, 192], strides = [1, 1]} : vector<10x256xf32> to vector<1x192xf32>
    %9 = vector.extract_strided_slice %5 {offsets = [3, 0], sizes = [1, 64], strides = [1, 1]} : vector<10x256xf32> to vector<1x64xf32>
    %10 = vector.extract_strided_slice %5 {offsets = [4, 0], sizes = [1, 64], strides = [1, 1]} : vector<10x256xf32> to vector<1x64xf32>
    %11 = vector.extract_strided_slice %5 {offsets = [5, 0], sizes = [1, 64], strides = [1, 1]} : vector<10x256xf32> to vector<1x64xf32>
    %12 = vector.extract_strided_slice %5 {offsets = [6, 0], sizes = [1, 64], strides = [1, 1]} : vector<10x256xf32> to vector<1x64xf32>
    %13 = vector.extract_strided_slice %5 {offsets = [7, 0], sizes = [1, 256], strides = [1, 1]} : vector<10x256xf32> to vector<1x256xf32>
    %14 = vector.extract_strided_slice %5 {offsets = [8, 0], sizes = [1, 64], strides = [1, 1]} : vector<10x256xf32> to vector<1x64xf32>
    %15 = vector.extract_strided_slice %5 {offsets = [9, 0], sizes = [1, 64], strides = [1, 1]} : vector<10x256xf32> to vector<1x64xf32>
    %c0_5 = arith.constant 0 : index
    %c0_6 = arith.constant 0 : index
    %16 = vector.load %arg2[%c0_5, %c0_6] : memref<1x16xf32, #tpu.memory_space<vmem>>, vector<1x16xf32>
    %cst = arith.constant dense<0.000000e+00> : vector<32xf32>
    %17 = vector.multi_reduction <add>, %3, %cst [1] : vector<32x64xf32> to vector<32xf32>
    %18 = vector.shape_cast %17 : vector<32xf32> to vector<32x1xf32>
    %cst_7 = arith.constant 6.400000e+01 : f32
    %19 = vector.broadcast %cst_7 : f32 to vector<32x1xf32>
    %20 = arith.divf %18, %19 : vector<32x1xf32>
    %21 = vector.broadcast %20 : vector<32x1xf32> to vector<32x64xf32>
    %22 = arith.subf %3, %21 : vector<32x64xf32>
    %23 = arith.mulf %22, %22 : vector<32x64xf32>
    %cst_8 = arith.constant dense<0.000000e+00> : vector<32xf32>
    %24 = vector.multi_reduction <add>, %23, %cst_8 [1] : vector<32x64xf32> to vector<32xf32>
    %25 = vector.shape_cast %24 : vector<32xf32> to vector<32x1xf32>
    %cst_9 = arith.constant 6.400000e+01 : f32
    %26 = vector.broadcast %cst_9 : f32 to vector<32x1xf32>
    %27 = arith.divf %25, %26 : vector<32x1xf32>
    %cst_10 = arith.constant 9.99999997E-7 : f32
    %28 = vector.broadcast %cst_10 : f32 to vector<32x1xf32>
    %29 = arith.addf %27, %28 : vector<32x1xf32>
    %30 = math.rsqrt %29 : vector<32x1xf32>
    %31 = vector.broadcast %30 : vector<32x1xf32> to vector<32x64xf32>
    %32 = arith.mulf %22, %31 : vector<32x64xf32>
    %33 = vector.broadcast %6 : vector<1x64xf32> to vector<32x64xf32>
    %34 = arith.mulf %32, %33 : vector<32x64xf32>
    %35 = vector.broadcast %7 : vector<1x64xf32> to vector<32x64xf32>
    %36 = arith.addf %34, %35 : vector<32x64xf32>
    %37 = arith.truncf %36 : vector<32x64xf32> to vector<32x64xbf16>
    %c0_11 = arith.constant 0 : index
    %c0_12 = arith.constant 0 : index
    %c0_13 = arith.constant 0 : index
    %38 = vector.load %arg4[%c0_11, %c0_12, %c0_13] : memref<1x64x192xbf16, #tpu.memory_space<vmem>>, vector<1x64x192xbf16>
    %39 = vector.shape_cast %38 : vector<1x64x192xbf16> to vector<64x192xbf16>
    %cst_14 = arith.constant dense<0.000000e+00> : vector<32x192xf32>
    %40 = tpu.matmul %37, %39, %cst_14 {dimension_numbers = #tpu.dot_dimension_numbers<[1], [0], [0], [1], [0, 0, 1, 1], [], []>} : vector<32x64xbf16>, vector<64x192xbf16>, vector<32x192xf32> -> vector<32x192xf32>
    %41 = vector.broadcast %8 : vector<1x192xf32> to vector<32x192xf32>
    %42 = arith.addf %40, %41 : vector<32x192xf32>
    %43 = vector.shape_cast %42 : vector<32x192xf32> to vector<2x16x192xf32>
    %44 = vector.extract_strided_slice %43 {offsets = [0, 0, 0], sizes = [2, 16, 16], strides = [1, 1, 1]} : vector<2x16x192xf32> to vector<2x16x16xf32>
    %45 = vector.extract_strided_slice %43 {offsets = [0, 0, 64], sizes = [2, 16, 16], strides = [1, 1, 1]} : vector<2x16x192xf32> to vector<2x16x16xf32>
    %46 = vector.extract_strided_slice %43 {offsets = [0, 0, 128], sizes = [2, 16, 16], strides = [1, 1, 1]} : vector<2x16x192xf32> to vector<2x16x16xf32>
    %47 = arith.truncf %44 : vector<2x16x16xf32> to vector<2x16x16xbf16>
    %48 = arith.truncf %45 : vector<2x16x16xf32> to vector<2x16x16xbf16>
    "tpu.trace_start"() <{level = 10 : i32, message = "bqd,bkd->bqk"}> : () -> ()
    %cst_15 = arith.constant dense<0.000000e+00> : vector<2x16x16xf32>
    %49 = tpu.matmul %47, %48, %cst_15 {dimension_numbers = #tpu.dot_dimension_numbers<[2], [2], [1], [1], [0, 0, 0, 1, 1, 1], [0], [0]>} : vector<2x16x16xbf16>, vector<2x16x16xbf16>, vector<2x16x16xf32> -> vector<2x16x16xf32>
    "tpu.trace_stop"() : () -> ()
    %cst_16 = arith.constant 2.500000e-01 : f32
    %50 = vector.broadcast %cst_16 : f32 to vector<2x16x16xf32>
    %51 = arith.mulf %49, %50 : vector<2x16x16xf32>
    %52 = vector.shape_cast %16 : vector<1x16xf32> to vector<1x1x16xf32>
    %53 = vector.broadcast %52 : vector<1x1x16xf32> to vector<2x16x16xf32>
    %54 = arith.addf %51, %53 : vector<2x16x16xf32>
    %cst_17 = arith.constant dense<0xFF800000> : vector<2x16xf32>
    %55 = vector.multi_reduction <maximumf>, %54, %cst_17 [2] : vector<2x16x16xf32> to vector<2x16xf32>
    %56 = vector.shape_cast %55 : vector<2x16xf32> to vector<2x16x1xf32>
    %57 = vector.broadcast %56 : vector<2x16x1xf32> to vector<2x16x16xf32>
    %58 = arith.subf %54, %57 : vector<2x16x16xf32>
    %59 = math.exp %58 : vector<2x16x16xf32>
    %cst_18 = arith.constant dense<0.000000e+00> : vector<2x16xf32>
    %60 = vector.multi_reduction <add>, %59, %cst_18 [2] : vector<2x16x16xf32> to vector<2x16xf32>
    %61 = vector.shape_cast %60 : vector<2x16xf32> to vector<2x16x1xf32>
    %62 = tpu.reciprocal %61 {approx = true} : vector<2x16x1xf32> -> vector<2x16x1xf32>
    %63 = vector.broadcast %62 : vector<2x16x1xf32> to vector<2x16x16xf32>
    %64 = arith.mulf %59, %63 : vector<2x16x16xf32>
    %65 = arith.truncf %64 : vector<2x16x16xf32> to vector<2x16x16xbf16>
    %66 = arith.truncf %46 : vector<2x16x16xf32> to vector<2x16x16xbf16>
    "tpu.trace_start"() <{level = 10 : i32, message = "bqk,bkd->bqd"}> : () -> ()
    %cst_19 = arith.constant dense<0.000000e+00> : vector<2x16x16xf32>
    %67 = tpu.matmul %65, %66, %cst_19 {dimension_numbers = #tpu.dot_dimension_numbers<[2], [1], [1], [2], [0, 0, 0, 1, 1, 2], [0], [0]>} : vector<2x16x16xbf16>, vector<2x16x16xbf16>, vector<2x16x16xf32> -> vector<2x16x16xf32>
    "tpu.trace_stop"() : () -> ()
    %68 = vector.extract_strided_slice %43 {offsets = [0, 0, 16], sizes = [2, 16, 16], strides = [1, 1, 1]} : vector<2x16x192xf32> to vector<2x16x16xf32>
    %69 = vector.extract_strided_slice %43 {offsets = [0, 0, 80], sizes = [2, 16, 16], strides = [1, 1, 1]} : vector<2x16x192xf32> to vector<2x16x16xf32>
    %70 = vector.extract_strided_slice %43 {offsets = [0, 0, 144], sizes = [2, 16, 16], strides = [1, 1, 1]} : vector<2x16x192xf32> to vector<2x16x16xf32>
    %71 = arith.truncf %68 : vector<2x16x16xf32> to vector<2x16x16xbf16>
    %72 = arith.truncf %69 : vector<2x16x16xf32> to vector<2x16x16xbf16>
    "tpu.trace_start"() <{level = 10 : i32, message = "bqd,bkd->bqk"}> : () -> ()
    %cst_20 = arith.constant dense<0.000000e+00> : vector<2x16x16xf32>
    %73 = tpu.matmul %71, %72, %cst_20 {dimension_numbers = #tpu.dot_dimension_numbers<[2], [2], [1], [1], [0, 0, 0, 1, 1, 1], [0], [0]>} : vector<2x16x16xbf16>, vector<2x16x16xbf16>, vector<2x16x16xf32> -> vector<2x16x16xf32>
    "tpu.trace_stop"() : () -> ()
    %cst_21 = arith.constant 2.500000e-01 : f32
    %74 = vector.broadcast %cst_21 : f32 to vector<2x16x16xf32>
    %75 = arith.mulf %73, %74 : vector<2x16x16xf32>
    %76 = vector.shape_cast %16 : vector<1x16xf32> to vector<1x1x16xf32>
    %77 = vector.broadcast %76 : vector<1x1x16xf32> to vector<2x16x16xf32>
    %78 = arith.addf %75, %77 : vector<2x16x16xf32>
    %cst_22 = arith.constant dense<0xFF800000> : vector<2x16xf32>
    %79 = vector.multi_reduction <maximumf>, %78, %cst_22 [2] : vector<2x16x16xf32> to vector<2x16xf32>
    %80 = vector.shape_cast %79 : vector<2x16xf32> to vector<2x16x1xf32>
    %81 = vector.broadcast %80 : vector<2x16x1xf32> to vector<2x16x16xf32>
    %82 = arith.subf %78, %81 : vector<2x16x16xf32>
    %83 = math.exp %82 : vector<2x16x16xf32>
    %cst_23 = arith.constant dense<0.000000e+00> : vector<2x16xf32>
    %84 = vector.multi_reduction <add>, %83, %cst_23 [2] : vector<2x16x16xf32> to vector<2x16xf32>
    %85 = vector.shape_cast %84 : vector<2x16xf32> to vector<2x16x1xf32>
    %86 = tpu.reciprocal %85 {approx = true} : vector<2x16x1xf32> -> vector<2x16x1xf32>
    %87 = vector.broadcast %86 : vector<2x16x1xf32> to vector<2x16x16xf32>
    %88 = arith.mulf %83, %87 : vector<2x16x16xf32>
    %89 = arith.truncf %88 : vector<2x16x16xf32> to vector<2x16x16xbf16>
    %90 = arith.truncf %70 : vector<2x16x16xf32> to vector<2x16x16xbf16>
    "tpu.trace_start"() <{level = 10 : i32, message = "bqk,bkd->bqd"}> : () -> ()
    %cst_24 = arith.constant dense<0.000000e+00> : vector<2x16x16xf32>
    %91 = tpu.matmul %89, %90, %cst_24 {dimension_numbers = #tpu.dot_dimension_numbers<[2], [1], [1], [2], [0, 0, 0, 1, 1, 2], [0], [0]>} : vector<2x16x16xbf16>, vector<2x16x16xbf16>, vector<2x16x16xf32> -> vector<2x16x16xf32>
    "tpu.trace_stop"() : () -> ()
    %92 = vector.extract_strided_slice %43 {offsets = [0, 0, 32], sizes = [2, 16, 16], strides = [1, 1, 1]} : vector<2x16x192xf32> to vector<2x16x16xf32>
    %93 = vector.extract_strided_slice %43 {offsets = [0, 0, 96], sizes = [2, 16, 16], strides = [1, 1, 1]} : vector<2x16x192xf32> to vector<2x16x16xf32>
    %94 = vector.extract_strided_slice %43 {offsets = [0, 0, 160], sizes = [2, 16, 16], strides = [1, 1, 1]} : vector<2x16x192xf32> to vector<2x16x16xf32>
    %95 = arith.truncf %92 : vector<2x16x16xf32> to vector<2x16x16xbf16>
    %96 = arith.truncf %93 : vector<2x16x16xf32> to vector<2x16x16xbf16>
    "tpu.trace_start"() <{level = 10 : i32, message = "bqd,bkd->bqk"}> : () -> ()
    %cst_25 = arith.constant dense<0.000000e+00> : vector<2x16x16xf32>
    %97 = tpu.matmul %95, %96, %cst_25 {dimension_numbers = #tpu.dot_dimension_numbers<[2], [2], [1], [1], [0, 0, 0, 1, 1, 1], [0], [0]>} : vector<2x16x16xbf16>, vector<2x16x16xbf16>, vector<2x16x16xf32> -> vector<2x16x16xf32>
    "tpu.trace_stop"() : () -> ()
    %cst_26 = arith.constant 2.500000e-01 : f32
    %98 = vector.broadcast %cst_26 : f32 to vector<2x16x16xf32>
    %99 = arith.mulf %97, %98 : vector<2x16x16xf32>
    %100 = vector.shape_cast %16 : vector<1x16xf32> to vector<1x1x16xf32>
    %101 = vector.broadcast %100 : vector<1x1x16xf32> to vector<2x16x16xf32>
    %102 = arith.addf %99, %101 : vector<2x16x16xf32>
    %cst_27 = arith.constant dense<0xFF800000> : vector<2x16xf32>
    %103 = vector.multi_reduction <maximumf>, %102, %cst_27 [2] : vector<2x16x16xf32> to vector<2x16xf32>
    %104 = vector.shape_cast %103 : vector<2x16xf32> to vector<2x16x1xf32>
    %105 = vector.broadcast %104 : vector<2x16x1xf32> to vector<2x16x16xf32>
    %106 = arith.subf %102, %105 : vector<2x16x16xf32>
    %107 = math.exp %106 : vector<2x16x16xf32>
    %cst_28 = arith.constant dense<0.000000e+00> : vector<2x16xf32>
    %108 = vector.multi_reduction <add>, %107, %cst_28 [2] : vector<2x16x16xf32> to vector<2x16xf32>
    %109 = vector.shape_cast %108 : vector<2x16xf32> to vector<2x16x1xf32>
    %110 = tpu.reciprocal %109 {approx = true} : vector<2x16x1xf32> -> vector<2x16x1xf32>
    %111 = vector.broadcast %110 : vector<2x16x1xf32> to vector<2x16x16xf32>
    %112 = arith.mulf %107, %111 : vector<2x16x16xf32>
    %113 = arith.truncf %112 : vector<2x16x16xf32> to vector<2x16x16xbf16>
    %114 = arith.truncf %94 : vector<2x16x16xf32> to vector<2x16x16xbf16>
    "tpu.trace_start"() <{level = 10 : i32, message = "bqk,bkd->bqd"}> : () -> ()
    %cst_29 = arith.constant dense<0.000000e+00> : vector<2x16x16xf32>
    %115 = tpu.matmul %113, %114, %cst_29 {dimension_numbers = #tpu.dot_dimension_numbers<[2], [1], [1], [2], [0, 0, 0, 1, 1, 2], [0], [0]>} : vector<2x16x16xbf16>, vector<2x16x16xbf16>, vector<2x16x16xf32> -> vector<2x16x16xf32>
    "tpu.trace_stop"() : () -> ()
    %116 = vector.extract_strided_slice %43 {offsets = [0, 0, 48], sizes = [2, 16, 16], strides = [1, 1, 1]} : vector<2x16x192xf32> to vector<2x16x16xf32>
    %117 = vector.extract_strided_slice %43 {offsets = [0, 0, 112], sizes = [2, 16, 16], strides = [1, 1, 1]} : vector<2x16x192xf32> to vector<2x16x16xf32>
    %118 = vector.extract_strided_slice %43 {offsets = [0, 0, 176], sizes = [2, 16, 16], strides = [1, 1, 1]} : vector<2x16x192xf32> to vector<2x16x16xf32>
    %119 = arith.truncf %116 : vector<2x16x16xf32> to vector<2x16x16xbf16>
    %120 = arith.truncf %117 : vector<2x16x16xf32> to vector<2x16x16xbf16>
    "tpu.trace_start"() <{level = 10 : i32, message = "bqd,bkd->bqk"}> : () -> ()
    %cst_30 = arith.constant dense<0.000000e+00> : vector<2x16x16xf32>
    %121 = tpu.matmul %119, %120, %cst_30 {dimension_numbers = #tpu.dot_dimension_numbers<[2], [2], [1], [1], [0, 0, 0, 1, 1, 1], [0], [0]>} : vector<2x16x16xbf16>, vector<2x16x16xbf16>, vector<2x16x16xf32> -> vector<2x16x16xf32>
    "tpu.trace_stop"() : () -> ()
    %cst_31 = arith.constant 2.500000e-01 : f32
    %122 = vector.broadcast %cst_31 : f32 to vector<2x16x16xf32>
    %123 = arith.mulf %121, %122 : vector<2x16x16xf32>
    %124 = vector.shape_cast %16 : vector<1x16xf32> to vector<1x1x16xf32>
    %125 = vector.broadcast %124 : vector<1x1x16xf32> to vector<2x16x16xf32>
    %126 = arith.addf %123, %125 : vector<2x16x16xf32>
    %cst_32 = arith.constant dense<0xFF800000> : vector<2x16xf32>
    %127 = vector.multi_reduction <maximumf>, %126, %cst_32 [2] : vector<2x16x16xf32> to vector<2x16xf32>
    %128 = vector.shape_cast %127 : vector<2x16xf32> to vector<2x16x1xf32>
    %129 = vector.broadcast %128 : vector<2x16x1xf32> to vector<2x16x16xf32>
    %130 = arith.subf %126, %129 : vector<2x16x16xf32>
    %131 = math.exp %130 : vector<2x16x16xf32>
    %cst_33 = arith.constant dense<0.000000e+00> : vector<2x16xf32>
    %132 = vector.multi_reduction <add>, %131, %cst_33 [2] : vector<2x16x16xf32> to vector<2x16xf32>
    %133 = vector.shape_cast %132 : vector<2x16xf32> to vector<2x16x1xf32>
    %134 = tpu.reciprocal %133 {approx = true} : vector<2x16x1xf32> -> vector<2x16x1xf32>
    %135 = vector.broadcast %134 : vector<2x16x1xf32> to vector<2x16x16xf32>
    %136 = arith.mulf %131, %135 : vector<2x16x16xf32>
    %137 = arith.truncf %136 : vector<2x16x16xf32> to vector<2x16x16xbf16>
    %138 = arith.truncf %118 : vector<2x16x16xf32> to vector<2x16x16xbf16>
    "tpu.trace_start"() <{level = 10 : i32, message = "bqk,bkd->bqd"}> : () -> ()
    %cst_34 = arith.constant dense<0.000000e+00> : vector<2x16x16xf32>
    %139 = tpu.matmul %137, %138, %cst_34 {dimension_numbers = #tpu.dot_dimension_numbers<[2], [1], [1], [2], [0, 0, 0, 1, 1, 2], [0], [0]>} : vector<2x16x16xbf16>, vector<2x16x16xbf16>, vector<2x16x16xf32> -> vector<2x16x16xf32>
    "tpu.trace_stop"() : () -> ()
    %140 = tpu.concatenate %67, %91, %115, %139 in 2 : vector<2x16x16xf32>, vector<2x16x16xf32>, vector<2x16x16xf32>, vector<2x16x16xf32> -> vector<2x16x64xf32>
    %141 = vector.shape_cast %140 : vector<2x16x64xf32> to vector<32x64xf32>
    %142 = arith.truncf %141 : vector<32x64xf32> to vector<32x64xbf16>
    %c0_35 = arith.constant 0 : index
    %c0_36 = arith.constant 0 : index
    %c0_37 = arith.constant 0 : index
    %143 = vector.load %arg5[%c0_35, %c0_36, %c0_37] : memref<1x64x64xbf16, #tpu.memory_space<vmem>>, vector<1x64x64xbf16>
    %144 = vector.shape_cast %143 : vector<1x64x64xbf16> to vector<64x64xbf16>
    %cst_38 = arith.constant dense<0.000000e+00> : vector<32x64xf32>
    %145 = tpu.matmul %142, %144, %cst_38 {dimension_numbers = #tpu.dot_dimension_numbers<[1], [0], [0], [1], [0, 0, 1, 1], [], []>} : vector<32x64xbf16>, vector<64x64xbf16>, vector<32x64xf32> -> vector<32x64xf32>
    %146 = vector.broadcast %9 : vector<1x64xf32> to vector<32x64xf32>
    %147 = arith.addf %145, %146 : vector<32x64xf32>
    %148 = vector.broadcast %10 : vector<1x64xf32> to vector<32x64xf32>
    %149 = arith.mulf %148, %147 : vector<32x64xf32>
    %150 = arith.addf %3, %149 : vector<32x64xf32>
    %cst_39 = arith.constant dense<0.000000e+00> : vector<32xf32>
    %151 = vector.multi_reduction <add>, %150, %cst_39 [1] : vector<32x64xf32> to vector<32xf32>
    %152 = vector.shape_cast %151 : vector<32xf32> to vector<32x1xf32>
    %cst_40 = arith.constant 6.400000e+01 : f32
    %153 = vector.broadcast %cst_40 : f32 to vector<32x1xf32>
    %154 = arith.divf %152, %153 : vector<32x1xf32>
    %155 = vector.broadcast %154 : vector<32x1xf32> to vector<32x64xf32>
    %156 = arith.subf %150, %155 : vector<32x64xf32>
    %157 = arith.mulf %156, %156 : vector<32x64xf32>
    %cst_41 = arith.constant dense<0.000000e+00> : vector<32xf32>
    %158 = vector.multi_reduction <add>, %157, %cst_41 [1] : vector<32x64xf32> to vector<32xf32>
    %159 = vector.shape_cast %158 : vector<32xf32> to vector<32x1xf32>
    %cst_42 = arith.constant 6.400000e+01 : f32
    %160 = vector.broadcast %cst_42 : f32 to vector<32x1xf32>
    %161 = arith.divf %159, %160 : vector<32x1xf32>
    %cst_43 = arith.constant 9.99999997E-7 : f32
    %162 = vector.broadcast %cst_43 : f32 to vector<32x1xf32>
    %163 = arith.addf %161, %162 : vector<32x1xf32>
    %164 = math.rsqrt %163 : vector<32x1xf32>
    %165 = vector.broadcast %164 : vector<32x1xf32> to vector<32x64xf32>
    %166 = arith.mulf %156, %165 : vector<32x64xf32>
    %167 = vector.broadcast %11 : vector<1x64xf32> to vector<32x64xf32>
    %168 = arith.mulf %166, %167 : vector<32x64xf32>
    %169 = vector.broadcast %12 : vector<1x64xf32> to vector<32x64xf32>
    %170 = arith.addf %168, %169 : vector<32x64xf32>
    %171 = arith.truncf %170 : vector<32x64xf32> to vector<32x64xbf16>
    %c0_44 = arith.constant 0 : index
    %c0_45 = arith.constant 0 : index
    %c0_46 = arith.constant 0 : index
    %172 = vector.load %arg6[%c0_44, %c0_45, %c0_46] : memref<1x64x256xbf16, #tpu.memory_space<vmem>>, vector<1x64x256xbf16>
    %173 = vector.shape_cast %172 : vector<1x64x256xbf16> to vector<64x256xbf16>
    %cst_47 = arith.constant dense<0.000000e+00> : vector<32x256xf32>
    %174 = tpu.matmul %171, %173, %cst_47 {dimension_numbers = #tpu.dot_dimension_numbers<[1], [0], [0], [1], [0, 0, 1, 1], [], []>} : vector<32x64xbf16>, vector<64x256xbf16>, vector<32x256xf32> -> vector<32x256xf32>
    %175 = vector.broadcast %13 : vector<1x256xf32> to vector<32x256xf32>
    %176 = arith.addf %174, %175 : vector<32x256xf32>
    %177 = arith.mulf %176, %176 : vector<32x256xf32>
    %178 = arith.mulf %176, %177 : vector<32x256xf32>
    %cst_48 = arith.constant 4.471500e-02 : f32
    %179 = vector.broadcast %cst_48 : f32 to vector<32x256xf32>
    %180 = arith.mulf %179, %178 : vector<32x256xf32>
    %181 = arith.addf %176, %180 : vector<32x256xf32>
    %cst_49 = arith.constant 0.797884583 : f32
    %182 = vector.broadcast %cst_49 : f32 to vector<32x256xf32>
    %183 = arith.mulf %182, %181 : vector<32x256xf32>
    %184 = math.tanh %183 : vector<32x256xf32>
    %cst_50 = arith.constant 1.000000e+00 : f32
    %185 = vector.broadcast %cst_50 : f32 to vector<32x256xf32>
    %186 = arith.addf %185, %184 : vector<32x256xf32>
    %cst_51 = arith.constant 5.000000e-01 : f32
    %187 = vector.broadcast %cst_51 : f32 to vector<32x256xf32>
    %188 = arith.mulf %187, %186 : vector<32x256xf32>
    %189 = arith.mulf %176, %188 : vector<32x256xf32>
    %190 = arith.truncf %189 : vector<32x256xf32> to vector<32x256xbf16>
    %c0_52 = arith.constant 0 : index
    %c0_53 = arith.constant 0 : index
    %c0_54 = arith.constant 0 : index
    %191 = vector.load %arg7[%c0_52, %c0_53, %c0_54] : memref<1x256x64xbf16, #tpu.memory_space<vmem>>, vector<1x256x64xbf16>
    %192 = vector.shape_cast %191 : vector<1x256x64xbf16> to vector<256x64xbf16>
    %cst_55 = arith.constant dense<0.000000e+00> : vector<32x64xf32>
    %193 = tpu.matmul %190, %192, %cst_55 {dimension_numbers = #tpu.dot_dimension_numbers<[1], [0], [0], [1], [0, 0, 1, 1], [], []>} : vector<32x256xbf16>, vector<256x64xbf16>, vector<32x64xf32> -> vector<32x64xf32>
    %194 = vector.broadcast %14 : vector<1x64xf32> to vector<32x64xf32>
    %195 = arith.addf %193, %194 : vector<32x64xf32>
    %196 = vector.broadcast %15 : vector<1x64xf32> to vector<32x64xf32>
    %197 = arith.mulf %196, %195 : vector<32x64xf32>
    %198 = arith.addf %150, %197 : vector<32x64xf32>
    %c0_56 = arith.constant 0 : index
    %c0_57 = arith.constant 0 : index
    %199 = vector.load %arg9[%c0_56, %c0_57] : memref<32x64xf32, #tpu.memory_space<vmem>>, vector<32x64xf32>
    tpu.vector_store %arg9[%c0_56, %c0_57], %198 {strides = array<i32>} : memref<32x64xf32, #tpu.memory_space<vmem>>, vector<32x64xf32>,
    %c1_i32 = arith.constant 1 : i32
    %200 = arith.cmpi eq, %arg0, %c1_i32 : i32
    %201 = arith.extui %200 : i1 to i32
    %c0_i32_58 = arith.constant 0 : i32
    %202 = arith.cmpi ne, %201, %c0_i32_58 : i32
    scf.if %202 {
      %203 = vector.shape_cast %198 : vector<32x64xf32> to vector<2x16x64xf32>
      %204 = vector.extract_strided_slice %203 {offsets = [0, 0, 0], sizes = [2, 8, 64], strides = [1, 1, 1]} : vector<2x16x64xf32> to vector<2x8x64xf32>
      %c0_59 = arith.constant 0 : index
      %c0_60 = arith.constant 0 : index
      %c0_61 = arith.constant 0 : index
      %205 = vector.load %arg8[%c0_59, %c0_60, %c0_61] : memref<2x8x64xf32, #tpu.memory_space<vmem>>, vector<2x8x64xf32>
      tpu.vector_store %arg8[%c0_59, %c0_60, %c0_61], %204 {strides = array<i32>} : memref<2x8x64xf32, #tpu.memory_space<vmem>>, vector<2x8x64xf32>,
    } else {
    }
    return
  }
  func.func @transform_0(%arg0: i32) -> (i32, i32, i32) {
    %c0_i32 = arith.constant 0 : i32
    %c0_i32_0 = arith.constant 0 : i32
    %c0_i32_1 = arith.constant 0 : i32
    %c0_i32_2 = arith.constant 0 : i32
    return %c0_i32, %c0_i32_0, %c0_i32_1 : i32, i32, i32
  }
  func.func @transform_1(%arg0: i32) -> (i32, i32) {
    %c0_i32 = arith.constant 0 : i32
    %c0_i32_0 = arith.constant 0 : i32
    %c0_i32_1 = arith.constant 0 : i32
    return %c0_i32, %c0_i32_0 : i32, i32
  }
  func.func @transform_2(%arg0: i32) -> (i32, i32, i32) {
    %c0_i32 = arith.constant 0 : i32
    %c0_i32_0 = arith.constant 0 : i32
    %c0_i32_1 = arith.constant 0 : i32
    return %arg0, %c0_i32, %c0_i32_0 : i32, i32, i32
  }
  func.func @transform_3(%arg0: i32) -> (i32, i32, i32) {
    %c0_i32 = arith.constant 0 : i32
    %c0_i32_0 = arith.constant 0 : i32
    %c0_i32_1 = arith.constant 0 : i32
    return %arg0, %c0_i32, %c0_i32_0 : i32, i32, i32
  }
  func.func @transform_4(%arg0: i32) -> (i32, i32, i32) {
    %c0_i32 = arith.constant 0 : i32
    %c0_i32_0 = arith.constant 0 : i32
    %c0_i32_1 = arith.constant 0 : i32
    return %arg0, %c0_i32, %c0_i32_0 : i32, i32, i32
  }
  func.func @transform_5(%arg0: i32) -> (i32, i32, i32) {
    %c0_i32 = arith.constant 0 : i32
    %c0_i32_0 = arith.constant 0 : i32
    %c0_i32_1 = arith.constant 0 : i32
    return %arg0, %c0_i32, %c0_i32_0 : i32, i32, i32
  }
  func.func @transform_6(%arg0: i32) -> (i32, i32, i32) {
    %c0_i32 = arith.constant 0 : i32
    %c0_i32_0 = arith.constant 0 : i32
    %c0_i32_1 = arith.constant 0 : i32
    return %arg0, %c0_i32, %c0_i32_0 : i32, i32, i32
  }
  func.func @transform_7(%arg0: i32) -> (i32, i32, i32) {
    %c0_i32 = arith.constant 0 : i32
    %c0_i32_0 = arith.constant 0 : i32
    %c0_i32_1 = arith.constant 0 : i32
    %c0_i32_2 = arith.constant 0 : i32
    return %c0_i32, %c0_i32_0, %c0_i32_1 : i32, i32, i32
  }
}

module attributes {stable_mosaic.version = 11 : i64} {
  func.func @_head_gate_kernel(%arg0: i32, %arg1: memref<2x64xf32, #tpu.memory_space<vmem>>, %arg2: memref<1x64xf32, #tpu.memory_space<vmem>>, %arg3: memref<1x64xf32, #tpu.memory_space<vmem>>, %arg4: memref<64x768xbf16, #tpu.memory_space<vmem>>, %arg5: memref<1x768xf32, #tpu.memory_space<vmem>>, %arg6: memref<768x3xbf16, #tpu.memory_space<vmem>>, %arg7: memref<1x3xf32, #tpu.memory_space<vmem>>, %arg8: memref<64x128xbf16, #tpu.memory_space<vmem>>, %arg9: memref<1x128xf32, #tpu.memory_space<vmem>>, %arg10: memref<128x3xbf16, #tpu.memory_space<vmem>>, %arg11: memref<1x3xf32, #tpu.memory_space<vmem>>, %arg12: memref<2x3xf32, #tpu.memory_space<vmem>>, %arg13: memref<2x3xf32, #tpu.memory_space<vmem>>) attributes {dimension_semantics = [#tpu.dimension_semantics<arbitrary>], iteration_bounds = array<i64: 1>, scalar_prefetch = 0 : i64, scratch_operands = 0 : i64, tpu.core_type = #tpu.core_type<tc>, window_params = [{pipeline_mode = #tpu.pipeline_mode<synchronous>, transform_indices = @transform_0, window_bounds = array<i64: 2, 64>}, {pipeline_mode = #tpu.pipeline_mode<synchronous>, transform_indices = @transform_1, window_bounds = array<i64: 1, 64>}, {pipeline_mode = #tpu.pipeline_mode<synchronous>, transform_indices = @transform_2, window_bounds = array<i64: 1, 64>}, {pipeline_mode = #tpu.pipeline_mode<synchronous>, transform_indices = @transform_3, window_bounds = array<i64: 64, 768>}, {pipeline_mode = #tpu.pipeline_mode<synchronous>, transform_indices = @transform_4, window_bounds = array<i64: 1, 768>}, {pipeline_mode = #tpu.pipeline_mode<synchronous>, transform_indices = @transform_5, window_bounds = array<i64: 768, 3>}, {pipeline_mode = #tpu.pipeline_mode<synchronous>, transform_indices = @transform_6, window_bounds = array<i64: 1, 3>}, {pipeline_mode = #tpu.pipeline_mode<synchronous>, transform_indices = @transform_7, window_bounds = array<i64: 64, 128>}, {pipeline_mode = #tpu.pipeline_mode<synchronous>, transform_indices = @transform_8, window_bounds = array<i64: 1, 128>}, {pipeline_mode = #tpu.pipeline_mode<synchronous>, transform_indices = @transform_9, window_bounds = array<i64: 128, 3>}, {pipeline_mode = #tpu.pipeline_mode<synchronous>, transform_indices = @transform_10, window_bounds = array<i64: 1, 3>}, {pipeline_mode = #tpu.pipeline_mode<synchronous>, transform_indices = @transform_11, window_bounds = array<i64: 2, 3>}, {pipeline_mode = #tpu.pipeline_mode<synchronous>, transform_indices = @transform_12, window_bounds = array<i64: 2, 3>}]} {
    %c0 = arith.constant 0 : index
    %c0_0 = arith.constant 0 : index
    %0 = vector.load %arg1[%c0, %c0_0] : memref<2x64xf32, #tpu.memory_space<vmem>>, vector<2x64xf32>
    %c0_1 = arith.constant 0 : index
    %c0_2 = arith.constant 0 : index
    %1 = vector.load %arg2[%c0_1, %c0_2] : memref<1x64xf32, #tpu.memory_space<vmem>>, vector<1x64xf32>
    %c0_3 = arith.constant 0 : index
    %c0_4 = arith.constant 0 : index
    %2 = vector.load %arg3[%c0_3, %c0_4] : memref<1x64xf32, #tpu.memory_space<vmem>>, vector<1x64xf32>
    %cst = arith.constant dense<0.000000e+00> : vector<2xf32>
    %3 = vector.multi_reduction <add>, %0, %cst [1] : vector<2x64xf32> to vector<2xf32>
    %4 = vector.shape_cast %3 : vector<2xf32> to vector<2x1xf32>
    %cst_5 = arith.constant 6.400000e+01 : f32
    %5 = vector.broadcast %cst_5 : f32 to vector<2x1xf32>
    %6 = arith.divf %4, %5 : vector<2x1xf32>
    %7 = vector.broadcast %6 : vector<2x1xf32> to vector<2x64xf32>
    %8 = arith.subf %0, %7 : vector<2x64xf32>
    %9 = arith.mulf %8, %8 : vector<2x64xf32>
    %cst_6 = arith.constant dense<0.000000e+00> : vector<2xf32>
    %10 = vector.multi_reduction <add>, %9, %cst_6 [1] : vector<2x64xf32> to vector<2xf32>
    %11 = vector.shape_cast %10 : vector<2xf32> to vector<2x1xf32>
    %cst_7 = arith.constant 6.400000e+01 : f32
    %12 = vector.broadcast %cst_7 : f32 to vector<2x1xf32>
    %13 = arith.divf %11, %12 : vector<2x1xf32>
    %cst_8 = arith.constant 9.99999997E-7 : f32
    %14 = vector.broadcast %cst_8 : f32 to vector<2x1xf32>
    %15 = arith.addf %13, %14 : vector<2x1xf32>
    %16 = math.rsqrt %15 : vector<2x1xf32>
    %17 = vector.broadcast %16 : vector<2x1xf32> to vector<2x64xf32>
    %18 = arith.mulf %8, %17 : vector<2x64xf32>
    %19 = vector.broadcast %1 : vector<1x64xf32> to vector<2x64xf32>
    %20 = arith.mulf %18, %19 : vector<2x64xf32>
    %21 = vector.broadcast %2 : vector<1x64xf32> to vector<2x64xf32>
    %22 = arith.addf %20, %21 : vector<2x64xf32>
    %23 = arith.truncf %22 : vector<2x64xf32> to vector<2x64xbf16>
    %c0_9 = arith.constant 0 : index
    %c0_10 = arith.constant 0 : index
    %24 = vector.load %arg4[%c0_9, %c0_10] : memref<64x768xbf16, #tpu.memory_space<vmem>>, vector<64x768xbf16>
    %cst_11 = arith.constant dense<0.000000e+00> : vector<2x768xf32>
    %25 = tpu.matmul %23, %24, %cst_11 {dimension_numbers = #tpu.dot_dimension_numbers<[1], [0], [0], [1], [0, 0, 1, 1], [], []>} : vector<2x64xbf16>, vector<64x768xbf16>, vector<2x768xf32> -> vector<2x768xf32>
    %c0_12 = arith.constant 0 : index
    %c0_13 = arith.constant 0 : index
    %26 = vector.load %arg5[%c0_12, %c0_13] : memref<1x768xf32, #tpu.memory_space<vmem>>, vector<1x768xf32>
    %27 = vector.broadcast %26 : vector<1x768xf32> to vector<2x768xf32>
    %28 = arith.addf %25, %27 : vector<2x768xf32>
    %cst_14 = arith.constant 0.000000e+00 : f32
    %29 = vector.broadcast %cst_14 : f32 to vector<2x768xf32>
    %30 = arith.maximumf %28, %29 : vector<2x768xf32>
    %31 = arith.truncf %30 : vector<2x768xf32> to vector<2x768xbf16>
    %c0_15 = arith.constant 0 : index
    %c0_16 = arith.constant 0 : index
    %32 = vector.load %arg6[%c0_15, %c0_16] : memref<768x3xbf16, #tpu.memory_space<vmem>>, vector<768x3xbf16>
    %cst_17 = arith.constant dense<0.000000e+00> : vector<2x3xf32>
    %33 = tpu.matmul %31, %32, %cst_17 {dimension_numbers = #tpu.dot_dimension_numbers<[1], [0], [0], [1], [0, 0, 1, 1], [], []>} : vector<2x768xbf16>, vector<768x3xbf16>, vector<2x3xf32> -> vector<2x3xf32>
    %c0_18 = arith.constant 0 : index
    %c0_19 = arith.constant 0 : index
    %34 = vector.load %arg7[%c0_18, %c0_19] : memref<1x3xf32, #tpu.memory_space<vmem>>, vector<1x3xf32>
    %35 = vector.broadcast %34 : vector<1x3xf32> to vector<2x3xf32>
    %36 = arith.addf %33, %35 : vector<2x3xf32>
    %c0_20 = arith.constant 0 : index
    %c0_21 = arith.constant 0 : index
    %37 = vector.load %arg12[%c0_20, %c0_21] : memref<2x3xf32, #tpu.memory_space<vmem>>, vector<2x3xf32>
    tpu.vector_store %arg12[%c0_20, %c0_21], %36 {strides = array<i32>} : memref<2x3xf32, #tpu.memory_space<vmem>>, vector<2x3xf32>,
    %c0_22 = arith.constant 0 : index
    %c0_23 = arith.constant 0 : index
    %38 = vector.load %arg8[%c0_22, %c0_23] : memref<64x128xbf16, #tpu.memory_space<vmem>>, vector<64x128xbf16>
    %cst_24 = arith.constant dense<0.000000e+00> : vector<2x128xf32>
    %39 = tpu.matmul %23, %38, %cst_24 {dimension_numbers = #tpu.dot_dimension_numbers<[1], [0], [0], [1], [0, 0, 1, 1], [], []>} : vector<2x64xbf16>, vector<64x128xbf16>, vector<2x128xf32> -> vector<2x128xf32>
    %c0_25 = arith.constant 0 : index
    %c0_26 = arith.constant 0 : index
    %40 = vector.load %arg9[%c0_25, %c0_26] : memref<1x128xf32, #tpu.memory_space<vmem>>, vector<1x128xf32>
    %41 = vector.broadcast %40 : vector<1x128xf32> to vector<2x128xf32>
    %42 = arith.addf %39, %41 : vector<2x128xf32>
    %cst_27 = arith.constant 0.000000e+00 : f32
    %43 = vector.broadcast %cst_27 : f32 to vector<2x128xf32>
    %44 = arith.maximumf %42, %43 : vector<2x128xf32>
    %45 = arith.truncf %44 : vector<2x128xf32> to vector<2x128xbf16>
    %c0_28 = arith.constant 0 : index
    %c0_29 = arith.constant 0 : index
    %46 = vector.load %arg10[%c0_28, %c0_29] : memref<128x3xbf16, #tpu.memory_space<vmem>>, vector<128x3xbf16>
    %cst_30 = arith.constant dense<0.000000e+00> : vector<2x3xf32>
    %47 = tpu.matmul %45, %46, %cst_30 {dimension_numbers = #tpu.dot_dimension_numbers<[1], [0], [0], [1], [0, 0, 1, 1], [], []>} : vector<2x128xbf16>, vector<128x3xbf16>, vector<2x3xf32> -> vector<2x3xf32>
    %c0_31 = arith.constant 0 : index
    %c0_32 = arith.constant 0 : index
    %48 = vector.load %arg11[%c0_31, %c0_32] : memref<1x3xf32, #tpu.memory_space<vmem>>, vector<1x3xf32>
    %49 = vector.broadcast %48 : vector<1x3xf32> to vector<2x3xf32>
    %50 = arith.addf %47, %49 : vector<2x3xf32>
    %cst_33 = arith.constant dense<0xFF800000> : vector<2xf32>
    %51 = vector.multi_reduction <maximumf>, %50, %cst_33 [1] : vector<2x3xf32> to vector<2xf32>
    %52 = vector.shape_cast %51 : vector<2xf32> to vector<2x1xf32>
    %53 = vector.broadcast %52 : vector<2x1xf32> to vector<2x3xf32>
    %54 = arith.subf %50, %53 : vector<2x3xf32>
    %55 = math.exp %54 : vector<2x3xf32>
    %cst_34 = arith.constant dense<0.000000e+00> : vector<2xf32>
    %56 = vector.multi_reduction <add>, %55, %cst_34 [1] : vector<2x3xf32> to vector<2xf32>
    %57 = vector.shape_cast %56 : vector<2xf32> to vector<2x1xf32>
    %58 = vector.broadcast %57 : vector<2x1xf32> to vector<2x3xf32>
    %59 = arith.divf %55, %58 : vector<2x3xf32>
    %c0_35 = arith.constant 0 : index
    %c0_36 = arith.constant 0 : index
    %60 = vector.load %arg13[%c0_35, %c0_36] : memref<2x3xf32, #tpu.memory_space<vmem>>, vector<2x3xf32>
    tpu.vector_store %arg13[%c0_35, %c0_36], %59 {strides = array<i32>} : memref<2x3xf32, #tpu.memory_space<vmem>>, vector<2x3xf32>,
    return
  }
  func.func @transform_0(%arg0: i32) -> (i32, i32) {
    %c0_i32 = arith.constant 0 : i32
    %c0_i32_0 = arith.constant 0 : i32
    %c0_i32_1 = arith.constant 0 : i32
    return %c0_i32, %c0_i32_0 : i32, i32
  }
  func.func @transform_1(%arg0: i32) -> (i32, i32) {
    %c0_i32 = arith.constant 0 : i32
    %c0_i32_0 = arith.constant 0 : i32
    %c0_i32_1 = arith.constant 0 : i32
    return %c0_i32, %c0_i32_0 : i32, i32
  }
  func.func @transform_2(%arg0: i32) -> (i32, i32) {
    %c0_i32 = arith.constant 0 : i32
    %c0_i32_0 = arith.constant 0 : i32
    %c0_i32_1 = arith.constant 0 : i32
    return %c0_i32, %c0_i32_0 : i32, i32
  }
  func.func @transform_3(%arg0: i32) -> (i32, i32) {
    %c0_i32 = arith.constant 0 : i32
    %c0_i32_0 = arith.constant 0 : i32
    %c0_i32_1 = arith.constant 0 : i32
    return %c0_i32, %c0_i32_0 : i32, i32
  }
  func.func @transform_4(%arg0: i32) -> (i32, i32) {
    %c0_i32 = arith.constant 0 : i32
    %c0_i32_0 = arith.constant 0 : i32
    %c0_i32_1 = arith.constant 0 : i32
    return %c0_i32, %c0_i32_0 : i32, i32
  }
  func.func @transform_5(%arg0: i32) -> (i32, i32) {
    %c0_i32 = arith.constant 0 : i32
    %c0_i32_0 = arith.constant 0 : i32
    %c0_i32_1 = arith.constant 0 : i32
    return %c0_i32, %c0_i32_0 : i32, i32
  }
  func.func @transform_6(%arg0: i32) -> (i32, i32) {
    %c0_i32 = arith.constant 0 : i32
    %c0_i32_0 = arith.constant 0 : i32
    %c0_i32_1 = arith.constant 0 : i32
    return %c0_i32, %c0_i32_0 : i32, i32
  }
  func.func @transform_7(%arg0: i32) -> (i32, i32) {
    %c0_i32 = arith.constant 0 : i32
    %c0_i32_0 = arith.constant 0 : i32
    %c0_i32_1 = arith.constant 0 : i32
    return %c0_i32, %c0_i32_0 : i32, i32
  }
  func.func @transform_8(%arg0: i32) -> (i32, i32) {
    %c0_i32 = arith.constant 0 : i32
    %c0_i32_0 = arith.constant 0 : i32
    %c0_i32_1 = arith.constant 0 : i32
    return %c0_i32, %c0_i32_0 : i32, i32
  }
  func.func @transform_9(%arg0: i32) -> (i32, i32) {
    %c0_i32 = arith.constant 0 : i32
    %c0_i32_0 = arith.constant 0 : i32
    %c0_i32_1 = arith.constant 0 : i32
    return %c0_i32, %c0_i32_0 : i32, i32
  }
  func.func @transform_10(%arg0: i32) -> (i32, i32) {
    %c0_i32 = arith.constant 0 : i32
    %c0_i32_0 = arith.constant 0 : i32
    %c0_i32_1 = arith.constant 0 : i32
    return %c0_i32, %c0_i32_0 : i32, i32
  }
  func.func @transform_11(%arg0: i32) -> (i32, i32) {
    %c0_i32 = arith.constant 0 : i32
    %c0_i32_0 = arith.constant 0 : i32
    %c0_i32_1 = arith.constant 0 : i32
    return %c0_i32, %c0_i32_0 : i32, i32
  }
  func.func @transform_12(%arg0: i32) -> (i32, i32) {
    %c0_i32 = arith.constant 0 : i32
    %c0_i32_0 = arith.constant 0 : i32
    %c0_i32_1 = arith.constant 0 : i32
    return %c0_i32, %c0_i32_0 : i32, i32
  }
}

</mosaic_0001>

<llo_original>
// kernel: uni_multitask_forward.3
$region0: #{uni_multitask_forward.3}
  #allocation0 [shape = 'u32[]', space=smem, size = 0x4, offset = 0x4, fixed_abs, tag = 'smem constant byte address 0x4 - core index']
  #allocation1 [shape = 'u32[144,128]{1,0:T(1,128)}', space=vmem, size = 0x12000, scoped, tag = 'internal scratch']
  %s0 = inlined_call_operand.vmem [shape: f32[8,768], index: 0, kind: input, shape index: {}]
  %s1 = inlined_call_operand.vmem [shape: bf16[768,64], index: 1, kind: input, shape index: {}]
  %s2 = inlined_call_operand.vmem [shape: f32[1,64], index: 2, kind: input, shape index: {}]
  %s3 = inlined_call_operand.vmem [shape: f32[8,64], index: 3, kind: output, shape index: {}]
  %s4 = sld [smem:[#allocation0]]
  $region22: #{uni_multitask_forward.3} parent=0
    _
  %s6 = ssub.s32 1, %s4
  %s7 = scalar_select 0, %s6, %s4
  // Predicated region
  $region2: #{uni_multitask_forward.3} parent=0 // pred_check
    _
  $region3: #{uni_multitask_forward.3} parent=0 // pred_check_branch
    %9 = sbr.rel (0) target = $region5
  $region4: #{uni_multitask_forward.3} parent=0 // pred_region
    _
  $region5: #{uni_multitask_forward.3} parent=0 // pred_fallthru
    _
  // Predicated region
  $region6: #{uni_multitask_forward.3} parent=0 // pred_check
    _
  $region7: #{uni_multitask_forward.3} parent=0 // pred_check_branch
    %11 = sbr.rel (0) target = $region9
  $region8: #{uni_multitask_forward.3} parent=0 // pred_region
    _
  $region9: #{uni_multitask_forward.3} parent=0 // pred_fallthru
    _
  // Predicated region
  $region10: #{uni_multitask_forward.3} parent=0 // pred_check
    _
  $region11: #{uni_multitask_forward.3} parent=0 // pred_check_branch
    %13 = sbr.rel (0) target = $region13
  $region12: #{uni_multitask_forward.3} parent=0 // pred_region
    _
  $region13: #{uni_multitask_forward.3} parent=0 // pred_fallthru
    _
  %v15 = vld [vmem:[%s0] sm:$0xff]
  %v16 = vld [vmem:[%s0 + $0x8] sm:$0xff]
  %v17 = vld [vmem:[%s0 + $0x10] sm:$0xff]
  %v18 = vld [vmem:[%s0 + $0x18] sm:$0xff]
  %v19 = vld [vmem:[%s0 + $0x20] sm:$0xff]
  %v20 = vld [vmem:[%s0 + $0x28] sm:$0xff]
  %v21 = vpack.c.bf16 %v15, %v15
  %v22 = vpack.c.bf16 %v16, %v16
  %v23 = vpack.c.bf16 %v17, %v17
  %v24 = vpack.c.bf16 %v18, %v18
  %v25 = vpack.c.bf16 %v19, %v19
  %v26 = vpack.c.bf16 %v20, %v20
  %v27 = vld [vmem:[%s1] sm:$0xf]
  %v28 = vld [vmem:[%s1 + $0x4] sm:$0xf]
  %v29 = vld [vmem:[%s1 + $0x8] sm:$0xf]
  %v30 = vld [vmem:[%s1 + $0xc] sm:$0xf]
  %v31 = vld [vmem:[%s1 + $0x10] sm:$0xf]
  %v32 = vld [vmem:[%s1 + $0x14] sm:$0xf]
  %v33 = vld [vmem:[%s1 + $0x18] sm:$0xf]
  %v34 = vld [vmem:[%s1 + $0x1c] sm:$0xf]
  %v35 = vld [vmem:[%s1 + $0x20] sm:$0xf]
  %v36 = vld [vmem:[%s1 + $0x24] sm:$0xf]
  %v37 = vld [vmem:[%s1 + $0x28] sm:$0xf]
  %v38 = vld [vmem:[%s1 + $0x2c] sm:$0xf]
  %v39 = vld [vmem:[%s1 + $0x30] sm:$0xf]
  %v40 = vld [vmem:[%s1 + $0x34] sm:$0xf]
  %v41 = vld [vmem:[%s1 + $0x38] sm:$0xf]
  %v42 = vld [vmem:[%s1 + $0x3c] sm:$0xf]
  %v43 = vld [vmem:[%s1 + $0x40] sm:$0xf]
  %v44 = vld [vmem:[%s1 + $0x44] sm:$0xf]
  %v45 = vld [vmem:[%s1 + $0x48] sm:$0xf]
  %v46 = vld [vmem:[%s1 + $0x4c] sm:$0xf]
  %v47 = vld [vmem:[%s1 + $0x50] sm:$0xf]
  %v48 = vld [vmem:[%s1 + $0x54] sm:$0xf]
  %v49 = vld [vmem:[%s1 + $0x58] sm:$0xf]
  %v50 = vld [vmem:[%s1 + $0x5c] sm:$0xf]
  %v51 = vld [vmem:[%s1 + $0x60] sm:$0xf]
  %v52 = vld [vmem:[%s1 + $0x64] sm:$0xf]
  %v53 = vld [vmem:[%s1 + $0x68] sm:$0xf]
  %v54 = vld [vmem:[%s1 + $0x6c] sm:$0xf]
  %v55 = vld [vmem:[%s1 + $0x70] sm:$0xf]
  %v56 = vld [vmem:[%s1 + $0x74] sm:$0xf]
  %v57 = vld [vmem:[%s1 + $0x78] sm:$0xf]
  %v58 = vld [vmem:[%s1 + $0x7c] sm:$0xf]
  %v59 = vld [vmem:[%s1 + $0x80] sm:$0xf]
  %v60 = vld [vmem:[%s1 + $0x84] sm:$0xf]
  %v61 = vld [vmem:[%s1 + $0x88] sm:$0xf]
  %v62 = vld [vmem:[%s1 + $0x8c] sm:$0xf]
  %v63 = vld [vmem:[%s1 + $0x90] sm:$0xf]
  %v64 = vld [vmem:[%s1 + $0x94] sm:$0xf]
  %v65 = vld [vmem:[%s1 + $0x98] sm:$0xf]
  %v66 = vld [vmem:[%s1 + $0x9c] sm:$0xf]
  %v67 = vld [vmem:[%s1 + $0xa0] sm:$0xf]
  %v68 = vld [vmem:[%s1 + $0xa4] sm:$0xf]
  %v69 = vld [vmem:[%s1 + $0xa8] sm:$0xf]
  %v70 = vld [vmem:[%s1 + $0xac] sm:$0xf]
  %v71 = vld [vmem:[%s1 + $0xb0] sm:$0xf]
  %v72 = vld [vmem:[%s1 + $0xb4] sm:$0xf]
  %v73 = vld [vmem:[%s1 + $0xb8] sm:$0xf]
  %v74 = vld [vmem:[%s1 + $0xbc] sm:$0xf]
  %v75 = vld [vmem:[%s1 + $0xc0] sm:$0xf]
  %v76 = vld [vmem:[%s1 + $0xc4] sm:$0xf]
  %v77 = vld [vmem:[%s1 + $0xc8] sm:$0xf]
  %v78 = vld [vmem:[%s1 + $0xcc] sm:$0xf]
  %v79 = vld [vmem:[%s1 + $0xd0] sm:$0xf]
  %v80 = vld [vmem:[%s1 + $0xd4] sm:$0xf]
  %v81 = vld [vmem:[%s1 + $0xd8] sm:$0xf]
  %v82 = vld [vmem:[%s1 + $0xdc] sm:$0xf]
  %v83 = vld [vmem:[%s1 + $0xe0] sm:$0xf]
  %v84 = vld [vmem:[%s1 + $0xe4] sm:$0xf]
  %v85 = vld [vmem:[%s1 + $0xe8] sm:$0xf]
  %v86 = vld [vmem:[%s1 + $0xec] sm:$0xf]
  %v87 = vld [vmem:[%s1 + $0xf0] sm:$0xf]
  %v88 = vld [vmem:[%s1 + $0xf4] sm:$0xf]
  %v89 = vld [vmem:[%s1 + $0xf8] sm:$0xf]
  %v90 = vld [vmem:[%s1 + $0xfc] sm:$0xf]
  %v91 = vld [vmem:[%s1 + $0x100] sm:$0xf]
  %v92 = vld [vmem:[%s1 + $0x104] sm:$0xf]
  %v93 = vld [vmem:[%s1 + $0x108] sm:$0xf]
  %v94 = vld [vmem:[%s1 + $0x10c] sm:$0xf]
  %v95 = vld [vmem:[%s1 + $0x110] sm:$0xf]
  %v96 = vld [vmem:[%s1 + $0x114] sm:$0xf]
  %v97 = vld [vmem:[%s1 + $0x118] sm:$0xf]
  %v98 = vld [vmem:[%s1 + $0x11c] sm:$0xf]
  %v99 = vld [vmem:[%s1 + $0x120] sm:$0xf]
  %v100 = vld [vmem:[%s1 + $0x124] sm:$0xf]
  %v101 = vld [vmem:[%s1 + $0x128] sm:$0xf]
  %v102 = vld [vmem:[%s1 + $0x12c] sm:$0xf]
  %v103 = vld [vmem:[%s1 + $0x130] sm:$0xf]
  %v104 = vld [vmem:[%s1 + $0x134] sm:$0xf]
  %v105 = vld [vmem:[%s1 + $0x138] sm:$0xf]
  %v106 = vld [vmem:[%s1 + $0x13c] sm:$0xf]
  %v107 = vld [vmem:[%s1 + $0x140] sm:$0xf]
  %v108 = vld [vmem:[%s1 + $0x144] sm:$0xf]
  %v109 = vld [vmem:[%s1 + $0x148] sm:$0xf]
  %v110 = vld [vmem:[%s1 + $0x14c] sm:$0xf]
  %v111 = vld [vmem:[%s1 + $0x150] sm:$0xf]
  %v112 = vld [vmem:[%s1 + $0x154] sm:$0xf]
  %v113 = vld [vmem:[%s1 + $0x158] sm:$0xf]
  %v114 = vld [vmem:[%s1 + $0x15c] sm:$0xf]
  %v115 = vld [vmem:[%s1 + $0x160] sm:$0xf]
  %v116 = vld [vmem:[%s1 + $0x164] sm:$0xf]
  %v117 = vld [vmem:[%s1 + $0x168] sm:$0xf]
  %v118 = vld [vmem:[%s1 + $0x16c] sm:$0xf]
  %v119 = vld [vmem:[%s1 + $0x170] sm:$0xf]
  %v120 = vld [vmem:[%s1 + $0x174] sm:$0xf]
  %v121 = vld [vmem:[%s1 + $0x178] sm:$0xf]
  %v122 = vld [vmem:[%s1 + $0x17c] sm:$0xf]
  %v123 = vld [vmem:[%s2] sm:$0x1]
  %v125 = vlaneseq
  %v126 = vshrl.u32 %v125, 7
  %v127 = vsub.s32 0, %v126
  %v128 = vrot.slane %v123, %v127
  %v226 = vunpack.c.l.b16 %v27
  %v227 = vunpack.c.l.b16 %v28
  %v228 = vunpack.c.l.b16 %v29
  %v229 = vunpack.c.l.b16 %v30
  %v230 = vunpack.c.l.b16 %v31
  %v231 = vunpack.c.l.b16 %v32
  %v232 = vunpack.c.l.b16 %v33
  %v233 = vunpack.c.l.b16 %v34
  %v234 = vunpack.c.l.b16 %v35
  %v235 = vunpack.c.l.b16 %v36
  %v236 = vunpack.c.l.b16 %v37
  %v237 = vunpack.c.l.b16 %v38
  %v238 = vunpack.c.l.b16 %v39
  %v239 = vunpack.c.l.b16 %v40
  %v240 = vunpack.c.l.b16 %v41
  %v241 = vunpack.c.l.b16 %v42
  %v242 = vunpack.c.l.b16 %v43
  %v243 = vunpack.c.l.b16 %v44
  %v244 = vunpack.c.l.b16 %v45
  %v245 = vunpack.c.l.b16 %v46
  %v246 = vunpack.c.l.b16 %v47
  %v247 = vunpack.c.l.b16 %v48
  %v248 = vunpack.c.l.b16 %v49
  %v249 = vunpack.c.l.b16 %v50
  %v250 = vunpack.c.l.b16 %v51
  %v251 = vunpack.c.l.b16 %v52
  %v252 = vunpack.c.l.b16 %v53
  %v253 = vunpack.c.l.b16 %v54
  %v254 = vunpack.c.l.b16 %v55
  %v255 = vunpack.c.l.b16 %v56
  %v256 = vunpack.c.l.b16 %v57
  %v257 = vunpack.c.l.b16 %v58
  %v258 = vunpack.c.l.b16 %v59
  %v259 = vunpack.c.l.b16 %v60
  %v260 = vunpack.c.l.b16 %v61
  %v261 = vunpack.c.l.b16 %v62
  %v262 = vunpack.c.l.b16 %v63
  %v263 = vunpack.c.l.b16 %v64
  %v264 = vunpack.c.l.b16 %v65
  %v265 = vunpack.c.l.b16 %v66
  %v266 = vunpack.c.l.b16 %v67
  %v267 = vunpack.c.l.b16 %v68
  %v268 = vunpack.c.l.b16 %v69
  %v269 = vunpack.c.l.b16 %v70
  %v270 = vunpack.c.l.b16 %v71
  %v271 = vunpack.c.l.b16 %v72
  %v272 = vunpack.c.l.b16 %v73
  %v273 = vunpack.c.l.b16 %v74
  %v274 = vunpack.c.l.b16 %v75
  %v275 = vunpack.c.l.b16 %v76
  %v276 = vunpack.c.l.b16 %v77
  %v277 = vunpack.c.l.b16 %v78
  %v278 = vunpack.c.l.b16 %v79
  %v279 = vunpack.c.l.b16 %v80
  %v280 = vunpack.c.l.b16 %v81
  %v281 = vunpack.c.l.b16 %v82
  %v282 = vunpack.c.l.b16 %v83
  %v283 = vunpack.c.l.b16 %v84
  %v284 = vunpack.c.l.b16 %v85
  %v285 = vunpack.c.l.b16 %v86
  %v286 = vunpack.c.l.b16 %v87
  %v287 = vunpack.c.l.b16 %v88
  %v288 = vunpack.c.l.b16 %v89
  %v289 = vunpack.c.l.b16 %v90
  %v290 = vunpack.c.l.b16 %v91
  %v291 = vunpack.c.l.b16 %v92
  %v292 = vunpack.c.l.b16 %v93
  %v293 = vunpack.c.l.b16 %v94
  %v294 = vunpack.c.l.b16 %v95
  %v295 = vunpack.c.l.b16 %v96
  %v296 = vunpack.c.l.b16 %v97
  %v297 = vunpack.c.l.b16 %v98
  %v298 = vunpack.c.l.b16 %v99
  %v299 = vunpack.c.l.b16 %v100
  %v300 = vunpack.c.l.b16 %v101
  %v301 = vunpack.c.l.b16 %v102
  %v302 = vunpack.c.l.b16 %v103
  %v303 = vunpack.c.l.b16 %v104
  %v304 = vunpack.c.l.b16 %v105
  %v305 = vunpack.c.l.b16 %v106
  %v306 = vunpack.c.l.b16 %v107
  %v307 = vunpack.c.l.b16 %v108
  %v308 = vunpack.c.l.b16 %v109
  %v309 = vunpack.c.l.b16 %v110
  %v310 = vunpack.c.l.b16 %v111
  %v311 = vunpack.c.l.b16 %v112
  %v312 = vunpack.c.l.b16 %v113
  %v313 = vunpack.c.l.b16 %v114
  %v314 = vunpack.c.l.b16 %v115
  %v315 = vunpack.c.l.b16 %v116
  %v316 = vunpack.c.l.b16 %v117
  %v317 = vunpack.c.l.b16 %v118
  %v318 = vunpack.c.l.b16 %v119
  %v319 = vunpack.c.l.b16 %v120
  %v320 = vunpack.c.l.b16 %v121
  %v321 = vunpack.c.l.b16 %v122
  %v322 = vpack.c.b16 %v227, %v226
  %v323 = vpack.c.b16 %v229, %v228
  %v324 = vpack.c.b16 %v231, %v230
  %v325 = vpack.c.b16 %v233, %v232
  %v326 = vpack.c.b16 %v235, %v234
  %v327 = vpack.c.b16 %v237, %v236
  %v328 = vpack.c.b16 %v239, %v238
  %v329 = vpack.c.b16 %v241, %v240
  %v330 = vpack.c.b16 %v243, %v242
  %v331 = vpack.c.b16 %v245, %v244
  %v332 = vpack.c.b16 %v247, %v246
  %v333 = vpack.c.b16 %v249, %v248
  %v334 = vpack.c.b16 %v251, %v250
  %v335 = vpack.c.b16 %v253, %v252
  %v336 = vpack.c.b16 %v255, %v254
  %v337 = vpack.c.b16 %v257, %v256
  %v338 = vpack.c.b16 %v259, %v258
  %v339 = vpack.c.b16 %v261, %v260
  %v340 = vpack.c.b16 %v263, %v262
  %v341 = vpack.c.b16 %v265, %v264
  %v342 = vpack.c.b16 %v267, %v266
  %v343 = vpack.c.b16 %v269, %v268
  %v344 = vpack.c.b16 %v271, %v270
  %v345 = vpack.c.b16 %v273, %v272
  %v346 = vpack.c.b16 %v275, %v274
  %v347 = vpack.c.b16 %v277, %v276
  %v348 = vpack.c.b16 %v279, %v278
  %v349 = vpack.c.b16 %v281, %v280
  %v350 = vpack.c.b16 %v283, %v282
  %v351 = vpack.c.b16 %v285, %v284
  %v352 = vpack.c.b16 %v287, %v286
  %v353 = vpack.c.b16 %v289, %v288
  %v354 = vpack.c.b16 %v291, %v290
  %v355 = vpack.c.b16 %v293, %v292
  %v356 = vpack.c.b16 %v295, %v294
  %v357 = vpack.c.b16 %v297, %v296
  %v358 = vpack.c.b16 %v299, %v298
  %v359 = vpack.c.b16 %v301, %v300
  %v360 = vpack.c.b16 %v303, %v302
  %v361 = vpack.c.b16 %v305, %v304
  %v362 = vpack.c.b16 %v307, %v306
  %v363 = vpack.c.b16 %v309, %v308
  %v364 = vpack.c.b16 %v311, %v310
  %v365 = vpack.c.b16 %v313, %v312
  %v366 = vpack.c.b16 %v315, %v314
  %v367 = vpack.c.b16 %v317, %v316
  %v368 = vpack.c.b16 %v319, %v318
  %v369 = vpack.c.b16 %v321, %v320
  %418 = vmatprep.subr.bf16.mxu0 0
  %419 = vmatpush1.bf16.msra.mxu0 %v322
  %420 = vmatprep.subr.bf16.mxu0 0
  %421 = vmatpush1.bf16.msra.mxu0 %v323
  %422 = vmatprep.subr.bf16.mxu0 0
  %423 = vmatpush1.bf16.msra.mxu0 %v324
  %424 = vmatprep.subr.bf16.mxu0 0
  %425 = vmatpush1.bf16.msra.mxu0 %v325
  %426 = vmatprep.subr.bf16.mxu0 0
  %427 = vmatpush1.bf16.msra.mxu0 %v326
  %428 = vmatprep.subr.bf16.mxu0 0
  %429 = vmatpush1.bf16.msra.mxu0 %v327
  %430 = vmatprep.subr.bf16.mxu0 0
  %431 = vmatpush1.bf16.msra.mxu0 %v328
  %432 = vmatprep.subr.bf16.mxu0 0
  %433 = vmatpush1.bf16.msra.mxu0 %v329
  %434 = vmatprep.subr.bf16.mxu0 0
  %435 = vmatpush1.bf16.msra.mxu0 %v330
  %436 = vmatprep.subr.bf16.mxu0 0
  %437 = vmatpush1.bf16.msra.mxu0 %v331
  %438 = vmatprep.subr.bf16.mxu0 0
  %439 = vmatpush1.bf16.msra.mxu0 %v332
  %440 = vmatprep.subr.bf16.mxu0 0
  %441 = vmatpush1.bf16.msra.mxu0 %v333
  %442 = vmatprep.subr.bf16.mxu0 0
  %443 = vmatpush1.bf16.msra.mxu0 %v334
  %444 = vmatprep.subr.bf16.mxu0 0
  %445 = vmatpush1.bf16.msra.mxu0 %v335
  %446 = vmatprep.subr.bf16.mxu0 0
  %447 = vmatpush1.bf16.msra.mxu0 %v336
  %448 = vmatprep.subr.bf16.mxu0 0
  %449 = vmatpush1.bf16.msra.mxu0 %v337
  %450 = vmatprep.mubr.bf16.mxu0 %v22
  %451 = vmatmul.mubr.bf16.gmra.mrb[0].mxu0 %v21
  %v452 = vpop.f32.mrb[0].mxu0
  %v453 = vadd.f32 %v128, %v452
  %v454 = vpop.f32.mrb[0].mxu0
  %v455 = vpop.f32.mrb[0].mxu0
  %v456 = vpop.f32.mrb[0].mxu0
  %457 = vdwg.mxu0
  %458 = vmatprep.subr.bf16.mxu0 0
  %459 = vmatpush1.bf16.msra.mxu0 %v338
  %460 = vmatprep.subr.bf16.mxu0 0
  %461 = vmatpush1.bf16.msra.mxu0 %v339
  %462 = vmatprep.subr.bf16.mxu0 0
  %463 = vmatpush1.bf16.msra.mxu0 %v340
  %464 = vmatprep.subr.bf16.mxu0 0
  %465 = vmatpush1.bf16.msra.mxu0 %v341
  %466 = vmatprep.subr.bf16.mxu0 0
  %467 = vmatpush1.bf16.msra.mxu0 %v342
  %468 = vmatprep.subr.bf16.mxu0 0
  %469 = vmatpush1.bf16.msra.mxu0 %v343
  %470 = vmatprep.subr.bf16.mxu0 0
  %471 = vmatpush1.bf16.msra.mxu0 %v344
  %472 = vmatprep.subr.bf16.mxu0 0
  %473 = vmatpush1.bf16.msra.mxu0 %v345
  %474 = vmatprep.subr.bf16.mxu0 0
  %475 = vmatpush1.bf16.msra.mxu0 %v346
  %476 = vmatprep.subr.bf16.mxu0 0
  %477 = vmatpush1.bf16.msra.mxu0 %v347
  %478 = vmatprep.subr.bf16.mxu0 0
  %479 = vmatpush1.bf16.msra.mxu0 %v348
  %480 = vmatprep.subr.bf16.mxu0 0
  %481 = vmatpush1.bf16.msra.mxu0 %v349
  %482 = vmatprep.subr.bf16.mxu0 0
  %483 = vmatpush1.bf16.msra.mxu0 %v350
  %484 = vmatprep.subr.bf16.mxu0 0
  %485 = vmatpush1.bf16.msra.mxu0 %v351
  %486 = vmatprep.subr.bf16.mxu0 0
  %487 = vmatpush1.bf16.msra.mxu0 %v352
  %488 = vmatprep.subr.bf16.mxu0 0
  %489 = vmatpush1.bf16.msra.mxu0 %v353
  %490 = vmatprep.mubr.bf16.mxu0 %v24
  %491 = vmatmul.mubr.bf16.gmra.mrb[0].mxu0 %v23
  %v492 = vpop.f32.mrb[0].mxu0
  %v493 = vadd.f32 %v453, %v492
  %v494 = vpop.f32.mrb[0].mxu0
  %v495 = vpop.f32.mrb[0].mxu0
  %v496 = vpop.f32.mrb[0].mxu0
  %497 = vdwg.mxu0
  %498 = vmatprep.subr.bf16.mxu0 0
  %499 = vmatpush1.bf16.msra.mxu0 %v354
  %500 = vmatprep.subr.bf16.mxu0 0
  %501 = vmatpush1.bf16.msra.mxu0 %v355
  %502 = vmatprep.subr.bf16.mxu0 0
  %503 = vmatpush1.bf16.msra.mxu0 %v356
  %504 = vmatprep.subr.bf16.mxu0 0
  %505 = vmatpush1.bf16.msra.mxu0 %v357
  %506 = vmatprep.subr.bf16.mxu0 0
  %507 = vmatpush1.bf16.msra.mxu0 %v358
  %508 = vmatprep.subr.bf16.mxu0 0
  %509 = vmatpush1.bf16.msra.mxu0 %v359
  %510 = vmatprep.subr.bf16.mxu0 0
  %511 = vmatpush1.bf16.msra.mxu0 %v360
  %512 = vmatprep.subr.bf16.mxu0 0
  %513 = vmatpush1.bf16.msra.mxu0 %v361
  %514 = vmatprep.subr.bf16.mxu0 0
  %515 = vmatpush1.bf16.msra.mxu0 %v362
  %516 = vmatprep.subr.bf16.mxu0 0
  %517 = vmatpush1.bf16.msra.mxu0 %v363
  %518 = vmatprep.subr.bf16.mxu0 0
  %519 = vmatpush1.bf16.msra.mxu0 %v364
  %520 = vmatprep.subr.bf16.mxu0 0
  %521 = vmatpush1.bf16.msra.mxu0 %v365
  %522 = vmatprep.subr.bf16.mxu0 0
  %523 = vmatpush1.bf16.msra.mxu0 %v366
  %524 = vmatprep.subr.bf16.mxu0 0
  %525 = vmatpush1.bf16.msra.mxu0 %v367
  %526 = vmatprep.subr.bf16.mxu0 0
  %527 = vmatpush1.bf16.msra.mxu0 %v368
  %528 = vmatprep.subr.bf16.mxu0 0
  %529 = vmatpush1.bf16.msra.mxu0 %v369
  %530 = vmatprep.mubr.bf16.mxu0 %v26
  %531 = vmatmul.mubr.bf16.gmra.mrb[0].mxu0 %v25
  %v532 = vpop.f32.mrb[0].mxu0
  %v533 = vadd.f32 %v493, %v532
  %v534 = vpop.f32.mrb[0].mxu0
  %v535 = vpop.f32.mrb[0].mxu0
  %v536 = vpop.f32.mrb[0].mxu0
  %537 = vdwg.mxu0
  %vm538 = vcmask 523264
  %539 = vst.msk [vmem:[%s3] sm:$0xff] %vm538, %v533
  // Predicated region
  $region14: #{uni_multitask_forward.3} parent=0 // pred_check
    _
  $region15: #{uni_multitask_forward.3} parent=0 // pred_check_branch
    %541 = sbr.rel (0) target = $region17
  $region16: #{uni_multitask_forward.3} parent=0 // pred_region
    _
  $region17: #{uni_multitask_forward.3} parent=0 // pred_fallthru
    _
  // Predicated region
  $region18: #{uni_multitask_forward.3} parent=0 // pred_check
    _
  $region19: #{uni_multitask_forward.3} parent=0 // pred_check_branch
    %543 = sbr.rel (0) target = $region21
  $region20: #{uni_multitask_forward.3} parent=0 // pred_region
    _
  $region21: #{uni_multitask_forward.3} parent=0 // pred_fallthru
    _

// kernel: uni_multitask_forward.5
$region0: #{uni_multitask_forward.5}
  #allocation0 [shape = 'u32[]', space=smem, size = 0x4, offset = 0x4, fixed_abs, tag = 'smem constant byte address 0x4 - core index']
  #allocation1 [shape = 'u32[144,128]{1,0:T(1,128)}', space=vmem, size = 0x12000, scoped, tag = 'internal scratch']
  %s0 = inlined_call_operand.vmem [shape: f32[2,64], index: 0, kind: input, shape index: {}]
  %s1 = inlined_call_operand.vmem [shape: f32[1,64], index: 1, kind: input, shape index: {}]
  %s2 = inlined_call_operand.vmem [shape: f32[1,64], index: 2, kind: input, shape index: {}]
  %s3 = inlined_call_operand.vmem [shape: bf16[64,768], index: 3, kind: input, shape index: {}]
  %s4 = inlined_call_operand.vmem [shape: f32[1,768], index: 4, kind: input, shape index: {}]
  %s5 = inlined_call_operand.vmem [shape: bf16[768,3], index: 5, kind: input, shape index: {}]
  %s6 = inlined_call_operand.vmem [shape: f32[1,3], index: 6, kind: input, shape index: {}]
  %s7 = inlined_call_operand.vmem [shape: bf16[64,128], index: 7, kind: input, shape index: {}]
  %s8 = inlined_call_operand.vmem [shape: f32[1,128], index: 8, kind: input, shape index: {}]
  %s9 = inlined_call_operand.vmem [shape: bf16[128,3], index: 9, kind: input, shape index: {}]
  %s10 = inlined_call_operand.vmem [shape: f32[1,3], index: 10, kind: input, shape index: {}]
  %s11 = inlined_call_operand.vmem [shape: f32[2,3], index: 11, kind: output, shape index: {0}]
  %s12 = inlined_call_operand.hbm [shape: f32[2,3], index: 12, kind: output, shape index: {1}]
  %13 = xla_tuple %s11, %s12
  %s14 = sld [smem:[#allocation0]]
  $region62: #{uni_multitask_forward.5} parent=0
    _
  %s16 = ssub.s32 1, %s14
  %s17 = scalar_select 0, %s16, %s14
  $region1: #{uni_multitask_forward.5} parent=0
    #allocation2 [shape = 'u8[1024]{0}', space=vmem, size = 0x400, scoped, tag = 'output window, operand 1, single buffered']
    #allocation3 [shape = 's32[1]{0}', space=sflag, size = 0x4, scoped, tag = 'scoped memory for uni_multitask_forward.5']
    %18 = vsyncpa [#allocation3], 0
    // Predicated region
    $region2: #{uni_multitask_forward.5} parent=1 // pred_check
      _
    $region3: #{uni_multitask_forward.5} parent=1 // pred_check_branch
      %20 = sbr.rel (0) target = $region5
    $region4: #{uni_multitask_forward.5} parent=1 // pred_region
      _
    $region5: #{uni_multitask_forward.5} parent=1 // pred_fallthru
      _
    // Predicated region
    $region6: #{uni_multitask_forward.5} parent=1 // pred_check
      _
    $region7: #{uni_multitask_forward.5} parent=1 // pred_check_branch
      %22 = sbr.rel (0) target = $region9
    $region8: #{uni_multitask_forward.5} parent=1 // pred_region
      _
    $region9: #{uni_multitask_forward.5} parent=1 // pred_fallthru
      _
    // Predicated region
    $region10: #{uni_multitask_forward.5} parent=1 // pred_check
      _
    $region11: #{uni_multitask_forward.5} parent=1 // pred_check_branch
      %24 = sbr.rel (0) target = $region13
    $region12: #{uni_multitask_forward.5} parent=1 // pred_region
      _
    $region13: #{uni_multitask_forward.5} parent=1 // pred_fallthru
      _
    // Predicated region
    $region14: #{uni_multitask_forward.5} parent=1 // pred_check
      _
    $region15: #{uni_multitask_forward.5} parent=1 // pred_check_branch
      %26 = sbr.rel (0) target = $region17
    $region16: #{uni_multitask_forward.5} parent=1 // pred_region
      _
    $region17: #{uni_multitask_forward.5} parent=1 // pred_fallthru
      _
    // Predicated region
    $region18: #{uni_multitask_forward.5} parent=1 // pred_check
      _
    $region19: #{uni_multitask_forward.5} parent=1 // pred_check_branch
      %28 = sbr.rel (0) target = $region21
    $region20: #{uni_multitask_forward.5} parent=1 // pred_region
      _
    $region21: #{uni_multitask_forward.5} parent=1 // pred_fallthru
      _
    // Predicated region
    $region22: #{uni_multitask_forward.5} parent=1 // pred_check
      _
    $region23: #{uni_multitask_forward.5} parent=1 // pred_check_branch
      %30 = sbr.rel (0) target = $region25
    $region24: #{uni_multitask_forward.5} parent=1 // pred_region
      _
    $region25: #{uni_multitask_forward.5} parent=1 // pred_fallthru
      _
    // Predicated region
    $region26: #{uni_multitask_forward.5} parent=1 // pred_check
      _
    $region27: #{uni_multitask_forward.5} parent=1 // pred_check_branch
      %32 = sbr.rel (0) target = $region29
    $region28: #{uni_multitask_forward.5} parent=1 // pred_region
      _
    $region29: #{uni_multitask_forward.5} parent=1 // pred_fallthru
      _
    // Predicated region
    $region30: #{uni_multitask_forward.5} parent=1 // pred_check
      _
    $region31: #{uni_multitask_forward.5} parent=1 // pred_check_branch
      %34 = sbr.rel (0) target = $region33
    $region32: #{uni_multitask_forward.5} parent=1 // pred_region
      _
    $region33: #{uni_multitask_forward.5} parent=1 // pred_fallthru
      _
    // Predicated region
    $region34: #{uni_multitask_forward.5} parent=1 // pred_check
      _
    $region35: #{uni_multitask_forward.5} parent=1 // pred_check_branch
      %36 = sbr.rel (0) target = $region37
    $region36: #{uni_multitask_forward.5} parent=1 // pred_region
      _
    $region37: #{uni_multitask_forward.5} parent=1 // pred_fallthru
      _
    // Predicated region
    $region38: #{uni_multitask_forward.5} parent=1 // pred_check
      _
    $region39: #{uni_multitask_forward.5} parent=1 // pred_check_branch
      %38 = sbr.rel (0) target = $region41
    $region40: #{uni_multitask_forward.5} parent=1 // pred_region
      _
    $region41: #{uni_multitask_forward.5} parent=1 // pred_fallthru
      _
    // Predicated region
    $region42: #{uni_multitask_forward.5} parent=1 // pred_check
      _
    $region43: #{uni_multitask_forward.5} parent=1 // pred_check_branch
      %40 = sbr.rel (0) target = $region45
    $region44: #{uni_multitask_forward.5} parent=1 // pred_region
      _
    $region45: #{uni_multitask_forward.5} parent=1 // pred_fallthru
      _
    %v42 = vld [vmem:[%s0] sm:$0x3]
    %v43 = vld [vmem:[%s1] sm:$0x1]
    %v44 = vld [vmem:[%s2] sm:$0x1]
    %vm45 = vcmask 517120
    %v46 = vsel %vm45, %v42, 0.0
    %47 = vadd.xlane.f32.xlu0 %v46
    %v48 = vpop.xlane.xlu0 %47
    %v49 = vrcp.pop 64.0
    %v50 = vmul.f32 %v48, %v49
    %v51 = vsub.f32 %v42, %v50
    %v52 = vmul.f32 %v51, %v51
    %v53 = vsel %vm45, %v52, 0.0
    %54 = vadd.xlane.f32.xlu0 %v53
    %v55 = vpop.xlane.xlu0 %54
    %v56 = vmul.f32 %v55, %v49
    %v57 = vadd.f32 %v56, 1e-06
    %v58 = vrsqrt.pop %v57
    %v59 = vmul.f32 %v51, %v58
    %v61 = vlaneseq
    %v62 = vshrl.u32 %v61, 7
    %v63 = vsub.s32 0, %v62
    %v64 = vrot.slane %v43, %v63
    %v66 = vmul.f32 %v59, %v64
    %v68 = vlaneseq
    %v69 = vshrl.u32 %v68, 7
    %v70 = vsub.s32 0, %v69
    %v71 = vrot.slane %v44, %v70
    %v73 = vadd.f32 %v66, %v71
    %v74 = vpack.c.bf16 %v73, %v73
    %v75 = vld [vmem:[%s3] sm:$0xff]
    %v76 = vld [vmem:[%s3 + $0x8] sm:$0xff]
    %v77 = vld [vmem:[%s3 + $0x10] sm:$0xff]
    %v78 = vld [vmem:[%s3 + $0x18] sm:$0xff]
    %v79 = vld [vmem:[%s3 + $0x20] sm:$0xff]
    %v80 = vld [vmem:[%s3 + $0x28] sm:$0xff]
    %v81 = vld [vmem:[%s3 + $0x30] sm:$0xff]
    %v82 = vld [vmem:[%s3 + $0x38] sm:$0xff]
    %v83 = vld [vmem:[%s3 + $0x40] sm:$0xff]
    %v84 = vld [vmem:[%s3 + $0x48] sm:$0xff]
    %v85 = vld [vmem:[%s3 + $0x50] sm:$0xff]
    %v86 = vld [vmem:[%s3 + $0x58] sm:$0xff]
    %v87 = vld [vmem:[%s3 + $0x60] sm:$0xff]
    %v88 = vld [vmem:[%s3 + $0x68] sm:$0xff]
    %v89 = vld [vmem:[%s3 + $0x70] sm:$0xff]
    %v90 = vld [vmem:[%s3 + $0x78] sm:$0xff]
    %v91 = vld [vmem:[%s3 + $0x80] sm:$0xff]
    %v92 = vld [vmem:[%s3 + $0x88] sm:$0xff]
    %v93 = vld [vmem:[%s3 + $0x90] sm:$0xff]
    %v94 = vld [vmem:[%s3 + $0x98] sm:$0xff]
    %v95 = vld [vmem:[%s3 + $0xa0] sm:$0xff]
    %v96 = vld [vmem:[%s3 + $0xa8] sm:$0xff]
    %v97 = vld [vmem:[%s3 + $0xb0] sm:$0xff]
    %v98 = vld [vmem:[%s3 + $0xb8] sm:$0xff]
    %v99 = vld [vmem:[%s4] sm:$0x3f]
    %v101 = vlaneseq
    %v102 = vshrl.u32 %v101, 7
    %v103 = vsub.s32 0, %v102
    %v104 = vrot.slane %v99, %v103
    %v105 = vlaneseq
    %v106 = vshrl.u32 %v105, 7
    %v107 = vsub.s32 1, %v106
    %v108 = vrot.slane %v99, %v107
    %v109 = vlaneseq
    %v110 = vshrl.u32 %v109, 7
    %v111 = vsub.s32 2, %v110
    %v112 = vrot.slane %v99, %v111
    %v113 = vlaneseq
    %v114 = vshrl.u32 %v113, 7
    %v115 = vsub.s32 3, %v114
    %v116 = vrot.slane %v99, %v115
    %v117 = vlaneseq
    %v118 = vshrl.u32 %v117, 7
    %v119 = vsub.s32 4, %v118
    %v120 = vrot.slane %v99, %v119
    %v121 = vlaneseq
    %v122 = vshrl.u32 %v121, 7
    %v123 = vsub.s32 5, %v122
    %v124 = vrot.slane %v99, %v123
    %v155 = vunpack.c.l.b16 %v75
    %v156 = vunpack.c.h.b16 %v75
    %v157 = vunpack.c.l.b16 %v76
    %v158 = vunpack.c.h.b16 %v76
    %v159 = vunpack.c.l.b16 %v77
    %v160 = vunpack.c.h.b16 %v77
    %v161 = vunpack.c.l.b16 %v78
    %v162 = vunpack.c.h.b16 %v78
    %v163 = vunpack.c.l.b16 %v79
    %v164 = vunpack.c.h.b16 %v79
    %v165 = vunpack.c.l.b16 %v80
    %v166 = vunpack.c.h.b16 %v80
    %v167 = vunpack.c.l.b16 %v81
    %v168 = vunpack.c.h.b16 %v81
    %v169 = vunpack.c.l.b16 %v82
    %v170 = vunpack.c.h.b16 %v82
    %v171 = vunpack.c.l.b16 %v83
    %v172 = vunpack.c.h.b16 %v83
    %v173 = vunpack.c.l.b16 %v84
    %v174 = vunpack.c.h.b16 %v84
    %v175 = vunpack.c.l.b16 %v85
    %v176 = vunpack.c.h.b16 %v85
    %v177 = vunpack.c.l.b16 %v86
    %v178 = vunpack.c.h.b16 %v86
    %v179 = vunpack.c.l.b16 %v87
    %v180 = vunpack.c.h.b16 %v87
    %v181 = vunpack.c.l.b16 %v88
    %v182 = vunpack.c.h.b16 %v88
    %v183 = vunpack.c.l.b16 %v89
    %v184 = vunpack.c.h.b16 %v89
    %v185 = vunpack.c.l.b16 %v90
    %v186 = vunpack.c.h.b16 %v90
    %v187 = vunpack.c.l.b16 %v91
    %v188 = vunpack.c.h.b16 %v91
    %v189 = vunpack.c.l.b16 %v92
    %v190 = vunpack.c.h.b16 %v92
    %v191 = vunpack.c.l.b16 %v93
    %v192 = vunpack.c.h.b16 %v93
    %v193 = vunpack.c.l.b16 %v94
    %v194 = vunpack.c.h.b16 %v94
    %v195 = vunpack.c.l.b16 %v95
    %v196 = vunpack.c.h.b16 %v95
    %v197 = vunpack.c.l.b16 %v96
    %v198 = vunpack.c.h.b16 %v96
    %v199 = vunpack.c.l.b16 %v97
    %v200 = vunpack.c.h.b16 %v97
    %v201 = vunpack.c.l.b16 %v98
    %v202 = vunpack.c.h.b16 %v98
    %v203 = vpack.c.b16 %v161, %v155
    %v204 = vpack.c.b16 %v162, %v156
    %v205 = vpack.c.b16 %v163, %v157
    %v206 = vpack.c.b16 %v164, %v158
    %v207 = vpack.c.b16 %v165, %v159
    %v208 = vpack.c.b16 %v166, %v160
    %v209 = vpack.c.b16 %v173, %v167
    %v210 = vpack.c.b16 %v174, %v168
    %v211 = vpack.c.b16 %v175, %v169
    %v212 = vpack.c.b16 %v176, %v170
    %v213 = vpack.c.b16 %v177, %v171
    %v214 = vpack.c.b16 %v178, %v172
    %v215 = vpack.c.b16 %v185, %v179
    %v216 = vpack.c.b16 %v186, %v180
    %v217 = vpack.c.b16 %v187, %v181
    %v218 = vpack.c.b16 %v188, %v182
    %v219 = vpack.c.b16 %v189, %v183
    %v220 = vpack.c.b16 %v190, %v184
    %v221 = vpack.c.b16 %v197, %v191
    %v222 = vpack.c.b16 %v198, %v192
    %v223 = vpack.c.b16 %v199, %v193
    %v224 = vpack.c.b16 %v200, %v194
    %v225 = vpack.c.b16 %v201, %v195
    %v226 = vpack.c.b16 %v202, %v196
    %vm251 = vcmask 523264
    %v253 = vsel %vm251, %v74, 0
    %255 = vmatprep.subr.bf16.mxu0 %v204
    %256 = vmatpush1.bf16.msra.mxu0 %v203
    %257 = vmatprep.subr.bf16.mxu0 %v210
    %258 = vmatpush1.bf16.msra.mxu0 %v209
    %259 = vmatprep.subr.bf16.mxu0 %v216
    %260 = vmatpush1.bf16.msra.mxu0 %v215
    %261 = vmatprep.subr.bf16.mxu0 %v222
    %262 = vmatpush1.bf16.msra.mxu0 %v221
    %263 = vmatprep.subr.bf16.mxu0 0
    %264 = vmatpush1.bf16.msra.mxu0 0
    %265 = vmatprep.subr.bf16.mxu0 0
    %266 = vmatpush1.bf16.msra.mxu0 0
    %267 = vmatprep.subr.bf16.mxu0 0
    %268 = vmatpush1.bf16.msra.mxu0 0
    %269 = vmatprep.subr.bf16.mxu0 0
    %270 = vmatpush1.bf16.msra.mxu0 0
    %271 = vmatprep.subr.bf16.mxu0 0
    %272 = vmatpush1.bf16.msra.mxu0 0
    %273 = vmatprep.subr.bf16.mxu0 0
    %274 = vmatpush1.bf16.msra.mxu0 0
    %275 = vmatprep.subr.bf16.mxu0 0
    %276 = vmatpush1.bf16.msra.mxu0 0
    %277 = vmatprep.subr.bf16.mxu0 0
    %278 = vmatpush1.bf16.msra.mxu0 0
    %279 = vmatprep.subr.bf16.mxu0 0
    %280 = vmatpush1.bf16.msra.mxu0 0
    %281 = vmatprep.subr.bf16.mxu0 0
    %282 = vmatpush1.bf16.msra.mxu0 0
    %283 = vmatprep.subr.bf16.mxu0 0
    %284 = vmatpush1.bf16.msra.mxu0 0
    %285 = vmatprep.subr.bf16.mxu0 0
    %286 = vmatpush1.bf16.msra.mxu0 0
    %287 = vmatprep.mubr.bf16.mxu0 0
    %288 = vmatmul.mubr.bf16.gmra.mrb[0].mxu0 %v253
    %v289 = vpop.f32.mrb[0].mxu0
    %v290 = vadd.f32 %v104, %v289
    %v291 = vpop.f32.mrb[0].mxu0
    %v292 = vadd.f32 %v108, %v291
    %v293 = vpop.f32.mrb[0].mxu0
    %v294 = vpop.f32.mrb[0].mxu0
    %295 = vdwg.mxu0
    %296 = vmatprep.subr.bf16.mxu0 %v206
    %297 = vmatpush1.bf16.msra.mxu0 %v205
    %298 = vmatprep.subr.bf16.mxu0 %v212
    %299 = vmatpush1.bf16.msra.mxu0 %v211
    %300 = vmatprep.subr.bf16.mxu0 %v218
    %301 = vmatpush1.bf16.msra.mxu0 %v217
    %302 = vmatprep.subr.bf16.mxu0 %v224
    %303 = vmatpush1.bf16.msra.mxu0 %v223
    %304 = vmatprep.subr.bf16.mxu0 0
    %305 = vmatpush1.bf16.msra.mxu0 0
    %306 = vmatprep.subr.bf16.mxu0 0
    %307 = vmatpush1.bf16.msra.mxu0 0
    %308 = vmatprep.subr.bf16.mxu0 0
    %309 = vmatpush1.bf16.msra.mxu0 0
    %310 = vmatprep.subr.bf16.mxu0 0
    %311 = vmatpush1.bf16.msra.mxu0 0
    %312 = vmatprep.subr.bf16.mxu0 0
    %313 = vmatpush1.bf16.msra.mxu0 0
    %314 = vmatprep.subr.bf16.mxu0 0
    %315 = vmatpush1.bf16.msra.mxu0 0
    %316 = vmatprep.subr.bf16.mxu0 0
    %317 = vmatpush1.bf16.msra.mxu0 0
    %318 = vmatprep.subr.bf16.mxu0 0
    %319 = vmatpush1.bf16.msra.mxu0 0
    %320 = vmatprep.subr.bf16.mxu0 0
    %321 = vmatpush1.bf16.msra.mxu0 0
    %322 = vmatprep.subr.bf16.mxu0 0
    %323 = vmatpush1.bf16.msra.mxu0 0
    %324 = vmatprep.subr.bf16.mxu0 0
    %325 = vmatpush1.bf16.msra.mxu0 0
    %326 = vmatprep.subr.bf16.mxu0 0
    %327 = vmatpush1.bf16.msra.mxu0 0
    %328 = vmatprep.mubr.bf16.mxu0 0
    %329 = vmatmul.mubr.bf16.gmra.mrb[0].mxu0 %v253
    %v330 = vpop.f32.mrb[0].mxu0
    %v331 = vadd.f32 %v112, %v330
    %v332 = vpop.f32.mrb[0].mxu0
    %v333 = vadd.f32 %v116, %v332
    %v334 = vpop.f32.mrb[0].mxu0
    %v335 = vpop.f32.mrb[0].mxu0
    %336 = vdwg.mxu0
    %337 = vmatprep.subr.bf16.mxu0 %v208
    %338 = vmatpush1.bf16.msra.mxu0 %v207
    %339 = vmatprep.subr.bf16.mxu0 %v214
    %340 = vmatpush1.bf16.msra.mxu0 %v213
    %341 = vmatprep.subr.bf16.mxu0 %v220
    %342 = vmatpush1.bf16.msra.mxu0 %v219
    %343 = vmatprep.subr.bf16.mxu0 %v226
    %344 = vmatpush1.bf16.msra.mxu0 %v225
    %345 = vmatprep.subr.bf16.mxu0 0
    %346 = vmatpush1.bf16.msra.mxu0 0
    %347 = vmatprep.subr.bf16.mxu0 0
    %348 = vmatpush1.bf16.msra.mxu0 0
    %349 = vmatprep.subr.bf16.mxu0 0
    %350 = vmatpush1.bf16.msra.mxu0 0
    %351 = vmatprep.subr.bf16.mxu0 0
    %352 = vmatpush1.bf16.msra.mxu0 0
    %353 = vmatprep.subr.bf16.mxu0 0
    %354 = vmatpush1.bf16.msra.mxu0 0
    %355 = vmatprep.subr.bf16.mxu0 0
    %356 = vmatpush1.bf16.msra.mxu0 0
    %357 = vmatprep.subr.bf16.mxu0 0
    %358 = vmatpush1.bf16.msra.mxu0 0
    %359 = vmatprep.subr.bf16.mxu0 0
    %360 = vmatpush1.bf16.msra.mxu0 0
    %361 = vmatprep.subr.bf16.mxu0 0
    %362 = vmatpush1.bf16.msra.mxu0 0
    %363 = vmatprep.subr.bf16.mxu0 0
    %364 = vmatpush1.bf16.msra.mxu0 0
    %365 = vmatprep.subr.bf16.mxu0 0
    %366 = vmatpush1.bf16.msra.mxu0 0
    %367 = vmatprep.subr.bf16.mxu0 0
    %368 = vmatpush1.bf16.msra.mxu0 0
    %369 = vmatprep.mubr.bf16.mxu0 0
    %370 = vmatmul.mubr.bf16.gmra.mrb[0].mxu0 %v253
    %v371 = vpop.f32.mrb[0].mxu0
    %v372 = vadd.f32 %v120, %v371
    %v373 = vpop.f32.mrb[0].mxu0
    %v374 = vadd.f32 %v124, %v373
    %v375 = vpop.f32.mrb[0].mxu0
    %v376 = vpop.f32.mrb[0].mxu0
    %377 = vdwg.mxu0
    %v378 = vmax.f32 %v290, 0.0
    %v379 = vmax.f32 %v292, 0.0
    %v380 = vmax.f32 %v331, 0.0
    %v381 = vmax.f32 %v333, 0.0
    %v382 = vmax.f32 %v372, 0.0
    %v383 = vmax.f32 %v374, 0.0
    %v384 = vpack.c.bf16 %v378, %v378
    %v385 = vpack.c.bf16 %v379, %v379
    %v386 = vpack.c.bf16 %v380, %v380
    %v387 = vpack.c.bf16 %v381, %v381
    %v388 = vpack.c.bf16 %v382, %v382
    %v389 = vpack.c.bf16 %v383, %v383
    %v390 = vld [vmem:[%s5] sm:$0xf]
    %v391 = vld [vmem:[%s5 + $0x4] sm:$0xf]
    %v392 = vld [vmem:[%s5 + $0x8] sm:$0xf]
    %v393 = vld [vmem:[%s5 + $0xc] sm:$0xf]
    %v394 = vld [vmem:[%s5 + $0x10] sm:$0xf]
    %v395 = vld [vmem:[%s5 + $0x14] sm:$0xf]
    %v396 = vld [vmem:[%s5 + $0x18] sm:$0xf]
    %v397 = vld [vmem:[%s5 + $0x1c] sm:$0xf]
    %v398 = vld [vmem:[%s5 + $0x20] sm:$0xf]
    %v399 = vld [vmem:[%s5 + $0x24] sm:$0xf]
    %v400 = vld [vmem:[%s5 + $0x28] sm:$0xf]
    %v401 = vld [vmem:[%s5 + $0x2c] sm:$0xf]
    %v402 = vld [vmem:[%s5 + $0x30] sm:$0xf]
    %v403 = vld [vmem:[%s5 + $0x34] sm:$0xf]
    %v404 = vld [vmem:[%s5 + $0x38] sm:$0xf]
    %v405 = vld [vmem:[%s5 + $0x3c] sm:$0xf]
    %v406 = vld [vmem:[%s5 + $0x40] sm:$0xf]
    %v407 = vld [vmem:[%s5 + $0x44] sm:$0xf]
    %v408 = vld [vmem:[%s5 + $0x48] sm:$0xf]
    %v409 = vld [vmem:[%s5 + $0x4c] sm:$0xf]
    %v410 = vld [vmem:[%s5 + $0x50] sm:$0xf]
    %v411 = vld [vmem:[%s5 + $0x54] sm:$0xf]
    %v412 = vld [vmem:[%s5 + $0x58] sm:$0xf]
    %v413 = vld [vmem:[%s5 + $0x5c] sm:$0xf]
    %v414 = vld [vmem:[%s5 + $0x60] sm:$0xf]
    %v415 = vld [vmem:[%s5 + $0x64] sm:$0xf]
    %v416 = vld [vmem:[%s5 + $0x68] sm:$0xf]
    %v417 = vld [vmem:[%s5 + $0x6c] sm:$0xf]
    %v418 = vld [vmem:[%s5 + $0x70] sm:$0xf]
    %v419 = vld [vmem:[%s5 + $0x74] sm:$0xf]
    %v420 = vld [vmem:[%s5 + $0x78] sm:$0xf]
    %v421 = vld [vmem:[%s5 + $0x7c] sm:$0xf]
    %v422 = vld [vmem:[%s5 + $0x80] sm:$0xf]
    %v423 = vld [vmem:[%s5 + $0x84] sm:$0xf]
    %v424 = vld [vmem:[%s5 + $0x88] sm:$0xf]
    %v425 = vld [vmem:[%s5 + $0x8c] sm:$0xf]
    %v426 = vld [vmem:[%s5 + $0x90] sm:$0xf]
    %v427 = vld [vmem:[%s5 + $0x94] sm:$0xf]
    %v428 = vld [vmem:[%s5 + $0x98] sm:$0xf]
    %v429 = vld [vmem:[%s5 + $0x9c] sm:$0xf]
    %v430 = vld [vmem:[%s5 + $0xa0] sm:$0xf]
    %v431 = vld [vmem:[%s5 + $0xa4] sm:$0xf]
    %v432 = vld [vmem:[%s5 + $0xa8] sm:$0xf]
    %v433 = vld [vmem:[%s5 + $0xac] sm:$0xf]
    %v434 = vld [vmem:[%s5 + $0xb0] sm:$0xf]
    %v435 = vld [vmem:[%s5 + $0xb4] sm:$0xf]
    %v436 = vld [vmem:[%s5 + $0xb8] sm:$0xf]
    %v437 = vld [vmem:[%s5 + $0xbc] sm:$0xf]
    %v438 = vld [vmem:[%s5 + $0xc0] sm:$0xf]
    %v439 = vld [vmem:[%s5 + $0xc4] sm:$0xf]
    %v440 = vld [vmem:[%s5 + $0xc8] sm:$0xf]
    %v441 = vld [vmem:[%s5 + $0xcc] sm:$0xf]
    %v442 = vld [vmem:[%s5 + $0xd0] sm:$0xf]
    %v443 = vld [vmem:[%s5 + $0xd4] sm:$0xf]
    %v444 = vld [vmem:[%s5 + $0xd8] sm:$0xf]
    %v445 = vld [vmem:[%s5 + $0xdc] sm:$0xf]
    %v446 = vld [vmem:[%s5 + $0xe0] sm:$0xf]
    %v447 = vld [vmem:[%s5 + $0xe4] sm:$0xf]
    %v448 = vld [vmem:[%s5 + $0xe8] sm:$0xf]
    %v449 = vld [vmem:[%s5 + $0xec] sm:$0xf]
    %v450 = vld [vmem:[%s5 + $0xf0] sm:$0xf]
    %v451 = vld [vmem:[%s5 + $0xf4] sm:$0xf]
    %v452 = vld [vmem:[%s5 + $0xf8] sm:$0xf]
    %v453 = vld [vmem:[%s5 + $0xfc] sm:$0xf]
    %v454 = vld [vmem:[%s5 + $0x100] sm:$0xf]
    %v455 = vld [vmem:[%s5 + $0x104] sm:$0xf]
    %v456 = vld [vmem:[%s5 + $0x108] sm:$0xf]
    %v457 = vld [vmem:[%s5 + $0x10c] sm:$0xf]
    %v458 = vld [vmem:[%s5 + $0x110] sm:$0xf]
    %v459 = vld [vmem:[%s5 + $0x114] sm:$0xf]
    %v460 = vld [vmem:[%s5 + $0x118] sm:$0xf]
    %v461 = vld [vmem:[%s5 + $0x11c] sm:$0xf]
    %v462 = vld [vmem:[%s5 + $0x120] sm:$0xf]
    %v463 = vld [vmem:[%s5 + $0x124] sm:$0xf]
    %v464 = vld [vmem:[%s5 + $0x128] sm:$0xf]
    %v465 = vld [vmem:[%s5 + $0x12c] sm:$0xf]
    %v466 = vld [vmem:[%s5 + $0x130] sm:$0xf]
    %v467 = vld [vmem:[%s5 + $0x134] sm:$0xf]
    %v468 = vld [vmem:[%s5 + $0x138] sm:$0xf]
    %v469 = vld [vmem:[%s5 + $0x13c] sm:$0xf]
    %v470 = vld [vmem:[%s5 + $0x140] sm:$0xf]
    %v471 = vld [vmem:[%s5 + $0x144] sm:$0xf]
    %v472 = vld [vmem:[%s5 + $0x148] sm:$0xf]
    %v473 = vld [vmem:[%s5 + $0x14c] sm:$0xf]
    %v474 = vld [vmem:[%s5 + $0x150] sm:$0xf]
    %v475 = vld [vmem:[%s5 + $0x154] sm:$0xf]
    %v476 = vld [vmem:[%s5 + $0x158] sm:$0xf]
    %v477 = vld [vmem:[%s5 + $0x15c] sm:$0xf]
    %v478 = vld [vmem:[%s5 + $0x160] sm:$0xf]
    %v479 = vld [vmem:[%s5 + $0x164] sm:$0xf]
    %v480 = vld [vmem:[%s5 + $0x168] sm:$0xf]
    %v481 = vld [vmem:[%s5 + $0x16c] sm:$0xf]
    %v482 = vld [vmem:[%s5 + $0x170] sm:$0xf]
    %v483 = vld [vmem:[%s5 + $0x174] sm:$0xf]
    %v484 = vld [vmem:[%s5 + $0x178] sm:$0xf]
    %v485 = vld [vmem:[%s5 + $0x17c] sm:$0xf]
    %v486 = vld [vmem:[%s6] sm:$0x1]
    %v488 = vlaneseq
    %v489 = vshrl.u32 %v488, 7
    %v490 = vsub.s32 0, %v489
    %v491 = vrot.slane %v486, %v490
    %v589 = vunpack.c.l.b16 %v390
    %v590 = vunpack.c.l.b16 %v391
    %v591 = vunpack.c.l.b16 %v392
    %v592 = vunpack.c.l.b16 %v393
    %v593 = vunpack.c.l.b16 %v394
    %v594 = vunpack.c.l.b16 %v395
    %v595 = vunpack.c.l.b16 %v396
    %v596 = vunpack.c.l.b16 %v397
    %v597 = vunpack.c.l.b16 %v398
    %v598 = vunpack.c.l.b16 %v399
    %v599 = vunpack.c.l.b16 %v400
    %v600 = vunpack.c.l.b16 %v401
    %v601 = vunpack.c.l.b16 %v402
    %v602 = vunpack.c.l.b16 %v403
    %v603 = vunpack.c.l.b16 %v404
    %v604 = vunpack.c.l.b16 %v405
    %v605 = vunpack.c.l.b16 %v406
    %v606 = vunpack.c.l.b16 %v407
    %v607 = vunpack.c.l.b16 %v408
    %v608 = vunpack.c.l.b16 %v409
    %v609 = vunpack.c.l.b16 %v410
    %v610 = vunpack.c.l.b16 %v411
    %v611 = vunpack.c.l.b16 %v412
    %v612 = vunpack.c.l.b16 %v413
    %v613 = vunpack.c.l.b16 %v414
    %v614 = vunpack.c.l.b16 %v415
    %v615 = vunpack.c.l.b16 %v416
    %v616 = vunpack.c.l.b16 %v417
    %v617 = vunpack.c.l.b16 %v418
    %v618 = vunpack.c.l.b16 %v419
    %v619 = vunpack.c.l.b16 %v420
    %v620 = vunpack.c.l.b16 %v421
    %v621 = vunpack.c.l.b16 %v422
    %v622 = vunpack.c.l.b16 %v423
    %v623 = vunpack.c.l.b16 %v424
    %v624 = vunpack.c.l.b16 %v425
    %v625 = vunpack.c.l.b16 %v426
    %v626 = vunpack.c.l.b16 %v427
    %v627 = vunpack.c.l.b16 %v428
    %v628 = vunpack.c.l.b16 %v429
    %v629 = vunpack.c.l.b16 %v430
    %v630 = vunpack.c.l.b16 %v431
    %v631 = vunpack.c.l.b16 %v432
    %v632 = vunpack.c.l.b16 %v433
    %v633 = vunpack.c.l.b16 %v434
    %v634 = vunpack.c.l.b16 %v435
    %v635 = vunpack.c.l.b16 %v436
    %v636 = vunpack.c.l.b16 %v437
    %v637 = vunpack.c.l.b16 %v438
    %v638 = vunpack.c.l.b16 %v439
    %v639 = vunpack.c.l.b16 %v440
    %v640 = vunpack.c.l.b16 %v441
    %v641 = vunpack.c.l.b16 %v442
    %v642 = vunpack.c.l.b16 %v443
    %v643 = vunpack.c.l.b16 %v444
    %v644 = vunpack.c.l.b16 %v445
    %v645 = vunpack.c.l.b16 %v446
    %v646 = vunpack.c.l.b16 %v447
    %v647 = vunpack.c.l.b16 %v448
    %v648 = vunpack.c.l.b16 %v449
    %v649 = vunpack.c.l.b16 %v450
    %v650 = vunpack.c.l.b16 %v451
    %v651 = vunpack.c.l.b16 %v452
    %v652 = vunpack.c.l.b16 %v453
    %v653 = vunpack.c.l.b16 %v454
    %v654 = vunpack.c.l.b16 %v455
    %v655 = vunpack.c.l.b16 %v456
    %v656 = vunpack.c.l.b16 %v457
    %v657 = vunpack.c.l.b16 %v458
    %v658 = vunpack.c.l.b16 %v459
    %v659 = vunpack.c.l.b16 %v460
    %v660 = vunpack.c.l.b16 %v461
    %v661 = vunpack.c.l.b16 %v462
    %v662 = vunpack.c.l.b16 %v463
    %v663 = vunpack.c.l.b16 %v464
    %v664 = vunpack.c.l.b16 %v465
    %v665 = vunpack.c.l.b16 %v466
    %v666 = vunpack.c.l.b16 %v467
    %v667 = vunpack.c.l.b16 %v468
    %v668 = vunpack.c.l.b16 %v469
    %v669 = vunpack.c.l.b16 %v470
    %v670 = vunpack.c.l.b16 %v471
    %v671 = vunpack.c.l.b16 %v472
    %v672 = vunpack.c.l.b16 %v473
    %v673 = vunpack.c.l.b16 %v474
    %v674 = vunpack.c.l.b16 %v475
    %v675 = vunpack.c.l.b16 %v476
    %v676 = vunpack.c.l.b16 %v477
    %v677 = vunpack.c.l.b16 %v478
    %v678 = vunpack.c.l.b16 %v479
    %v679 = vunpack.c.l.b16 %v480
    %v680 = vunpack.c.l.b16 %v481
    %v681 = vunpack.c.l.b16 %v482
    %v682 = vunpack.c.l.b16 %v483
    %v683 = vunpack.c.l.b16 %v484
    %v684 = vunpack.c.l.b16 %v485
    %v685 = vpack.c.b16 %v590, %v589
    %v686 = vpack.c.b16 %v592, %v591
    %v687 = vpack.c.b16 %v594, %v593
    %v688 = vpack.c.b16 %v596, %v595
    %v689 = vpack.c.b16 %v598, %v597
    %v690 = vpack.c.b16 %v600, %v599
    %v691 = vpack.c.b16 %v602, %v601
    %v692 = vpack.c.b16 %v604, %v603
    %v693 = vpack.c.b16 %v606, %v605
    %v694 = vpack.c.b16 %v608, %v607
    %v695 = vpack.c.b16 %v610, %v609
    %v696 = vpack.c.b16 %v612, %v611
    %v697 = vpack.c.b16 %v614, %v613
    %v698 = vpack.c.b16 %v616, %v615
    %v699 = vpack.c.b16 %v618, %v617
    %v700 = vpack.c.b16 %v620, %v619
    %v701 = vpack.c.b16 %v622, %v621
    %v702 = vpack.c.b16 %v624, %v623
    %v703 = vpack.c.b16 %v626, %v625
    %v704 = vpack.c.b16 %v628, %v627
    %v705 = vpack.c.b16 %v630, %v629
    %v706 = vpack.c.b16 %v632, %v631
    %v707 = vpack.c.b16 %v634, %v633
    %v708 = vpack.c.b16 %v636, %v635
    %v709 = vpack.c.b16 %v638, %v637
    %v710 = vpack.c.b16 %v640, %v639
    %v711 = vpack.c.b16 %v642, %v641
    %v712 = vpack.c.b16 %v644, %v643
    %v713 = vpack.c.b16 %v646, %v645
    %v714 = vpack.c.b16 %v648, %v647
    %v715 = vpack.c.b16 %v650, %v649
    %v716 = vpack.c.b16 %v652, %v651
    %v717 = vpack.c.b16 %v654, %v653
    %v718 = vpack.c.b16 %v656, %v655
    %v719 = vpack.c.b16 %v658, %v657
    %v720 = vpack.c.b16 %v660, %v659
    %v721 = vpack.c.b16 %v662, %v661
    %v722 = vpack.c.b16 %v664, %v663
    %v723 = vpack.c.b16 %v666, %v665
    %v724 = vpack.c.b16 %v668, %v667
    %v725 = vpack.c.b16 %v670, %v669
    %v726 = vpack.c.b16 %v672, %v671
    %v727 = vpack.c.b16 %v674, %v673
    %v728 = vpack.c.b16 %v676, %v675
    %v729 = vpack.c.b16 %v678, %v677
    %v730 = vpack.c.b16 %v680, %v679
    %v731 = vpack.c.b16 %v682, %v681
    %v732 = vpack.c.b16 %v684, %v683
    %781 = vmatprep.subr.bf16.mxu0 0
    %782 = vmatpush1.bf16.msra.mxu0 %v685
    %783 = vmatprep.subr.bf16.mxu0 0
    %784 = vmatpush1.bf16.msra.mxu0 %v686
    %785 = vmatprep.subr.bf16.mxu0 0
    %786 = vmatpush1.bf16.msra.mxu0 %v687
    %787 = vmatprep.subr.bf16.mxu0 0
    %788 = vmatpush1.bf16.msra.mxu0 %v688
    %789 = vmatprep.subr.bf16.mxu0 0
    %790 = vmatpush1.bf16.msra.mxu0 %v689
    %791 = vmatprep.subr.bf16.mxu0 0
    %792 = vmatpush1.bf16.msra.mxu0 %v690
    %793 = vmatprep.subr.bf16.mxu0 0
    %794 = vmatpush1.bf16.msra.mxu0 %v691
    %795 = vmatprep.subr.bf16.mxu0 0
    %796 = vmatpush1.bf16.msra.mxu0 %v692
    %797 = vmatprep.subr.bf16.mxu0 0
    %798 = vmatpush1.bf16.msra.mxu0 %v693
    %799 = vmatprep.subr.bf16.mxu0 0
    %800 = vmatpush1.bf16.msra.mxu0 %v694
    %801 = vmatprep.subr.bf16.mxu0 0
    %802 = vmatpush1.bf16.msra.mxu0 %v695
    %803 = vmatprep.subr.bf16.mxu0 0
    %804 = vmatpush1.bf16.msra.mxu0 %v696
    %805 = vmatprep.subr.bf16.mxu0 0
    %806 = vmatpush1.bf16.msra.mxu0 %v697
    %807 = vmatprep.subr.bf16.mxu0 0
    %808 = vmatpush1.bf16.msra.mxu0 %v698
    %809 = vmatprep.subr.bf16.mxu0 0
    %810 = vmatpush1.bf16.msra.mxu0 %v699
    %811 = vmatprep.subr.bf16.mxu0 0
    %812 = vmatpush1.bf16.msra.mxu0 %v700
    %813 = vmatprep.mubr.bf16.mxu0 %v385
    %814 = vmatmul.mubr.bf16.gmra.mrb[0].mxu0 %v384
    %v815 = vpop.f32.mrb[0].mxu0
    %v816 = vadd.f32 %v491, %v815
    %v817 = vpop.f32.mrb[0].mxu0
    %v818 = vpop.f32.mrb[0].mxu0
    %v819 = vpop.f32.mrb[0].mxu0
    %820 = vdwg.mxu0
    %821 = vmatprep.subr.bf16.mxu0 0
    %822 = vmatpush1.bf16.msra.mxu0 %v701
    %823 = vmatprep.subr.bf16.mxu0 0
    %824 = vmatpush1.bf16.msra.mxu0 %v702
    %825 = vmatprep.subr.bf16.mxu0 0
    %826 = vmatpush1.bf16.msra.mxu0 %v703
    %827 = vmatprep.subr.bf16.mxu0 0
    %828 = vmatpush1.bf16.msra.mxu0 %v704
    %829 = vmatprep.subr.bf16.mxu0 0
    %830 = vmatpush1.bf16.msra.mxu0 %v705
    %831 = vmatprep.subr.bf16.mxu0 0
    %832 = vmatpush1.bf16.msra.mxu0 %v706
    %833 = vmatprep.subr.bf16.mxu0 0
    %834 = vmatpush1.bf16.msra.mxu0 %v707
    %835 = vmatprep.subr.bf16.mxu0 0
    %836 = vmatpush1.bf16.msra.mxu0 %v708
    %837 = vmatprep.subr.bf16.mxu0 0
    %838 = vmatpush1.bf16.msra.mxu0 %v709
    %839 = vmatprep.subr.bf16.mxu0 0
    %840 = vmatpush1.bf16.msra.mxu0 %v710
    %841 = vmatprep.subr.bf16.mxu0 0
    %842 = vmatpush1.bf16.msra.mxu0 %v711
    %843 = vmatprep.subr.bf16.mxu0 0
    %844 = vmatpush1.bf16.msra.mxu0 %v712
    %845 = vmatprep.subr.bf16.mxu0 0
    %846 = vmatpush1.bf16.msra.mxu0 %v713
    %847 = vmatprep.subr.bf16.mxu0 0
    %848 = vmatpush1.bf16.msra.mxu0 %v714
    %849 = vmatprep.subr.bf16.mxu0 0
    %850 = vmatpush1.bf16.msra.mxu0 %v715
    %851 = vmatprep.subr.bf16.mxu0 0
    %852 = vmatpush1.bf16.msra.mxu0 %v716
    %853 = vmatprep.mubr.bf16.mxu0 %v387
    %854 = vmatmul.mubr.bf16.gmra.mrb[0].mxu0 %v386
    %v855 = vpop.f32.mrb[0].mxu0
    %v856 = vadd.f32 %v816, %v855
    %v857 = vpop.f32.mrb[0].mxu0
    %v858 = vpop.f32.mrb[0].mxu0
    %v859 = vpop.f32.mrb[0].mxu0
    %860 = vdwg.mxu0
    %861 = vmatprep.subr.bf16.mxu0 0
    %862 = vmatpush1.bf16.msra.mxu0 %v717
    %863 = vmatprep.subr.bf16.mxu0 0
    %864 = vmatpush1.bf16.msra.mxu0 %v718
    %865 = vmatprep.subr.bf16.mxu0 0
    %866 = vmatpush1.bf16.msra.mxu0 %v719
    %867 = vmatprep.subr.bf16.mxu0 0
    %868 = vmatpush1.bf16.msra.mxu0 %v720
    %869 = vmatprep.subr.bf16.mxu0 0
    %870 = vmatpush1.bf16.msra.mxu0 %v721
    %871 = vmatprep.subr.bf16.mxu0 0
    %872 = vmatpush1.bf16.msra.mxu0 %v722
    %873 = vmatprep.subr.bf16.mxu0 0
    %874 = vmatpush1.bf16.msra.mxu0 %v723
    %875 = vmatprep.subr.bf16.mxu0 0
    %876 = vmatpush1.bf16.msra.mxu0 %v724
    %877 = vmatprep.subr.bf16.mxu0 0
    %878 = vmatpush1.bf16.msra.mxu0 %v725
    %879 = vmatprep.subr.bf16.mxu0 0
    %880 = vmatpush1.bf16.msra.mxu0 %v726
    %881 = vmatprep.subr.bf16.mxu0 0
    %882 = vmatpush1.bf16.msra.mxu0 %v727
    %883 = vmatprep.subr.bf16.mxu0 0
    %884 = vmatpush1.bf16.msra.mxu0 %v728
    %885 = vmatprep.subr.bf16.mxu0 0
    %886 = vmatpush1.bf16.msra.mxu0 %v729
    %887 = vmatprep.subr.bf16.mxu0 0
    %888 = vmatpush1.bf16.msra.mxu0 %v730
    %889 = vmatprep.subr.bf16.mxu0 0
    %890 = vmatpush1.bf16.msra.mxu0 %v731
    %891 = vmatprep.subr.bf16.mxu0 0
    %892 = vmatpush1.bf16.msra.mxu0 %v732
    %893 = vmatprep.mubr.bf16.mxu0 %v389
    %894 = vmatmul.mubr.bf16.gmra.mrb[0].mxu0 %v388
    %v895 = vpop.f32.mrb[0].mxu0
    %v896 = vadd.f32 %v856, %v895
    %v897 = vpop.f32.mrb[0].mxu0
    %v898 = vpop.f32.mrb[0].mxu0
    %v899 = vpop.f32.mrb[0].mxu0
    %900 = vdwg.mxu0
    %vm901 = vcmask 17408
    %902 = vst.msk [vmem:[%s11] sm:$0x3] %vm901, %v896
    %v903 = vld [vmem:[%s7] sm:$0xf]
    %v904 = vld [vmem:[%s7 + $0x4] sm:$0xf]
    %v905 = vld [vmem:[%s7 + $0x8] sm:$0xf]
    %v906 = vld [vmem:[%s7 + $0xc] sm:$0xf]
    %v907 = vld [vmem:[%s7 + $0x10] sm:$0xf]
    %v908 = vld [vmem:[%s7 + $0x14] sm:$0xf]
    %v909 = vld [vmem:[%s7 + $0x18] sm:$0xf]
    %v910 = vld [vmem:[%s7 + $0x1c] sm:$0xf]
    %v911 = vld [vmem:[%s8] sm:$0x1]
    %v913 = vlaneseq
    %v914 = vshrl.u32 %v913, 7
    %v915 = vsub.s32 0, %v914
    %v916 = vrot.slane %v911, %v915
    %v926 = vunpack.c.l.b16 %v903
    %v927 = vunpack.c.l.b16 %v904
    %v928 = vunpack.c.l.b16 %v905
    %v929 = vunpack.c.l.b16 %v906
    %v930 = vunpack.c.l.b16 %v907
    %v931 = vunpack.c.l.b16 %v908
    %v932 = vunpack.c.l.b16 %v909
    %v933 = vunpack.c.l.b16 %v910
    %v934 = vpack.c.b16 %v927, %v926
    %v935 = vpack.c.b16 %v929, %v928
    %v936 = vpack.c.b16 %v931, %v930
    %v937 = vpack.c.b16 %v933, %v932
    %942 = vmatprep.subr.bf16.mxu0 0
    %943 = vmatpush1.bf16.msra.mxu0 %v934
    %944 = vmatprep.subr.bf16.mxu0 0
    %945 = vmatpush1.bf16.msra.mxu0 %v935
    %946 = vmatprep.subr.bf16.mxu0 0
    %947 = vmatpush1.bf16.msra.mxu0 %v936
    %948 = vmatprep.subr.bf16.mxu0 0
    %949 = vmatpush1.bf16.msra.mxu0 %v937
    %950 = vmatprep.subr.bf16.mxu0 0
    %951 = vmatpush1.bf16.msra.mxu0 0
    %952 = vmatprep.subr.bf16.mxu0 0
    %953 = vmatpush1.bf16.msra.mxu0 0
    %954 = vmatprep.subr.bf16.mxu0 0
    %955 = vmatpush1.bf16.msra.mxu0 0
    %956 = vmatprep.subr.bf16.mxu0 0
    %957 = vmatpush1.bf16.msra.mxu0 0
    %958 = vmatprep.subr.bf16.mxu0 0
    %959 = vmatpush1.bf16.msra.mxu0 0
    %960 = vmatprep.subr.bf16.mxu0 0
    %961 = vmatpush1.bf16.msra.mxu0 0
    %962 = vmatprep.subr.bf16.mxu0 0
    %963 = vmatpush1.bf16.msra.mxu0 0
    %964 = vmatprep.subr.bf16.mxu0 0
    %965 = vmatpush1.bf16.msra.mxu0 0
    %966 = vmatprep.subr.bf16.mxu0 0
    %967 = vmatpush1.bf16.msra.mxu0 0
    %968 = vmatprep.subr.bf16.mxu0 0
    %969 = vmatpush1.bf16.msra.mxu0 0
    %970 = vmatprep.subr.bf16.mxu0 0
    %971 = vmatpush1.bf16.msra.mxu0 0
    %972 = vmatprep.subr.bf16.mxu0 0
    %973 = vmatpush1.bf16.msra.mxu0 0
    %974 = vmatprep.mubr.bf16.mxu0 0
    %975 = vmatmul.mubr.bf16.gmra.mrb[0].mxu0 %v253
    %v976 = vpop.f32.mrb[0].mxu0
    %v977 = vadd.f32 %v916, %v976
    %v978 = vpop.f32.mrb[0].mxu0
    %v979 = vpop.f32.mrb[0].mxu0
    %v980 = vpop.f32.mrb[0].mxu0
    %981 = vdwg.mxu0
    %v982 = vmax.f32 %v977, 0.0
    %v983 = vpack.c.bf16 %v982, %v982
    %v984 = vld [vmem:[%s9] sm:$0xf]
    %v985 = vld [vmem:[%s9 + $0x4] sm:$0xf]
    %v986 = vld [vmem:[%s9 + $0x8] sm:$0xf]
    %v987 = vld [vmem:[%s9 + $0xc] sm:$0xf]
    %v988 = vld [vmem:[%s9 + $0x10] sm:$0xf]
    %v989 = vld [vmem:[%s9 + $0x14] sm:$0xf]
    %v990 = vld [vmem:[%s9 + $0x18] sm:$0xf]
    %v991 = vld [vmem:[%s9 + $0x1c] sm:$0xf]
    %v992 = vld [vmem:[%s9 + $0x20] sm:$0xf]
    %v993 = vld [vmem:[%s9 + $0x24] sm:$0xf]
    %v994 = vld [vmem:[%s9 + $0x28] sm:$0xf]
    %v995 = vld [vmem:[%s9 + $0x2c] sm:$0xf]
    %v996 = vld [vmem:[%s9 + $0x30] sm:$0xf]
    %v997 = vld [vmem:[%s9 + $0x34] sm:$0xf]
    %v998 = vld [vmem:[%s9 + $0x38] sm:$0xf]
    %v999 = vld [vmem:[%s9 + $0x3c] sm:$0xf]
    %v1000 = vld [vmem:[%s10] sm:$0x1]
    %v1002 = vlaneseq
    %v1003 = vshrl.u32 %v1002, 7
    %v1004 = vsub.s32 0, %v1003
    %v1005 = vrot.slane %v1000, %v1004
    %v1023 = vunpack.c.l.b16 %v984
    %v1024 = vunpack.c.l.b16 %v985
    %v1025 = vunpack.c.l.b16 %v986
    %v1026 = vunpack.c.l.b16 %v987
    %v1027 = vunpack.c.l.b16 %v988
    %v1028 = vunpack.c.l.b16 %v989
    %v1029 = vunpack.c.l.b16 %v990
    %v1030 = vunpack.c.l.b16 %v991
    %v1031 = vunpack.c.l.b16 %v992
    %v1032 = vunpack.c.l.b16 %v993
    %v1033 = vunpack.c.l.b16 %v994
    %v1034 = vunpack.c.l.b16 %v995
    %v1035 = vunpack.c.l.b16 %v996
    %v1036 = vunpack.c.l.b16 %v997
    %v1037 = vunpack.c.l.b16 %v998
    %v1038 = vunpack.c.l.b16 %v999
    %v1039 = vpack.c.b16 %v1024, %v1023
    %v1040 = vpack.c.b16 %v1026, %v1025
    %v1041 = vpack.c.b16 %v1028, %v1027
    %v1042 = vpack.c.b16 %v1030, %v1029
    %v1043 = vpack.c.b16 %v1032, %v1031
    %v1044 = vpack.c.b16 %v1034, %v1033
    %v1045 = vpack.c.b16 %v1036, %v1035
    %v1046 = vpack.c.b16 %v1038, %v1037
    %1055 = vmatprep.subr.bf16.mxu0 0
    %1056 = vmatpush1.bf16.msra.mxu0 %v1039
    %1057 = vmatprep.subr.bf16.mxu0 0
    %1058 = vmatpush1.bf16.msra.mxu0 %v1040
    %1059 = vmatprep.subr.bf16.mxu0 0
    %1060 = vmatpush1.bf16.msra.mxu0 %v1041
    %1061 = vmatprep.subr.bf16.mxu0 0
    %1062 = vmatpush1.bf16.msra.mxu0 %v1042
    %1063 = vmatprep.subr.bf16.mxu0 0
    %1064 = vmatpush1.bf16.msra.mxu0 %v1043
    %1065 = vmatprep.subr.bf16.mxu0 0
    %1066 = vmatpush1.bf16.msra.mxu0 %v1044
    %1067 = vmatprep.subr.bf16.mxu0 0
    %1068 = vmatpush1.bf16.msra.mxu0 %v1045
    %1069 = vmatprep.subr.bf16.mxu0 0
    %1070 = vmatpush1.bf16.msra.mxu0 %v1046
    %1071 = vmatprep.subr.bf16.mxu0 0
    %1072 = vmatpush1.bf16.msra.mxu0 0
    %1073 = vmatprep.subr.bf16.mxu0 0
    %1074 = vmatpush1.bf16.msra.mxu0 0
    %1075 = vmatprep.subr.bf16.mxu0 0
    %1076 = vmatpush1.bf16.msra.mxu0 0
    %1077 = vmatprep.subr.bf16.mxu0 0
    %1078 = vmatpush1.bf16.msra.mxu0 0
    %1079 = vmatprep.subr.bf16.mxu0 0
    %1080 = vmatpush1.bf16.msra.mxu0 0
    %1081 = vmatprep.subr.bf16.mxu0 0
    %1082 = vmatpush1.bf16.msra.mxu0 0
    %1083 = vmatprep.subr.bf16.mxu0 0
    %1084 = vmatpush1.bf16.msra.mxu0 0
    %1085 = vmatprep.subr.bf16.mxu0 0
    %1086 = vmatpush1.bf16.msra.mxu0 0
    %1087 = vmatprep.mubr.bf16.mxu0 0
    %1088 = vmatmul.mubr.bf16.gmra.mrb[0].mxu0 %v983
    %v1089 = vpop.f32.mrb[0].mxu0
    %v1090 = vadd.f32 %v1005, %v1089
    %v1091 = vpop.f32.mrb[0].mxu0
    %v1092 = vpop.f32.mrb[0].mxu0
    %v1093 = vpop.f32.mrb[0].mxu0
    %1094 = vdwg.mxu0
    %v1095 = vsel %vm901, %v1090, -inf
    %1096 = vmax.xlane.f32.xlu0 %v1095
    %v1097 = vpop.xlane.xlu0 %1096
    %v1098 = vsub.f32 %v1090, %v1097
    %v1099 = vmul.f32 %v1098, 1.442695
    %v1100 = vpow.pop %v1099
    %v1101 = vsel %vm901, %v1100, 0.0
    %1102 = vadd.xlane.f32.xlu0 %v1101
    %v1103 = vpop.xlane.xlu0 %1102
    %v1104 = vrcp.pop %v1103
    %v1105 = vmul.f32 %v1100, %v1104
    %1106 = vst.msk [vmem:[#allocation2] sm:$0x3] %vm901, %v1105
    // Predicated region
    $region46: #{uni_multitask_forward.5} parent=1 // pred_check
      _
    $region47: #{uni_multitask_forward.5} parent=1 // pred_check_branch
      %1108 = sbr.rel (0) target = $region49
    $region48: #{uni_multitask_forward.5} parent=1 // pred_region
      _
    $region49: #{uni_multitask_forward.5} parent=1 // pred_fallthru
      _
    // Predicated region
    $region50: #{uni_multitask_forward.5} parent=1 // pred_check
      _
    $region51: #{uni_multitask_forward.5} parent=1 // pred_check_branch
      %1110 = sbr.rel (0) target = $region53
    $region52: #{uni_multitask_forward.5} parent=1 // pred_region
      %s1112 = ssub.s32 32, 32
      %1113 = vsyncadd [#allocation3], %s1112
      %s1115 = sshll.u32 [#allocation2], 4
      %s1116 = int_to_ptr.vmem [resolvable:$true] %s1115
      %1118 = dma.vmem_to_hbm [thread:$0]  %s1116, 32, %s12, [#allocation3]
    $region53: #{uni_multitask_forward.5} parent=1 // pred_fallthru
      _
    // Predicated region
    $region54: #{uni_multitask_forward.5} parent=1 // pred_check
      _
    $region55: #{uni_multitask_forward.5} parent=1 // pred_check_branch
      %1120 = sbr.rel (0) target = $region57
    $region56: #{uni_multitask_forward.5} parent=1 // pred_region
      _
    $region57: #{uni_multitask_forward.5} parent=1 // pred_fallthru
      _
    // Predicated region
    $region58: #{uni_multitask_forward.5} parent=1 // pred_check
      _
    $region59: #{uni_multitask_forward.5} parent=1 // pred_check_branch
      %1122 = sbr.rel (0) target = $region61
    $region60: #{uni_multitask_forward.5} parent=1 // pred_region
      %1123 = dma.done [#allocation3], 32
    $region61: #{uni_multitask_forward.5} parent=1 // pred_fallthru
      _
    %1124 = vsyncpa [#allocation3], 1

// kernel: uni_multitask_forward.4
$region0: #{uni_multitask_forward.4}
  #allocation0 [shape = 'u32[]', space=smem, size = 0x4, offset = 0x4, fixed_abs, tag = 'smem constant byte address 0x4 - core index']
  #allocation1 [shape = 'u32[144,128]{1,0:T(1,128)}', space=vmem, size = 0x12000, scoped, tag = 'internal scratch']
  #allocation2 [shape = 'f32[32,64]{1,0:T(8,128)}', space=vmem, size = 0x4000, scoped, tag = 'scratch operand']
  %s0 = inlined_call_operand.vmem [shape: f32[2,16,64], index: 0, kind: input, shape index: {}]
  %s1 = inlined_call_operand.vmem [shape: f32[1,16], index: 1, kind: input, shape index: {}]
  %s2 = inlined_call_operand.vmem [shape: f32[2,10,256], index: 2, kind: input, shape index: {}]
  %s3 = inlined_call_operand.vmem [shape: bf16[2,64,192], index: 3, kind: input, shape index: {}]
  %s4 = inlined_call_operand.vmem [shape: bf16[2,64,64], index: 4, kind: input, shape index: {}]
  %s5 = inlined_call_operand.vmem [shape: bf16[2,64,256], index: 5, kind: input, shape index: {}]
  %s6 = inlined_call_operand.vmem [shape: bf16[2,256,64], index: 6, kind: input, shape index: {}]
  %s7 = inlined_call_operand.vmem [shape: f32[2,8,64], index: 7, kind: output, shape index: {}]
  %s8 = sld [smem:[#allocation0]]
  $region69: #{uni_multitask_forward.4} parent=0
    _
  %s10 = ssub.s32 1, %s8
  %s11 = scalar_select 0, %s10, %s8
  loop: start=0, step=1, limit=4
  $region2: #{uni_multitask_forward.4} parent=0 // loop_pre_header
    _
  $region3: #{uni_multitask_forward.4} parent=0 // loop_header
    %s13 = sphi 0, %s17
    %p14 = scmp.ge.s32.totalorder %s13, 4
    %s21 = sphi 0, %s21
    %s23 = sphi 0, %s21
    %s24 = sphi 0, %s23
    %s38 = sphi 0, %s24
    %s42 = sphi 0, %s42
    %s44 = sphi 0, %s42
    %s45 = sphi 0, %s44
    %s59 = sphi 0, %s45
    %s65 = sphi 0, %s67
    %s68 = sphi 0, %s65
    %s69 = sphi 0, %s68
    %s85 = sphi 0, %s69
    %s91 = sphi 0, %s93
    %s94 = sphi 0, %s91
    %s95 = sphi 0, %s94
    %s111 = sphi 0, %s95
    %s117 = sphi 0, %s119
    %s120 = sphi 0, %s117
    %s121 = sphi 0, %s120
    %s137 = sphi 0, %s121
    %s143 = sphi 0, %s145
    %s146 = sphi 0, %s143
    %s147 = sphi 0, %s146
    %s163 = sphi 0, %s147
    %s169 = sphi 0, %s171
    %s172 = sphi 0, %s169
    %s173 = sphi 0, %s172
    %s189 = sphi 0, %s173
    %s193 = sphi 0, %s193
    %s195 = sphi 0, %s193
    %s196 = sphi 0, %s195
    %s210 = sphi 0, %s196
  $region4: #{uni_multitask_forward.4} parent=0 // loop_header_branch
    %16 = sbr.rel (%p14) target = $region8
  $region5: #{uni_multitask_forward.4} parent=0 // loop_body
    %s18 = ssub.s32 %s13, 1
    %s19 = ssub.s32 %s13, 2
    %s20 = sadd.s32 %s13, 1
    %s22 = sadd.s32 %s21, 1
    %p25 = scmp.eq.s32.totalorder %s13, 1
    %p26 = scmp.ne.s32.totalorder %s21, %s23
    %p27 = scmp.eq.s32.totalorder %s13, 0
    %p28 = por %p26, %p27
    %p29 = scmp.ne.s32.totalorder %s21, %s23
    %p30 = scmp.eq.s32.totalorder %s18, 1
    %p31 = por %p29, %p30
    %p32 = scmp.ne.s32.totalorder %s23, %s24
    %p33 = scmp.eq.s32.totalorder %s18, 0
    %p34 = por %p32, %p33
    %p35 = scmp.ne.s32.totalorder %s23, %s24
    %p36 = scmp.eq.s32.totalorder %s19, 1
    %p37 = por %p35, %p36
    %p39 = scmp.ne.s32.totalorder %s24, %s38
    %p40 = scmp.eq.s32.totalorder %s19, 0
    %p41 = por %p39, %p40
    %s43 = sadd.s32 %s42, 1
    %p46 = scmp.eq.s32.totalorder %s13, 1
    %p47 = scmp.ne.s32.totalorder %s42, %s44
    %p48 = scmp.eq.s32.totalorder %s13, 0
    %p49 = por %p47, %p48
    %p50 = scmp.ne.s32.totalorder %s42, %s44
    %p51 = scmp.eq.s32.totalorder %s18, 1
    %p52 = por %p50, %p51
    %p53 = scmp.ne.s32.totalorder %s44, %s45
    %p54 = scmp.eq.s32.totalorder %s18, 0
    %p55 = por %p53, %p54
    %p56 = scmp.ne.s32.totalorder %s44, %s45
    %p57 = scmp.eq.s32.totalorder %s19, 1
    %p58 = por %p56, %p57
    %p60 = scmp.ne.s32.totalorder %s45, %s59
    %p61 = scmp.eq.s32.totalorder %s19, 0
    %p62 = por %p60, %p61
    %s63 = ssub.s32 %s13, %s20
    %p64 = scmp.eq.s32.totalorder %s63, 0
    %s66 = sadd.s32 %s65, 1
    %s67 = scalar_select %p64, %s65, %s66
    %p70 = pneg %p64
    %p71 = scmp.eq.s32.totalorder %s13, 1
    %p72 = por %p70, %p71
    %p73 = scmp.ne.s32.totalorder %s65, %s68
    %p74 = scmp.eq.s32.totalorder %s13, 0
    %p75 = por %p73, %p74
    %p76 = scmp.ne.s32.totalorder %s65, %s68
    %p77 = scmp.eq.s32.totalorder %s18, 1
    %p78 = por %p76, %p77
    %p79 = scmp.ne.s32.totalorder %s68, %s69
    %p80 = scmp.eq.s32.totalorder %s18, 0
    %p81 = por %p79, %p80
    %p82 = scmp.ne.s32.totalorder %s68, %s69
    %p83 = scmp.eq.s32.totalorder %s19, 1
    %p84 = por %p82, %p83
    %p86 = scmp.ne.s32.totalorder %s69, %s85
    %p87 = scmp.eq.s32.totalorder %s19, 0
    %p88 = por %p86, %p87
    %s89 = ssub.s32 %s13, %s20
    %p90 = scmp.eq.s32.totalorder %s89, 0
    %s92 = sadd.s32 %s91, 1
    %s93 = scalar_select %p90, %s91, %s92
    %p96 = pneg %p90
    %p97 = scmp.eq.s32.totalorder %s13, 1
    %p98 = por %p96, %p97
    %p99 = scmp.ne.s32.totalorder %s91, %s94
    %p100 = scmp.eq.s32.totalorder %s13, 0
    %p101 = por %p99, %p100
    %p102 = scmp.ne.s32.totalorder %s91, %s94
    %p103 = scmp.eq.s32.totalorder %s18, 1
    %p104 = por %p102, %p103
    %p105 = scmp.ne.s32.totalorder %s94, %s95
    %p106 = scmp.eq.s32.totalorder %s18, 0
    %p107 = por %p105, %p106
    %p108 = scmp.ne.s32.totalorder %s94, %s95
    %p109 = scmp.eq.s32.totalorder %s19, 1
    %p110 = por %p108, %p109
    %p112 = scmp.ne.s32.totalorder %s95, %s111
    %p113 = scmp.eq.s32.totalorder %s19, 0
    %p114 = por %p112, %p113
    %s115 = ssub.s32 %s13, %s20
    %p116 = scmp.eq.s32.totalorder %s115, 0
    %s118 = sadd.s32 %s117, 1
    %s119 = scalar_select %p116, %s117, %s118
    %p122 = pneg %p116
    %p123 = scmp.eq.s32.totalorder %s13, 1
    %p124 = por %p122, %p123
    %p125 = scmp.ne.s32.totalorder %s117, %s120
    %p126 = scmp.eq.s32.totalorder %s13, 0
    %p127 = por %p125, %p126
    %p128 = scmp.ne.s32.totalorder %s117, %s120
    %p129 = scmp.eq.s32.totalorder %s18, 1
    %p130 = por %p128, %p129
    %p131 = scmp.ne.s32.totalorder %s120, %s121
    %p132 = scmp.eq.s32.totalorder %s18, 0
    %p133 = por %p131, %p132
    %p134 = scmp.ne.s32.totalorder %s120, %s121
    %p135 = scmp.eq.s32.totalorder %s19, 1
    %p136 = por %p134, %p135
    %p138 = scmp.ne.s32.totalorder %s121, %s137
    %p139 = scmp.eq.s32.totalorder %s19, 0
    %p140 = por %p138, %p139
    %s141 = ssub.s32 %s13, %s20
    %p142 = scmp.eq.s32.totalorder %s141, 0
    %s144 = sadd.s32 %s143, 1
    %s145 = scalar_select %p142, %s143, %s144
    %p148 = pneg %p142
    %p149 = scmp.eq.s32.totalorder %s13, 1
    %p150 = por %p148, %p149
    %p151 = scmp.ne.s32.totalorder %s143, %s146
    %p152 = scmp.eq.s32.totalorder %s13, 0
    %p153 = por %p151, %p152
    %p154 = scmp.ne.s32.totalorder %s143, %s146
    %p155 = scmp.eq.s32.totalorder %s18, 1
    %p156 = por %p154, %p155
    %p157 = scmp.ne.s32.totalorder %s146, %s147
    %p158 = scmp.eq.s32.totalorder %s18, 0
    %p159 = por %p157, %p158
    %p160 = scmp.ne.s32.totalorder %s146, %s147
    %p161 = scmp.eq.s32.totalorder %s19, 1
    %p162 = por %p160, %p161
    %p164 = scmp.ne.s32.totalorder %s147, %s163
    %p165 = scmp.eq.s32.totalorder %s19, 0
    %p166 = por %p164, %p165
    %s167 = ssub.s32 %s13, %s20
    %p168 = scmp.eq.s32.totalorder %s167, 0
    %s170 = sadd.s32 %s169, 1
    %s171 = scalar_select %p168, %s169, %s170
    %p174 = pneg %p168
    %p175 = scmp.eq.s32.totalorder %s13, 1
    %p176 = por %p174, %p175
    %p177 = scmp.ne.s32.totalorder %s169, %s172
    %p178 = scmp.eq.s32.totalorder %s13, 0
    %p179 = por %p177, %p178
    %p180 = scmp.ne.s32.totalorder %s169, %s172
    %p181 = scmp.eq.s32.totalorder %s18, 1
    %p182 = por %p180, %p181
    %p183 = scmp.ne.s32.totalorder %s172, %s173
    %p184 = scmp.eq.s32.totalorder %s18, 0
    %p185 = por %p183, %p184
    %p186 = scmp.ne.s32.totalorder %s172, %s173
    %p187 = scmp.eq.s32.totalorder %s19, 1
    %p188 = por %p186, %p187
    %p190 = scmp.ne.s32.totalorder %s173, %s189
    %p191 = scmp.eq.s32.totalorder %s19, 0
    %p192 = por %p190, %p191
    %s194 = sadd.s32 %s193, 1
    %p197 = scmp.eq.s32.totalorder %s13, 1
    %p198 = scmp.ne.s32.totalorder %s193, %s195
    %p199 = scmp.eq.s32.totalorder %s13, 0
    %p200 = por %p198, %p199
    %p201 = scmp.ne.s32.totalorder %s193, %s195
    %p202 = scmp.eq.s32.totalorder %s18, 1
    %p203 = por %p201, %p202
    %p204 = scmp.ne.s32.totalorder %s195, %s196
    %p205 = scmp.eq.s32.totalorder %s18, 0
    %p206 = por %p204, %p205
    %p207 = scmp.ne.s32.totalorder %s195, %s196
    %p208 = scmp.eq.s32.totalorder %s19, 1
    %p209 = por %p207, %p208
    %p211 = scmp.ne.s32.totalorder %s196, %s210
    %p212 = scmp.eq.s32.totalorder %s19, 0
    %p213 = por %p211, %p212
    %p214 = scmp.le.s32.totalorder 1, %s13
    %p215 = scmp.lt.s32.totalorder %s13, 3
    %p216 = pnand %p214, %p215
    %p217 = pneg %p216
    // Predicated region
    $region9: #{uni_multitask_forward.4} parent=5 // pred_check
      _
    $region10: #{uni_multitask_forward.4} parent=5 // pred_check_branch
      %219 = sbr.rel (%p216) target = $region12
    $region11: #{uni_multitask_forward.4} parent=5 // pred_region
      %s220 = ssub.s32 %s13, 1
      // Predicated region
      $region13: #{uni_multitask_forward.4} parent=11 // pred_check
        %p221 = pneg %p34
      $region14: #{uni_multitask_forward.4} parent=11 // pred_check_branch
        %223 = sbr.rel (%p221) target = $region16
      $region15: #{uni_multitask_forward.4} parent=11 // pred_region
        _
      $region16: #{uni_multitask_forward.4} parent=11 // pred_fallthru
        _
      // Predicated region
      $region17: #{uni_multitask_forward.4} parent=11 // pred_check
        %p224 = pneg %p55
      $region18: #{uni_multitask_forward.4} parent=11 // pred_check_branch
        %226 = sbr.rel (%p224) target = $region20
      $region19: #{uni_multitask_forward.4} parent=11 // pred_region
        _
      $region20: #{uni_multitask_forward.4} parent=11 // pred_fallthru
        _
    $region12: #{uni_multitask_forward.4} parent=5 // pred_fallthru
      _
    %p227 = scmp.lt.s32.totalorder %s13, 2
    // Predicated region
    $region21: #{uni_multitask_forward.4} parent=5 // pred_check
      %p228 = pneg %p227
    $region22: #{uni_multitask_forward.4} parent=5 // pred_check_branch
      %230 = sbr.rel (%p228) target = $region24
    $region23: #{uni_multitask_forward.4} parent=5 // pred_region
      // Predicated region
      $region25: #{uni_multitask_forward.4} parent=23 // pred_check
        %p231 = pneg %p75
      $region26: #{uni_multitask_forward.4} parent=23 // pred_check_branch
        %233 = sbr.rel (%p231) target = $region28
      $region27: #{uni_multitask_forward.4} parent=23 // pred_region
        %p234 = scmp.lt.s32.totalorder %s13, 1
        %s235 = scalar_select %p234, %s13, 1
        %s236 = smul.addr %s235, 4
        %s237 = smul.addr %s236, 8
        %s238 = scalar_lea.vmem %s2, %s237
      $region28: #{uni_multitask_forward.4} parent=23 // pred_fallthru
        _
      // Predicated region
      $region29: #{uni_multitask_forward.4} parent=23 // pred_check
        %p239 = pneg %p101
      $region30: #{uni_multitask_forward.4} parent=23 // pred_check_branch
        %241 = sbr.rel (%p239) target = $region32
      $region31: #{uni_multitask_forward.4} parent=23 // pred_region
        %p242 = scmp.lt.s32.totalorder %s13, 1
        %s243 = scalar_select %p242, %s13, 1
        %s244 = smul.addr %s243, 16
        %s245 = smul.addr %s244, 4
        %s246 = scalar_lea.vmem %s3, %s245
      $region32: #{uni_multitask_forward.4} parent=23 // pred_fallthru
        _
      // Predicated region
      $region33: #{uni_multitask_forward.4} parent=23 // pred_check
        %p247 = pneg %p127
      $region34: #{uni_multitask_forward.4} parent=23 // pred_check_branch
        %249 = sbr.rel (%p247) target = $region36
      $region35: #{uni_multitask_forward.4} parent=23 // pred_region
        %p250 = scmp.lt.s32.totalorder %s13, 1
        %s251 = scalar_select %p250, %s13, 1
        %s252 = smul.addr %s251, 8
        %s253 = smul.addr %s252, 4
        %s254 = scalar_lea.vmem %s4, %s253
      $region36: #{uni_multitask_forward.4} parent=23 // pred_fallthru
        _
      // Predicated region
      $region37: #{uni_multitask_forward.4} parent=23 // pred_check
        %p255 = pneg %p153
      $region38: #{uni_multitask_forward.4} parent=23 // pred_check_branch
        %257 = sbr.rel (%p255) target = $region40
      $region39: #{uni_multitask_forward.4} parent=23 // pred_region
        %p258 = scmp.lt.s32.totalorder %s13, 1
        %s259 = scalar_select %p258, %s13, 1
        %s260 = smul.addr %s259, 16
        %s261 = smul.addr %s260, 4
        %s262 = scalar_lea.vmem %s5, %s261
      $region40: #{uni_multitask_forward.4} parent=23 // pred_fallthru
        _
      // Predicated region
      $region41: #{uni_multitask_forward.4} parent=23 // pred_check
        %p263 = pneg %p179
      $region42: #{uni_multitask_forward.4} parent=23 // pred_check_branch
        %265 = sbr.rel (%p263) target = $region44
      $region43: #{uni_multitask_forward.4} parent=23 // pred_region
        %p266 = scmp.lt.s32.totalorder %s13, 1
        %s267 = scalar_select %p266, %s13, 1
        %s268 = smul.addr %s267, 32
        %s269 = smul.addr %s268, 4
        %s270 = scalar_lea.vmem %s6, %s269
      $region44: #{uni_multitask_forward.4} parent=23 // pred_fallthru
        _
    $region24: #{uni_multitask_forward.4} parent=5 // pred_fallthru
      _
    %p271 = scmp.le.s32.totalorder 1, %s13
    %p272 = scmp.lt.s32.totalorder %s13, 3
    %p273 = pnand %p271, %p272
    %p274 = pneg %p273
    // Predicated region
    $region45: #{uni_multitask_forward.4} parent=5 // pred_check
      _
    $region46: #{uni_multitask_forward.4} parent=5 // pred_check_branch
      %276 = sbr.rel (%p273) target = $region48
    $region47: #{uni_multitask_forward.4} parent=5 // pred_region
      %s277 = ssub.s32 %s13, 1
      %p278 = pneg %p34
      %p279 = pneg %p31
      %p280 = pneg %p55
      %p281 = pneg %p52
      %p282 = scmp.lt.s32.totalorder %s18, 1
      %s283 = scalar_select %p282, %s18, 1
      %s284 = smul.addr %s283, 4
      %s285 = smul.addr %s284, 8
      %s286 = scalar_lea.vmem %s2, %s285
      %p287 = pneg %p81
      %p288 = pneg %p78
      %p289 = scmp.lt.s32.totalorder %s18, 1
      %s290 = scalar_select %p289, %s18, 1
      %s291 = smul.addr %s290, 16
      %s292 = smul.addr %s291, 4
      %s293 = scalar_lea.vmem %s3, %s292
      %p294 = pneg %p107
      %p295 = pneg %p104
      %p296 = scmp.lt.s32.totalorder %s18, 1
      %s297 = scalar_select %p296, %s18, 1
      %s298 = smul.addr %s297, 8
      %s299 = smul.addr %s298, 4
      %s300 = scalar_lea.vmem %s4, %s299
      %p301 = pneg %p133
      %p302 = pneg %p130
      %p303 = scmp.lt.s32.totalorder %s18, 1
      %s304 = scalar_select %p303, %s18, 1
      %s305 = smul.addr %s304, 16
      %s306 = smul.addr %s305, 4
      %s307 = scalar_lea.vmem %s5, %s306
      %p308 = pneg %p159
      %p309 = pneg %p156
      %p310 = scmp.lt.s32.totalorder %s18, 1
      %s311 = scalar_select %p310, %s18, 1
      %s312 = smul.addr %s311, 32
      %s313 = smul.addr %s312, 4
      %s314 = scalar_lea.vmem %s6, %s313
      %p315 = pneg %p185
      %p316 = pneg %p182
      %p317 = pneg %p206
      %p318 = pneg %p203
      %p319 = scmp.lt.s32.totalorder %s18, 1
      %s320 = scalar_select %p319, %s18, 1
      %s321 = smul.addr %s320, 4
      %s322 = smul.addr %s321, 8
      %s323 = scalar_lea.vmem %s2, %s322
      %p324 = scmp.lt.s32.totalorder %s18, 1
      %s325 = scalar_select %p324, %s18, 1
      %s326 = smul.addr %s325, 16
      %s327 = smul.addr %s326, 4
      %s328 = scalar_lea.vmem %s3, %s327
      %p329 = scmp.lt.s32.totalorder %s18, 1
      %s330 = scalar_select %p329, %s18, 1
      %s331 = smul.addr %s330, 8
      %s332 = smul.addr %s331, 4
      %s333 = scalar_lea.vmem %s4, %s332
      %p334 = scmp.lt.s32.totalorder %s18, 1
      %s335 = scalar_select %p334, %s18, 1
      %s336 = smul.addr %s335, 16
      %s337 = smul.addr %s336, 4
      %s338 = scalar_lea.vmem %s5, %s337
      %p339 = scmp.lt.s32.totalorder %s18, 1
      %s340 = scalar_select %p339, %s18, 1
      %s341 = smul.addr %s340, 32
      %s342 = smul.addr %s341, 4
      %s343 = scalar_lea.vmem %s6, %s342
      %p345 = scmp.eq.s32.totalorder %s18, 0
      // Predicated region
      $region49: #{uni_multitask_forward.4} parent=47 // pred_check
        %p346 = pneg %p345
      $region50: #{uni_multitask_forward.4} parent=47 // pred_check_branch
        %348 = sbr.rel (%p346) target = $region52
      $region51: #{uni_multitask_forward.4} parent=47 // pred_region
        %v349 = vld [vmem:[%s0] sm:$0xff]
        %v350 = vld [vmem:[%s0 + $0x8] sm:$0xff]
        %v351 = vld [vmem:[%s0 + $0x10] sm:$0xff]
        %v352 = vld [vmem:[%s0 + $0x18] sm:$0xff]
        %vm353 = vcmask 523264
        %354 = vst.msk [vmem:[#allocation2] sm:$0xff] %vm353, %v349
        %355 = vst.msk [vmem:[#allocation2 + $0x8] sm:$0xff] %vm353, %v350
        %356 = vst.msk [vmem:[#allocation2 + $0x10] sm:$0xff] %vm353, %v351
        %357 = vst.msk [vmem:[#allocation2 + $0x18] sm:$0xff] %vm353, %v352
      $region52: #{uni_multitask_forward.4} parent=47 // pred_fallthru
        _
      %v358 = vld [vmem:[#allocation2] sm:$0xff]
      %v359 = vld [vmem:[#allocation2 + $0x8] sm:$0xff]
      %v360 = vld [vmem:[#allocation2 + $0x10] sm:$0xff]
      %v361 = vld [vmem:[#allocation2 + $0x18] sm:$0xff]
      %v362 = vld [vmem:[%s323] sm:$0xff]
      %v363 = vld [vmem:[%s323 + $0x8] sm:$0xff]
      %v364 = vld [vmem:[%s323 + $0x10] sm:$0x3]
      %v365 = vld [vmem:[%s1] sm:$0x1]
      %vm366 = vcmask 523264
      %v367 = vsel %vm366, %v358, 0.0
      %368 = vadd.xlane.f32.xlu0 %v367
      %v369 = vpop.xlane.xlu0 %368
      %v370 = vsel %vm366, %v359, 0.0
      %371 = vadd.xlane.f32.xlu0 %v370
      %v372 = vpop.xlane.xlu0 %371
      %v373 = vsel %vm366, %v360, 0.0
      %374 = vadd.xlane.f32.xlu0 %v373
      %v375 = vpop.xlane.xlu0 %374
      %v376 = vsel %vm366, %v361, 0.0
      %377 = vadd.xlane.f32.xlu0 %v376
      %v378 = vpop.xlane.xlu0 %377
      %v379 = vrcp.pop 64.0
      %v380 = vmul.f32 %v369, %v379
      %v381 = vmul.f32 %v372, %v379
      %v382 = vmul.f32 %v375, %v379
      %v383 = vmul.f32 %v378, %v379
      %v384 = vsub.f32 %v358, %v380
      %v385 = vsub.f32 %v359, %v381
      %v386 = vsub.f32 %v360, %v382
      %v387 = vsub.f32 %v361, %v383
      %v388 = vmul.f32 %v384, %v384
      %v389 = vmul.f32 %v385, %v385
      %v390 = vmul.f32 %v386, %v386
      %v391 = vmul.f32 %v387, %v387
      %v392 = vsel %vm366, %v388, 0.0
      %393 = vadd.xlane.f32.xlu0 %v392
      %v394 = vpop.xlane.xlu0 %393
      %v395 = vsel %vm366, %v389, 0.0
      %396 = vadd.xlane.f32.xlu0 %v395
      %v397 = vpop.xlane.xlu0 %396
      %v398 = vsel %vm366, %v390, 0.0
      %399 = vadd.xlane.f32.xlu0 %v398
      %v400 = vpop.xlane.xlu0 %399
      %v401 = vsel %vm366, %v391, 0.0
      %402 = vadd.xlane.f32.xlu0 %v401
      %v403 = vpop.xlane.xlu0 %402
      %v404 = vmul.f32 %v394, %v379
      %v405 = vmul.f32 %v397, %v379
      %v406 = vmul.f32 %v400, %v379
      %v407 = vmul.f32 %v403, %v379
      %v408 = vadd.f32 %v404, 1e-06
      %v409 = vadd.f32 %v405, 1e-06
      %v410 = vadd.f32 %v406, 1e-06
      %v411 = vadd.f32 %v407, 1e-06
      %v412 = vrsqrt.pop %v408
      %v413 = vrsqrt.pop %v409
      %v414 = vrsqrt.pop %v410
      %v415 = vrsqrt.pop %v411
      %v416 = vmul.f32 %v384, %v412
      %v417 = vmul.f32 %v385, %v413
      %v418 = vmul.f32 %v386, %v414
      %v419 = vmul.f32 %v387, %v415
      %v420 = vlaneseq
      %v421 = vshrl.u32 %v420, 7
      %v422 = vsub.s32 0, %v421
      %v423 = vrot.slane %v362, %v422
      %v424 = vmul.f32 %v416, %v423
      %v425 = vmul.f32 %v417, %v423
      %v426 = vmul.f32 %v418, %v423
      %v427 = vmul.f32 %v419, %v423
      %v428 = vlaneseq
      %v429 = vshrl.u32 %v428, 7
      %v430 = vsub.s32 1, %v429
      %v431 = vrot.slane %v362, %v430
      %v432 = vadd.f32 %v424, %v431
      %v433 = vadd.f32 %v425, %v431
      %v434 = vadd.f32 %v426, %v431
      %v435 = vadd.f32 %v427, %v431
      %v436 = vpack.c.bf16 %v433, %v432
      %v437 = vpack.c.bf16 %v435, %v434
      %v438 = vld [vmem:[%s328] sm:$0xff]
      %v439 = vld [vmem:[%s328 + $0x8] sm:$0xff]
      %v440 = vld [vmem:[%s328 + $0x10] sm:$0xff]
      %v441 = vld [vmem:[%s328 + $0x18] sm:$0xff]
      %v442 = vld [vmem:[%s328 + $0x20] sm:$0xff]
      %v443 = vld [vmem:[%s328 + $0x28] sm:$0xff]
      %v444 = vld [vmem:[%s328 + $0x30] sm:$0xff]
      %v445 = vld [vmem:[%s328 + $0x38] sm:$0xff]
      %v446 = vlaneseq
      %v447 = vshrl.u32 %v446, 7
      %v448 = vsub.s32 2, %v447
      %v449 = vrot.slane %v362, %v448
      %v450 = vlaneseq
      %v451 = vshrl.u32 %v450, 7
      %v452 = vsub.s32 2, %v451
      %v453 = vrot.slane %v363, %v452
      %v462 = vunpack.c.l.b16 %v438
      %v463 = vunpack.c.h.b16 %v438
      %v464 = vunpack.c.l.b16 %v439
      %v465 = vunpack.c.h.b16 %v439
      %v466 = vunpack.c.l.b16 %v440
      %v467 = vunpack.c.h.b16 %v440
      %v468 = vunpack.c.l.b16 %v441
      %v469 = vunpack.c.h.b16 %v441
      %v470 = vunpack.c.l.b16 %v442
      %v471 = vunpack.c.h.b16 %v442
      %v472 = vunpack.c.l.b16 %v443
      %v473 = vunpack.c.h.b16 %v443
      %v474 = vunpack.c.l.b16 %v444
      %v475 = vunpack.c.h.b16 %v444
      %v476 = vunpack.c.l.b16 %v445
      %v477 = vunpack.c.h.b16 %v445
      %v478 = vpack.c.b16 %v464, %v462
      %v479 = vpack.c.b16 %v465, %v463
      %v480 = vpack.c.b16 %v468, %v466
      %v481 = vpack.c.b16 %v469, %v467
      %v482 = vpack.c.b16 %v472, %v470
      %v483 = vpack.c.b16 %v473, %v471
      %v484 = vpack.c.b16 %v476, %v474
      %v485 = vpack.c.b16 %v477, %v475
      %v495 = vsel %vm366, %v436, 0
      %v498 = vsel %vm366, %v437, 0
      %500 = vmatprep.subr.bf16.mxu0 %v479
      %501 = vmatpush1.bf16.msra.mxu0 %v478
      %502 = vmatprep.subr.bf16.mxu0 %v481
      %503 = vmatpush1.bf16.msra.mxu0 %v480
      %504 = vmatprep.subr.bf16.mxu0 %v483
      %505 = vmatpush1.bf16.msra.mxu0 %v482
      %506 = vmatprep.subr.bf16.mxu0 %v485
      %507 = vmatpush1.bf16.msra.mxu0 %v484
      %508 = vmatprep.subr.bf16.mxu0 0
      %509 = vmatpush1.bf16.msra.mxu0 0
      %510 = vmatprep.subr.bf16.mxu0 0
      %511 = vmatpush1.bf16.msra.mxu0 0
      %512 = vmatprep.subr.bf16.mxu0 0
      %513 = vmatpush1.bf16.msra.mxu0 0
      %514 = vmatprep.subr.bf16.mxu0 0
      %515 = vmatpush1.bf16.msra.mxu0 0
      %516 = vmatprep.subr.bf16.mxu0 0
      %517 = vmatpush1.bf16.msra.mxu0 0
      %518 = vmatprep.subr.bf16.mxu0 0
      %519 = vmatpush1.bf16.msra.mxu0 0
      %520 = vmatprep.subr.bf16.mxu0 0
      %521 = vmatpush1.bf16.msra.mxu0 0
      %522 = vmatprep.subr.bf16.mxu0 0
      %523 = vmatpush1.bf16.msra.mxu0 0
      %524 = vmatprep.subr.bf16.mxu0 0
      %525 = vmatpush1.bf16.msra.mxu0 0
      %526 = vmatprep.subr.bf16.mxu0 0
      %527 = vmatpush1.bf16.msra.mxu0 0
      %528 = vmatprep.subr.bf16.mxu0 0
      %529 = vmatpush1.bf16.msra.mxu0 0
      %530 = vmatprep.subr.bf16.mxu0 0
      %531 = vmatpush1.bf16.msra.mxu0 0
      %532 = vmatprep.mubr.bf16.mxu0 0
      %533 = vmatmul.mubr.bf16.gmra.mrb[0].mxu0 %v495
      %v534 = vpop.f32.mrb[0].mxu0
      %v535 = vadd.f32 %v449, %v534
      %v536 = vpop.f32.mrb[0].mxu0
      %v537 = vadd.f32 %v453, %v536
      %v538 = vpop.f32.mrb[0].mxu0
      %v539 = vadd.f32 %v449, %v538
      %v540 = vpop.f32.mrb[0].mxu0
      %v541 = vadd.f32 %v453, %v540
      %542 = vmatprep.mubr.bf16.mxu0 0
      %543 = vmatmul.mubr.bf16.gmra.mrb[0].mxu0 %v498
      %v544 = vpop.f32.mrb[0].mxu0
      %v545 = vadd.f32 %v449, %v544
      %v546 = vpop.f32.mrb[0].mxu0
      %v547 = vadd.f32 %v453, %v546
      %v548 = vpop.f32.mrb[0].mxu0
      %v549 = vadd.f32 %v449, %v548
      %v550 = vpop.f32.mrb[0].mxu0
      %v551 = vadd.f32 %v453, %v550
      %552 = vdwg.mxu0
      %v553 = vpack.c.bf16 %v539, %v535
      %v554 = vpack.c.bf16 %v549, %v545
      %556 = vrot.lane.b32.xlu0 %v553, 64
      %v557 = vpop.permute.xlu0 %556
      %vm558 = vcmask 130048
      %v560 = vsel %vm558, %v553, 0
      %v563 = vsel %vm558, %v557, 0
      %565 = vmatprep.subr.bf16.mxu0 0
      %566 = vmatpush1.bf16.xpose.msra.mxu0 %v563
      %567 = vmatprep.subr.bf16.mxu0 0
      %568 = vmatpush1.bf16.xpose.msra.mxu0 0
      %569 = vmatprep.subr.bf16.mxu0 0
      %570 = vmatpush1.bf16.xpose.msra.mxu0 0
      %571 = vmatprep.subr.bf16.mxu0 0
      %572 = vmatpush1.bf16.xpose.msra.mxu0 0
      %573 = vmatprep.subr.bf16.mxu0 0
      %574 = vmatpush1.bf16.xpose.msra.mxu0 0
      %575 = vmatprep.subr.bf16.mxu0 0
      %576 = vmatpush1.bf16.xpose.msra.mxu0 0
      %577 = vmatprep.subr.bf16.mxu0 0
      %578 = vmatpush1.bf16.xpose.msra.mxu0 0
      %579 = vmatprep.subr.bf16.mxu0 0
      %580 = vmatpush1.bf16.xpose.msra.mxu0 0
      %581 = vmatprep.subr.bf16.mxu0 0
      %582 = vmatpush1.bf16.xpose.msra.mxu0 0
      %583 = vmatprep.subr.bf16.mxu0 0
      %584 = vmatpush1.bf16.xpose.msra.mxu0 0
      %585 = vmatprep.subr.bf16.mxu0 0
      %586 = vmatpush1.bf16.xpose.msra.mxu0 0
      %587 = vmatprep.subr.bf16.mxu0 0
      %588 = vmatpush1.bf16.xpose.msra.mxu0 0
      %589 = vmatprep.subr.bf16.mxu0 0
      %590 = vmatpush1.bf16.xpose.msra.mxu0 0
      %591 = vmatprep.subr.bf16.mxu0 0
      %592 = vmatpush1.bf16.xpose.msra.mxu0 0
      %593 = vmatprep.subr.bf16.mxu0 0
      %594 = vmatpush1.bf16.xpose.msra.mxu0 0
      %595 = vmatprep.subr.bf16.mxu0 0
      %596 = vmatpush1.bf16.xpose.msra.mxu0 0
      %597 = vmatprep.mubr.bf16.mxu0 0
      %598 = vmatmul.mubr.bf16.gmra.mrb[0].mxu0 %v560
      %v599 = vpop.f32.mrb[0].mxu0
      %v600 = vadd.f32 0.0, %v599
      %v601 = vpop.f32.mrb[0].mxu0
      %v602 = vpop.f32.mrb[0].mxu0
      %v603 = vadd.f32 0.0, %v602
      %v604 = vpop.f32.mrb[0].mxu0
      %605 = vdwg.mxu0
      %607 = vrot.lane.b32.xlu0 %v554, 64
      %v608 = vpop.permute.xlu0 %607
      %v610 = vsel %vm558, %v554, 0
      %v613 = vsel %vm558, %v608, 0
      %615 = vmatprep.subr.bf16.mxu0 0
      %616 = vmatpush1.bf16.xpose.msra.mxu0 %v613
      %617 = vmatprep.subr.bf16.mxu0 0
      %618 = vmatpush1.bf16.xpose.msra.mxu0 0
      %619 = vmatprep.subr.bf16.mxu0 0
      %620 = vmatpush1.bf16.xpose.msra.mxu0 0
      %621 = vmatprep.subr.bf16.mxu0 0
      %622 = vmatpush1.bf16.xpose.msra.mxu0 0
      %623 = vmatprep.subr.bf16.mxu0 0
      %624 = vmatpush1.bf16.xpose.msra.mxu0 0
      %625 = vmatprep.subr.bf16.mxu0 0
      %626 = vmatpush1.bf16.xpose.msra.mxu0 0
      %627 = vmatprep.subr.bf16.mxu0 0
      %628 = vmatpush1.bf16.xpose.msra.mxu0 0
      %629 = vmatprep.subr.bf16.mxu0 0
      %630 = vmatpush1.bf16.xpose.msra.mxu0 0
      %631 = vmatprep.subr.bf16.mxu0 0
      %632 = vmatpush1.bf16.xpose.msra.mxu0 0
      %633 = vmatprep.subr.bf16.mxu0 0
      %634 = vmatpush1.bf16.xpose.msra.mxu0 0
      %635 = vmatprep.subr.bf16.mxu0 0
      %636 = vmatpush1.bf16.xpose.msra.mxu0 0
      %637 = vmatprep.subr.bf16.mxu0 0
      %638 = vmatpush1.bf16.xpose.msra.mxu0 0
      %639 = vmatprep.subr.bf16.mxu0 0
      %640 = vmatpush1.bf16.xpose.msra.mxu0 0
      %641 = vmatprep.subr.bf16.mxu0 0
      %642 = vmatpush1.bf16.xpose.msra.mxu0 0
      %643 = vmatprep.subr.bf16.mxu0 0
      %644 = vmatpush1.bf16.xpose.msra.mxu0 0
      %645 = vmatprep.subr.bf16.mxu0 0
      %646 = vmatpush1.bf16.xpose.msra.mxu0 0
      %647 = vmatprep.mubr.bf16.mxu0 0
      %648 = vmatmul.mubr.bf16.gmra.mrb[0].mxu0 %v610
      %v649 = vpop.f32.mrb[0].mxu0
      %v650 = vadd.f32 0.0, %v649
      %v651 = vpop.f32.mrb[0].mxu0
      %v652 = vpop.f32.mrb[0].mxu0
      %v653 = vadd.f32 0.0, %v652
      %v654 = vpop.f32.mrb[0].mxu0
      %655 = vdwg.mxu0
      %v656 = vmul.f32 %v600, 0.25
      %v657 = vmul.f32 %v603, 0.25
      %v658 = vmul.f32 %v650, 0.25
      %v659 = vmul.f32 %v653, 0.25
      %v661 = vlaneseq
      %v662 = vshrl.u32 %v661, 7
      %v663 = vsub.s32 0, %v662
      %v664 = vrot.slane %v365, %v663
      %v666 = vadd.f32 %v656, %v664
      %v667 = vadd.f32 %v657, %v664
      %v668 = vadd.f32 %v658, %v664
      %v669 = vadd.f32 %v659, %v664
      %v670 = vsel %vm558, %v666, -inf
      %671 = vmax.xlane.f32.xlu0 %v670
      %v672 = vpop.xlane.xlu0 %671
      %v673 = vsel %vm558, %v667, -inf
      %674 = vmax.xlane.f32.xlu0 %v673
      %v675 = vpop.xlane.xlu0 %674
      %v676 = vsel %vm558, %v668, -inf
      %677 = vmax.xlane.f32.xlu0 %v676
      %v678 = vpop.xlane.xlu0 %677
      %v679 = vsel %vm558, %v669, -inf
      %680 = vmax.xlane.f32.xlu0 %v679
      %v681 = vpop.xlane.xlu0 %680
      %v682 = vsub.f32 %v666, %v672
      %v683 = vsub.f32 %v667, %v675
      %v684 = vsub.f32 %v668, %v678
      %v685 = vsub.f32 %v669, %v681
      %v686 = vmul.f32 %v682, 1.442695
      %v687 = vpow.pop %v686
      %v688 = vmul.f32 %v683, 1.442695
      %v689 = vpow.pop %v688
      %v690 = vmul.f32 %v684, 1.442695
      %v691 = vpow.pop %v690
      %v692 = vmul.f32 %v685, 1.442695
      %v693 = vpow.pop %v692
      %v694 = vsel %vm558, %v687, 0.0
      %695 = vadd.xlane.f32.xlu0 %v694
      %v696 = vpop.xlane.xlu0 %695
      %v697 = vsel %vm558, %v689, 0.0
      %698 = vadd.xlane.f32.xlu0 %v697
      %v699 = vpop.xlane.xlu0 %698
      %v700 = vsel %vm558, %v691, 0.0
      %701 = vadd.xlane.f32.xlu0 %v700
      %v702 = vpop.xlane.xlu0 %701
      %v703 = vsel %vm558, %v693, 0.0
      %704 = vadd.xlane.f32.xlu0 %v703
      %v705 = vpop.xlane.xlu0 %704
      %v706 = vrcp.pop %v696
      %v707 = vrcp.pop %v699
      %v708 = vrcp.pop %v702
      %v709 = vrcp.pop %v705
      %v710 = vmul.f32 %v687, %v706
      %v711 = vmul.f32 %v689, %v707
      %v712 = vmul.f32 %v691, %v708
      %v713 = vmul.f32 %v693, %v709
      %v714 = vpack.c.bf16 %v711, %v710
      %v715 = vpack.c.bf16 %v713, %v712
      %v716 = vpack.c.bf16 %v541, %v537
      %v717 = vpack.c.bf16 %v551, %v547
      %v719 = vsel %vm558, %v714, 0
      %721 = vmatprep.subr.bf16.mxu0 0
      %722 = vmatpush1.bf16.msra.mxu0 %v716
      %723 = vmatprep.subr.bf16.mxu0 0
      %724 = vmatpush1.bf16.msra.mxu0 0
      %725 = vmatprep.subr.bf16.mxu0 0
      %726 = vmatpush1.bf16.msra.mxu0 0
      %727 = vmatprep.subr.bf16.mxu0 0
      %728 = vmatpush1.bf16.msra.mxu0 0
      %729 = vmatprep.subr.bf16.mxu0 0
      %730 = vmatpush1.bf16.msra.mxu0 0
      %731 = vmatprep.subr.bf16.mxu0 0
      %732 = vmatpush1.bf16.msra.mxu0 0
      %733 = vmatprep.subr.bf16.mxu0 0
      %734 = vmatpush1.bf16.msra.mxu0 0
      %735 = vmatprep.subr.bf16.mxu0 0
      %736 = vmatpush1.bf16.msra.mxu0 0
      %737 = vmatprep.subr.bf16.mxu0 0
      %738 = vmatpush1.bf16.msra.mxu0 0
      %739 = vmatprep.subr.bf16.mxu0 0
      %740 = vmatpush1.bf16.msra.mxu0 0
      %741 = vmatprep.subr.bf16.mxu0 0
      %742 = vmatpush1.bf16.msra.mxu0 0
      %743 = vmatprep.subr.bf16.mxu0 0
      %744 = vmatpush1.bf16.msra.mxu0 0
      %745 = vmatprep.subr.bf16.mxu0 0
      %746 = vmatpush1.bf16.msra.mxu0 0
      %747 = vmatprep.subr.bf16.mxu0 0
      %748 = vmatpush1.bf16.msra.mxu0 0
      %749 = vmatprep.subr.bf16.mxu0 0
      %750 = vmatpush1.bf16.msra.mxu0 0
      %751 = vmatprep.subr.bf16.mxu0 0
      %752 = vmatpush1.bf16.msra.mxu0 0
      %753 = vmatprep.mubr.bf16.mxu0 0
      %754 = vmatmul.mubr.bf16.gmra.mrb[0].mxu0 %v719
      %v755 = vpop.f32.mrb[0].mxu0
      %v756 = vadd.f32 0.0, %v755
      %v757 = vpop.f32.mrb[0].mxu0
      %v758 = vpop.f32.mrb[0].mxu0
      %v759 = vadd.f32 0.0, %v758
      %v760 = vpop.f32.mrb[0].mxu0
      %761 = vdwg.mxu0
      %v763 = vsel %vm558, %v715, 0
      %765 = vmatprep.subr.bf16.mxu0 0
      %766 = vmatpush1.bf16.msra.mxu0 %v717
      %767 = vmatprep.subr.bf16.mxu0 0
      %768 = vmatpush1.bf16.msra.mxu0 0
      %769 = vmatprep.subr.bf16.mxu0 0
      %770 = vmatpush1.bf16.msra.mxu0 0
      %771 = vmatprep.subr.bf16.mxu0 0
      %772 = vmatpush1.bf16.msra.mxu0 0
      %773 = vmatprep.subr.bf16.mxu0 0
      %774 = vmatpush1.bf16.msra.mxu0 0
      %775 = vmatprep.subr.bf16.mxu0 0
      %776 = vmatpush1.bf16.msra.mxu0 0
      %777 = vmatprep.subr.bf16.mxu0 0
      %778 = vmatpush1.bf16.msra.mxu0 0
      %779 = vmatprep.subr.bf16.mxu0 0
      %780 = vmatpush1.bf16.msra.mxu0 0
      %781 = vmatprep.subr.bf16.mxu0 0
      %782 = vmatpush1.bf16.msra.mxu0 0
      %783 = vmatprep.subr.bf16.mxu0 0
      %784 = vmatpush1.bf16.msra.mxu0 0
      %785 = vmatprep.subr.bf16.mxu0 0
      %786 = vmatpush1.bf16.msra.mxu0 0
      %787 = vmatprep.subr.bf16.mxu0 0
      %788 = vmatpush1.bf16.msra.mxu0 0
      %789 = vmatprep.subr.bf16.mxu0 0
      %790 = vmatpush1.bf16.msra.mxu0 0
      %791 = vmatprep.subr.bf16.mxu0 0
      %792 = vmatpush1.bf16.msra.mxu0 0
      %793 = vmatprep.subr.bf16.mxu0 0
      %794 = vmatpush1.bf16.msra.mxu0 0
      %795 = vmatprep.subr.bf16.mxu0 0
      %796 = vmatpush1.bf16.msra.mxu0 0
      %797 = vmatprep.mubr.bf16.mxu0 0
      %798 = vmatmul.mubr.bf16.gmra.mrb[0].mxu0 %v763
      %v799 = vpop.f32.mrb[0].mxu0
      %v800 = vadd.f32 0.0, %v799
      %v801 = vpop.f32.mrb[0].mxu0
      %v802 = vpop.f32.mrb[0].mxu0
      %v803 = vadd.f32 0.0, %v802
      %v804 = vpop.f32.mrb[0].mxu0
      %805 = vdwg.mxu0
      %806 = vrot.lane.b32.xlu0 %v553, 112
      %v807 = vpop.permute.xlu0 %806
      %808 = vrot.lane.b32.xlu0 %v553, 48
      %v809 = vpop.permute.xlu0 %808
      %v811 = vsel %vm558, %v807, 0
      %v814 = vsel %vm558, %v809, 0
      %816 = vmatprep.subr.bf16.mxu0 0
      %817 = vmatpush1.bf16.xpose.msra.mxu0 %v814
      %818 = vmatprep.subr.bf16.mxu0 0
      %819 = vmatpush1.bf16.xpose.msra.mxu0 0
      %820 = vmatprep.subr.bf16.mxu0 0
      %821 = vmatpush1.bf16.xpose.msra.mxu0 0
      %822 = vmatprep.subr.bf16.mxu0 0
      %823 = vmatpush1.bf16.xpose.msra.mxu0 0
      %824 = vmatprep.subr.bf16.mxu0 0
      %825 = vmatpush1.bf16.xpose.msra.mxu0 0
      %826 = vmatprep.subr.bf16.mxu0 0
      %827 = vmatpush1.bf16.xpose.msra.mxu0 0
      %828 = vmatprep.subr.bf16.mxu0 0
      %829 = vmatpush1.bf16.xpose.msra.mxu0 0
      %830 = vmatprep.subr.bf16.mxu0 0
      %831 = vmatpush1.bf16.xpose.msra.mxu0 0
      %832 = vmatprep.subr.bf16.mxu0 0
      %833 = vmatpush1.bf16.xpose.msra.mxu0 0
      %834 = vmatprep.subr.bf16.mxu0 0
      %835 = vmatpush1.bf16.xpose.msra.mxu0 0
      %836 = vmatprep.subr.bf16.mxu0 0
      %837 = vmatpush1.bf16.xpose.msra.mxu0 0
      %838 = vmatprep.subr.bf16.mxu0 0
      %839 = vmatpush1.bf16.xpose.msra.mxu0 0
      %840 = vmatprep.subr.bf16.mxu0 0
      %841 = vmatpush1.bf16.xpose.msra.mxu0 0
      %842 = vmatprep.subr.bf16.mxu0 0
      %843 = vmatpush1.bf16.xpose.msra.mxu0 0
      %844 = vmatprep.subr.bf16.mxu0 0
      %845 = vmatpush1.bf16.xpose.msra.mxu0 0
      %846 = vmatprep.subr.bf16.mxu0 0
      %847 = vmatpush1.bf16.xpose.msra.mxu0 0
      %848 = vmatprep.mubr.bf16.mxu0 0
      %849 = vmatmul.mubr.bf16.gmra.mrb[0].mxu0 %v811
      %v850 = vpop.f32.mrb[0].mxu0
      %v851 = vadd.f32 0.0, %v850
      %v852 = vpop.f32.mrb[0].mxu0
      %v853 = vpop.f32.mrb[0].mxu0
      %v854 = vadd.f32 0.0, %v853
      %v855 = vpop.f32.mrb[0].mxu0
      %856 = vdwg.mxu0
      %857 = vrot.lane.b32.xlu0 %v554, 112
      %v858 = vpop.permute.xlu0 %857
      %859 = vrot.lane.b32.xlu0 %v554, 48
      %v860 = vpop.permute.xlu0 %859
      %v862 = vsel %vm558, %v858, 0
      %v865 = vsel %vm558, %v860, 0
      %867 = vmatprep.subr.bf16.mxu0 0
      %868 = vmatpush1.bf16.xpose.msra.mxu0 %v865
      %869 = vmatprep.subr.bf16.mxu0 0
      %870 = vmatpush1.bf16.xpose.msra.mxu0 0
      %871 = vmatprep.subr.bf16.mxu0 0
      %872 = vmatpush1.bf16.xpose.msra.mxu0 0
      %873 = vmatprep.subr.bf16.mxu0 0
      %874 = vmatpush1.bf16.xpose.msra.mxu0 0
      %875 = vmatprep.subr.bf16.mxu0 0
      %876 = vmatpush1.bf16.xpose.msra.mxu0 0
      %877 = vmatprep.subr.bf16.mxu0 0
      %878 = vmatpush1.bf16.xpose.msra.mxu0 0
      %879 = vmatprep.subr.bf16.mxu0 0
      %880 = vmatpush1.bf16.xpose.msra.mxu0 0
      %881 = vmatprep.subr.bf16.mxu0 0
      %882 = vmatpush1.bf16.xpose.msra.mxu0 0
      %883 = vmatprep.subr.bf16.mxu0 0
      %884 = vmatpush1.bf16.xpose.msra.mxu0 0
      %885 = vmatprep.subr.bf16.mxu0 0
      %886 = vmatpush1.bf16.xpose.msra.mxu0 0
      %887 = vmatprep.subr.bf16.mxu0 0
      %888 = vmatpush1.bf16.xpose.msra.mxu0 0
      %889 = vmatprep.subr.bf16.mxu0 0
      %890 = vmatpush1.bf16.xpose.msra.mxu0 0
      %891 = vmatprep.subr.bf16.mxu0 0
      %892 = vmatpush1.bf16.xpose.msra.mxu0 0
      %893 = vmatprep.subr.bf16.mxu0 0
      %894 = vmatpush1.bf16.xpose.msra.mxu0 0
      %895 = vmatprep.subr.bf16.mxu0 0
      %896 = vmatpush1.bf16.xpose.msra.mxu0 0
      %897 = vmatprep.subr.bf16.mxu0 0
      %898 = vmatpush1.bf16.xpose.msra.mxu0 0
      %899 = vmatprep.mubr.bf16.mxu0 0
      %900 = vmatmul.mubr.bf16.gmra.mrb[0].mxu0 %v862
      %v901 = vpop.f32.mrb[0].mxu0
      %v902 = vadd.f32 0.0, %v901
      %v903 = vpop.f32.mrb[0].mxu0
      %v904 = vpop.f32.mrb[0].mxu0
      %v905 = vadd.f32 0.0, %v904
      %v906 = vpop.f32.mrb[0].mxu0
      %907 = vdwg.mxu0
      %v908 = vmul.f32 %v851, 0.25
      %v909 = vmul.f32 %v854, 0.25
      %v910 = vmul.f32 %v902, 0.25
      %v911 = vmul.f32 %v905, 0.25
      %v912 = vadd.f32 %v908, %v664
      %v913 = vadd.f32 %v909, %v664
      %v914 = vadd.f32 %v910, %v664
      %v915 = vadd.f32 %v911, %v664
      %v916 = vsel %vm558, %v912, -inf
      %917 = vmax.xlane.f32.xlu0 %v916
      %v918 = vpop.xlane.xlu0 %917
      %v919 = vsel %vm558, %v913, -inf
      %920 = vmax.xlane.f32.xlu0 %v919
      %v921 = vpop.xlane.xlu0 %920
      %v922 = vsel %vm558, %v914, -inf
      %923 = vmax.xlane.f32.xlu0 %v922
      %v924 = vpop.xlane.xlu0 %923
      %v925 = vsel %vm558, %v915, -inf
      %926 = vmax.xlane.f32.xlu0 %v925
      %v927 = vpop.xlane.xlu0 %926
      %v928 = vsub.f32 %v912, %v918
      %v929 = vsub.f32 %v913, %v921
      %v930 = vsub.f32 %v914, %v924
      %v931 = vsub.f32 %v915, %v927
      %v932 = vmul.f32 %v928, 1.442695
      %v933 = vpow.pop %v932
      %v934 = vmul.f32 %v929, 1.442695
      %v935 = vpow.pop %v934
      %v936 = vmul.f32 %v930, 1.442695
      %v937 = vpow.pop %v936
      %v938 = vmul.f32 %v931, 1.442695
      %v939 = vpow.pop %v938
      %v940 = vsel %vm558, %v933, 0.0
      %941 = vadd.xlane.f32.xlu0 %v940
      %v942 = vpop.xlane.xlu0 %941
      %v943 = vsel %vm558, %v935, 0.0
      %944 = vadd.xlane.f32.xlu0 %v943
      %v945 = vpop.xlane.xlu0 %944
      %v946 = vsel %vm558, %v937, 0.0
      %947 = vadd.xlane.f32.xlu0 %v946
      %v948 = vpop.xlane.xlu0 %947
      %v949 = vsel %vm558, %v939, 0.0
      %950 = vadd.xlane.f32.xlu0 %v949
      %v951 = vpop.xlane.xlu0 %950
      %v952 = vrcp.pop %v942
      %v953 = vrcp.pop %v945
      %v954 = vrcp.pop %v948
      %v955 = vrcp.pop %v951
      %v956 = vmul.f32 %v933, %v952
      %v957 = vmul.f32 %v935, %v953
      %v958 = vmul.f32 %v937, %v954
      %v959 = vmul.f32 %v939, %v955
      %v960 = vpack.c.bf16 %v957, %v956
      %v961 = vpack.c.bf16 %v959, %v958
      %963 = vrot.lane.b32.xlu0 %v716, 112
      %v964 = vpop.permute.xlu0 %963
      %v967 = vsel %vm558, %v960, 0
      %969 = vmatprep.subr.bf16.mxu0 0
      %970 = vmatpush1.bf16.msra.mxu0 %v964
      %971 = vmatprep.subr.bf16.mxu0 0
      %972 = vmatpush1.bf16.msra.mxu0 0
      %973 = vmatprep.subr.bf16.mxu0 0
      %974 = vmatpush1.bf16.msra.mxu0 0
      %975 = vmatprep.subr.bf16.mxu0 0
      %976 = vmatpush1.bf16.msra.mxu0 0
      %977 = vmatprep.subr.bf16.mxu0 0
      %978 = vmatpush1.bf16.msra.mxu0 0
      %979 = vmatprep.subr.bf16.mxu0 0
      %980 = vmatpush1.bf16.msra.mxu0 0
      %981 = vmatprep.subr.bf16.mxu0 0
      %982 = vmatpush1.bf16.msra.mxu0 0
      %983 = vmatprep.subr.bf16.mxu0 0
      %984 = vmatpush1.bf16.msra.mxu0 0
      %985 = vmatprep.subr.bf16.mxu0 0
      %986 = vmatpush1.bf16.msra.mxu0 0
      %987 = vmatprep.subr.bf16.mxu0 0
      %988 = vmatpush1.bf16.msra.mxu0 0
      %989 = vmatprep.subr.bf16.mxu0 0
      %990 = vmatpush1.bf16.msra.mxu0 0
      %991 = vmatprep.subr.bf16.mxu0 0
      %992 = vmatpush1.bf16.msra.mxu0 0
      %993 = vmatprep.subr.bf16.mxu0 0
      %994 = vmatpush1.bf16.msra.mxu0 0
      %995 = vmatprep.subr.bf16.mxu0 0
      %996 = vmatpush1.bf16.msra.mxu0 0
      %997 = vmatprep.subr.bf16.mxu0 0
      %998 = vmatpush1.bf16.msra.mxu0 0
      %999 = vmatprep.subr.bf16.mxu0 0
      %1000 = vmatpush1.bf16.msra.mxu0 0
      %1001 = vmatprep.mubr.bf16.mxu0 0
      %1002 = vmatmul.mubr.bf16.gmra.mrb[0].mxu0 %v967
      %v1003 = vpop.f32.mrb[0].mxu0
      %v1004 = vadd.f32 0.0, %v1003
      %v1005 = vpop.f32.mrb[0].mxu0
      %v1006 = vpop.f32.mrb[0].mxu0
      %v1007 = vadd.f32 0.0, %v1006
      %v1008 = vpop.f32.mrb[0].mxu0
      %1009 = vdwg.mxu0
      %1011 = vrot.lane.b32.xlu0 %v717, 112
      %v1012 = vpop.permute.xlu0 %1011
      %v1015 = vsel %vm558, %v961, 0
      %1017 = vmatprep.subr.bf16.mxu0 0
      %1018 = vmatpush1.bf16.msra.mxu0 %v1012
      %1019 = vmatprep.subr.bf16.mxu0 0
      %1020 = vmatpush1.bf16.msra.mxu0 0
      %1021 = vmatprep.subr.bf16.mxu0 0
      %1022 = vmatpush1.bf16.msra.mxu0 0
      %1023 = vmatprep.subr.bf16.mxu0 0
      %1024 = vmatpush1.bf16.msra.mxu0 0
      %1025 = vmatprep.subr.bf16.mxu0 0
      %1026 = vmatpush1.bf16.msra.mxu0 0
      %1027 = vmatprep.subr.bf16.mxu0 0
      %1028 = vmatpush1.bf16.msra.mxu0 0
      %1029 = vmatprep.subr.bf16.mxu0 0
      %1030 = vmatpush1.bf16.msra.mxu0 0
      %1031 = vmatprep.subr.bf16.mxu0 0
      %1032 = vmatpush1.bf16.msra.mxu0 0
      %1033 = vmatprep.subr.bf16.mxu0 0
      %1034 = vmatpush1.bf16.msra.mxu0 0
      %1035 = vmatprep.subr.bf16.mxu0 0
      %1036 = vmatpush1.bf16.msra.mxu0 0
      %1037 = vmatprep.subr.bf16.mxu0 0
      %1038 = vmatpush1.bf16.msra.mxu0 0
      %1039 = vmatprep.subr.bf16.mxu0 0
      %1040 = vmatpush1.bf16.msra.mxu0 0
      %1041 = vmatprep.subr.bf16.mxu0 0
      %1042 = vmatpush1.bf16.msra.mxu0 0
      %1043 = vmatprep.subr.bf16.mxu0 0
      %1044 = vmatpush1.bf16.msra.mxu0 0
      %1045 = vmatprep.subr.bf16.mxu0 0
      %1046 = vmatpush1.bf16.msra.mxu0 0
      %1047 = vmatprep.subr.bf16.mxu0 0
      %1048 = vmatpush1.bf16.msra.mxu0 0
      %1049 = vmatprep.mubr.bf16.mxu0 0
      %1050 = vmatmul.mubr.bf16.gmra.mrb[0].mxu0 %v1015
      %v1051 = vpop.f32.mrb[0].mxu0
      %v1052 = vadd.f32 0.0, %v1051
      %v1053 = vpop.f32.mrb[0].mxu0
      %v1054 = vpop.f32.mrb[0].mxu0
      %v1055 = vadd.f32 0.0, %v1054
      %v1056 = vpop.f32.mrb[0].mxu0
      %1057 = vdwg.mxu0
      %1058 = vrot.lane.b32.xlu0 %v553, 96
      %v1059 = vpop.permute.xlu0 %1058
      %1060 = vrot.lane.b32.xlu0 %v553, 32
      %v1061 = vpop.permute.xlu0 %1060
      %v1063 = vsel %vm558, %v1059, 0
      %v1066 = vsel %vm558, %v1061, 0
      %1068 = vmatprep.subr.bf16.mxu0 0
      %1069 = vmatpush1.bf16.xpose.msra.mxu0 %v1066
      %1070 = vmatprep.subr.bf16.mxu0 0
      %1071 = vmatpush1.bf16.xpose.msra.mxu0 0
      %1072 = vmatprep.subr.bf16.mxu0 0
      %1073 = vmatpush1.bf16.xpose.msra.mxu0 0
      %1074 = vmatprep.subr.bf16.mxu0 0
      %1075 = vmatpush1.bf16.xpose.msra.mxu0 0
      %1076 = vmatprep.subr.bf16.mxu0 0
      %1077 = vmatpush1.bf16.xpose.msra.mxu0 0
      %1078 = vmatprep.subr.bf16.mxu0 0
      %1079 = vmatpush1.bf16.xpose.msra.mxu0 0
      %1080 = vmatprep.subr.bf16.mxu0 0
      %1081 = vmatpush1.bf16.xpose.msra.mxu0 0
      %1082 = vmatprep.subr.bf16.mxu0 0
      %1083 = vmatpush1.bf16.xpose.msra.mxu0 0
      %1084 = vmatprep.subr.bf16.mxu0 0
      %1085 = vmatpush1.bf16.xpose.msra.mxu0 0
      %1086 = vmatprep.subr.bf16.mxu0 0
      %1087 = vmatpush1.bf16.xpose.msra.mxu0 0
      %1088 = vmatprep.subr.bf16.mxu0 0
      %1089 = vmatpush1.bf16.xpose.msra.mxu0 0
      %1090 = vmatprep.subr.bf16.mxu0 0
      %1091 = vmatpush1.bf16.xpose.msra.mxu0 0
      %1092 = vmatprep.subr.bf16.mxu0 0
      %1093 = vmatpush1.bf16.xpose.msra.mxu0 0
      %1094 = vmatprep.subr.bf16.mxu0 0
      %1095 = vmatpush1.bf16.xpose.msra.mxu0 0
      %1096 = vmatprep.subr.bf16.mxu0 0
      %1097 = vmatpush1.bf16.xpose.msra.mxu0 0
      %1098 = vmatprep.subr.bf16.mxu0 0
      %1099 = vmatpush1.bf16.xpose.msra.mxu0 0
      %1100 = vmatprep.mubr.bf16.mxu0 0
      %1101 = vmatmul.mubr.bf16.gmra.mrb[0].mxu0 %v1063
      %v1102 = vpop.f32.mrb[0].mxu0
      %v1103 = vadd.f32 0.0, %v1102
      %v1104 = vpop.f32.mrb[0].mxu0
      %v1105 = vpop.f32.mrb[0].mxu0
      %v1106 = vadd.f32 0.0, %v1105
      %v1107 = vpop.f32.mrb[0].mxu0
      %1108 = vdwg.mxu0
      %1109 = vrot.lane.b32.xlu0 %v554, 96
      %v1110 = vpop.permute.xlu0 %1109
      %1111 = vrot.lane.b32.xlu0 %v554, 32
      %v1112 = vpop.permute.xlu0 %1111
      %v1114 = vsel %vm558, %v1110, 0
      %v1117 = vsel %vm558, %v1112, 0
      %1119 = vmatprep.subr.bf16.mxu0 0
      %1120 = vmatpush1.bf16.xpose.msra.mxu0 %v1117
      %1121 = vmatprep.subr.bf16.mxu0 0
      %1122 = vmatpush1.bf16.xpose.msra.mxu0 0
      %1123 = vmatprep.subr.bf16.mxu0 0
      %1124 = vmatpush1.bf16.xpose.msra.mxu0 0
      %1125 = vmatprep.subr.bf16.mxu0 0
      %1126 = vmatpush1.bf16.xpose.msra.mxu0 0
      %1127 = vmatprep.subr.bf16.mxu0 0
      %1128 = vmatpush1.bf16.xpose.msra.mxu0 0
      %1129 = vmatprep.subr.bf16.mxu0 0
      %1130 = vmatpush1.bf16.xpose.msra.mxu0 0
      %1131 = vmatprep.subr.bf16.mxu0 0
      %1132 = vmatpush1.bf16.xpose.msra.mxu0 0
      %1133 = vmatprep.subr.bf16.mxu0 0
      %1134 = vmatpush1.bf16.xpose.msra.mxu0 0
      %1135 = vmatprep.subr.bf16.mxu0 0
      %1136 = vmatpush1.bf16.xpose.msra.mxu0 0
      %1137 = vmatprep.subr.bf16.mxu0 0
      %1138 = vmatpush1.bf16.xpose.msra.mxu0 0
      %1139 = vmatprep.subr.bf16.mxu0 0
      %1140 = vmatpush1.bf16.xpose.msra.mxu0 0
      %1141 = vmatprep.subr.bf16.mxu0 0
      %1142 = vmatpush1.bf16.xpose.msra.mxu0 0
      %1143 = vmatprep.subr.bf16.mxu0 0
      %1144 = vmatpush1.bf16.xpose.msra.mxu0 0
      %1145 = vmatprep.subr.bf16.mxu0 0
      %1146 = vmatpush1.bf16.xpose.msra.mxu0 0
      %1147 = vmatprep.subr.bf16.mxu0 0
      %1148 = vmatpush1.bf16.xpose.msra.mxu0 0
      %1149 = vmatprep.subr.bf16.mxu0 0
      %1150 = vmatpush1.bf16.xpose.msra.mxu0 0
      %1151 = vmatprep.mubr.bf16.mxu0 0
      %1152 = vmatmul.mubr.bf16.gmra.mrb[0].mxu0 %v1114
      %v1153 = vpop.f32.mrb[0].mxu0
      %v1154 = vadd.f32 0.0, %v1153
      %v1155 = vpop.f32.mrb[0].mxu0
      %v1156 = vpop.f32.mrb[0].mxu0
      %v1157 = vadd.f32 0.0, %v1156
      %v1158 = vpop.f32.mrb[0].mxu0
      %1159 = vdwg.mxu0
      %v1160 = vmul.f32 %v1103, 0.25
      %v1161 = vmul.f32 %v1106, 0.25
      %v1162 = vmul.f32 %v1154, 0.25
      %v1163 = vmul.f32 %v1157, 0.25
      %v1164 = vadd.f32 %v1160, %v664
      %v1165 = vadd.f32 %v1161, %v664
      %v1166 = vadd.f32 %v1162, %v664
      %v1167 = vadd.f32 %v1163, %v664
      %v1168 = vsel %vm558, %v1164, -inf
      %1169 = vmax.xlane.f32.xlu0 %v1168
      %v1170 = vpop.xlane.xlu0 %1169
      %v1171 = vsel %vm558, %v1165, -inf
      %1172 = vmax.xlane.f32.xlu0 %v1171
      %v1173 = vpop.xlane.xlu0 %1172
      %v1174 = vsel %vm558, %v1166, -inf
      %1175 = vmax.xlane.f32.xlu0 %v1174
      %v1176 = vpop.xlane.xlu0 %1175
      %v1177 = vsel %vm558, %v1167, -inf
      %1178 = vmax.xlane.f32.xlu0 %v1177
      %v1179 = vpop.xlane.xlu0 %1178
      %v1180 = vsub.f32 %v1164, %v1170
      %v1181 = vsub.f32 %v1165, %v1173
      %v1182 = vsub.f32 %v1166, %v1176
      %v1183 = vsub.f32 %v1167, %v1179
      %v1184 = vmul.f32 %v1180, 1.442695
      %v1185 = vpow.pop %v1184
      %v1186 = vmul.f32 %v1181, 1.442695
      %v1187 = vpow.pop %v1186
      %v1188 = vmul.f32 %v1182, 1.442695
      %v1189 = vpow.pop %v1188
      %v1190 = vmul.f32 %v1183, 1.442695
      %v1191 = vpow.pop %v1190
      %v1192 = vsel %vm558, %v1185, 0.0
      %1193 = vadd.xlane.f32.xlu0 %v1192
      %v1194 = vpop.xlane.xlu0 %1193
      %v1195 = vsel %vm558, %v1187, 0.0
      %1196 = vadd.xlane.f32.xlu0 %v1195
      %v1197 = vpop.xlane.xlu0 %1196
      %v1198 = vsel %vm558, %v1189, 0.0
      %1199 = vadd.xlane.f32.xlu0 %v1198
      %v1200 = vpop.xlane.xlu0 %1199
      %v1201 = vsel %vm558, %v1191, 0.0
      %1202 = vadd.xlane.f32.xlu0 %v1201
      %v1203 = vpop.xlane.xlu0 %1202
      %v1204 = vrcp.pop %v1194
      %v1205 = vrcp.pop %v1197
      %v1206 = vrcp.pop %v1200
      %v1207 = vrcp.pop %v1203
      %v1208 = vmul.f32 %v1185, %v1204
      %v1209 = vmul.f32 %v1187, %v1205
      %v1210 = vmul.f32 %v1189, %v1206
      %v1211 = vmul.f32 %v1191, %v1207
      %v1212 = vpack.c.bf16 %v1209, %v1208
      %v1213 = vpack.c.bf16 %v1211, %v1210
      %1214 = vrot.lane.b32.xlu0 %v716, 96
      %v1215 = vpop.permute.xlu0 %1214
      %v1218 = vsel %vm558, %v1212, 0
      %1220 = vmatprep.subr.bf16.mxu0 0
      %1221 = vmatpush1.bf16.msra.mxu0 %v1215
      %1222 = vmatprep.subr.bf16.mxu0 0
      %1223 = vmatpush1.bf16.msra.mxu0 0
      %1224 = vmatprep.subr.bf16.mxu0 0
      %1225 = vmatpush1.bf16.msra.mxu0 0
      %1226 = vmatprep.subr.bf16.mxu0 0
      %1227 = vmatpush1.bf16.msra.mxu0 0
      %1228 = vmatprep.subr.bf16.mxu0 0
      %1229 = vmatpush1.bf16.msra.mxu0 0
      %1230 = vmatprep.subr.bf16.mxu0 0
      %1231 = vmatpush1.bf16.msra.mxu0 0
      %1232 = vmatprep.subr.bf16.mxu0 0
      %1233 = vmatpush1.bf16.msra.mxu0 0
      %1234 = vmatprep.subr.bf16.mxu0 0
      %1235 = vmatpush1.bf16.msra.mxu0 0
      %1236 = vmatprep.subr.bf16.mxu0 0
      %1237 = vmatpush1.bf16.msra.mxu0 0
      %1238 = vmatprep.subr.bf16.mxu0 0
      %1239 = vmatpush1.bf16.msra.mxu0 0
      %1240 = vmatprep.subr.bf16.mxu0 0
      %1241 = vmatpush1.bf16.msra.mxu0 0
      %1242 = vmatprep.subr.bf16.mxu0 0
      %1243 = vmatpush1.bf16.msra.mxu0 0
      %1244 = vmatprep.subr.bf16.mxu0 0
      %1245 = vmatpush1.bf16.msra.mxu0 0
      %1246 = vmatprep.subr.bf16.mxu0 0
      %1247 = vmatpush1.bf16.msra.mxu0 0
      %1248 = vmatprep.subr.bf16.mxu0 0
      %1249 = vmatpush1.bf16.msra.mxu0 0
      %1250 = vmatprep.subr.bf16.mxu0 0
      %1251 = vmatpush1.bf16.msra.mxu0 0
      %1252 = vmatprep.mubr.bf16.mxu0 0
      %1253 = vmatmul.mubr.bf16.gmra.mrb[0].mxu0 %v1218
      %v1254 = vpop.f32.mrb[0].mxu0
      %v1255 = vadd.f32 0.0, %v1254
      %v1256 = vpop.f32.mrb[0].mxu0
      %v1257 = vpop.f32.mrb[0].mxu0
      %v1258 = vadd.f32 0.0, %v1257
      %v1259 = vpop.f32.mrb[0].mxu0
      %1260 = vdwg.mxu0
      %1261 = vrot.lane.b32.xlu0 %v717, 96
      %v1262 = vpop.permute.xlu0 %1261
      %v1265 = vsel %vm558, %v1213, 0
      %1267 = vmatprep.subr.bf16.mxu0 0
      %1268 = vmatpush1.bf16.msra.mxu0 %v1262
      %1269 = vmatprep.subr.bf16.mxu0 0
      %1270 = vmatpush1.bf16.msra.mxu0 0
      %1271 = vmatprep.subr.bf16.mxu0 0
      %1272 = vmatpush1.bf16.msra.mxu0 0
      %1273 = vmatprep.subr.bf16.mxu0 0
      %1274 = vmatpush1.bf16.msra.mxu0 0
      %1275 = vmatprep.subr.bf16.mxu0 0
      %1276 = vmatpush1.bf16.msra.mxu0 0
      %1277 = vmatprep.subr.bf16.mxu0 0
      %1278 = vmatpush1.bf16.msra.mxu0 0
      %1279 = vmatprep.subr.bf16.mxu0 0
      %1280 = vmatpush1.bf16.msra.mxu0 0
      %1281 = vmatprep.subr.bf16.mxu0 0
      %1282 = vmatpush1.bf16.msra.mxu0 0
      %1283 = vmatprep.subr.bf16.mxu0 0
      %1284 = vmatpush1.bf16.msra.mxu0 0
      %1285 = vmatprep.subr.bf16.mxu0 0
      %1286 = vmatpush1.bf16.msra.mxu0 0
      %1287 = vmatprep.subr.bf16.mxu0 0
      %1288 = vmatpush1.bf16.msra.mxu0 0
      %1289 = vmatprep.subr.bf16.mxu0 0
      %1290 = vmatpush1.bf16.msra.mxu0 0
      %1291 = vmatprep.subr.bf16.mxu0 0
      %1292 = vmatpush1.bf16.msra.mxu0 0
      %1293 = vmatprep.subr.bf16.mxu0 0
      %1294 = vmatpush1.bf16.msra.mxu0 0
      %1295 = vmatprep.subr.bf16.mxu0 0
      %1296 = vmatpush1.bf16.msra.mxu0 0
      %1297 = vmatprep.subr.bf16.mxu0 0
      %1298 = vmatpush1.bf16.msra.mxu0 0
      %1299 = vmatprep.mubr.bf16.mxu0 0
      %1300 = vmatmul.mubr.bf16.gmra.mrb[0].mxu0 %v1265
      %v1301 = vpop.f32.mrb[0].mxu0
      %v1302 = vadd.f32 0.0, %v1301
      %v1303 = vpop.f32.mrb[0].mxu0
      %v1304 = vpop.f32.mrb[0].mxu0
      %v1305 = vadd.f32 0.0, %v1304
      %v1306 = vpop.f32.mrb[0].mxu0
      %1307 = vdwg.mxu0
      %1308 = vrot.lane.b32.xlu0 %v553, 80
      %v1309 = vpop.permute.xlu0 %1308
      %1310 = vrot.lane.b32.xlu0 %v553, 16
      %v1311 = vpop.permute.xlu0 %1310
      %v1313 = vsel %vm558, %v1309, 0
      %v1316 = vsel %vm558, %v1311, 0
      %1318 = vmatprep.subr.bf16.mxu0 0
      %1319 = vmatpush1.bf16.xpose.msra.mxu0 %v1316
      %1320 = vmatprep.subr.bf16.mxu0 0
      %1321 = vmatpush1.bf16.xpose.msra.mxu0 0
      %1322 = vmatprep.subr.bf16.mxu0 0
      %1323 = vmatpush1.bf16.xpose.msra.mxu0 0
      %1324 = vmatprep.subr.bf16.mxu0 0
      %1325 = vmatpush1.bf16.xpose.msra.mxu0 0
      %1326 = vmatprep.subr.bf16.mxu0 0
      %1327 = vmatpush1.bf16.xpose.msra.mxu0 0
      %1328 = vmatprep.subr.bf16.mxu0 0
      %1329 = vmatpush1.bf16.xpose.msra.mxu0 0
      %1330 = vmatprep.subr.bf16.mxu0 0
      %1331 = vmatpush1.bf16.xpose.msra.mxu0 0
      %1332 = vmatprep.subr.bf16.mxu0 0
      %1333 = vmatpush1.bf16.xpose.msra.mxu0 0
      %1334 = vmatprep.subr.bf16.mxu0 0
      %1335 = vmatpush1.bf16.xpose.msra.mxu0 0
      %1336 = vmatprep.subr.bf16.mxu0 0
      %1337 = vmatpush1.bf16.xpose.msra.mxu0 0
      %1338 = vmatprep.subr.bf16.mxu0 0
      %1339 = vmatpush1.bf16.xpose.msra.mxu0 0
      %1340 = vmatprep.subr.bf16.mxu0 0
      %1341 = vmatpush1.bf16.xpose.msra.mxu0 0
      %1342 = vmatprep.subr.bf16.mxu0 0
      %1343 = vmatpush1.bf16.xpose.msra.mxu0 0
      %1344 = vmatprep.subr.bf16.mxu0 0
      %1345 = vmatpush1.bf16.xpose.msra.mxu0 0
      %1346 = vmatprep.subr.bf16.mxu0 0
      %1347 = vmatpush1.bf16.xpose.msra.mxu0 0
      %1348 = vmatprep.subr.bf16.mxu0 0
      %1349 = vmatpush1.bf16.xpose.msra.mxu0 0
      %1350 = vmatprep.mubr.bf16.mxu0 0
      %1351 = vmatmul.mubr.bf16.gmra.mrb[0].mxu0 %v1313
      %v1352 = vpop.f32.mrb[0].mxu0
      %v1353 = vadd.f32 0.0, %v1352
      %v1354 = vpop.f32.mrb[0].mxu0
      %v1355 = vpop.f32.mrb[0].mxu0
      %v1356 = vadd.f32 0.0, %v1355
      %v1357 = vpop.f32.mrb[0].mxu0
      %1358 = vdwg.mxu0
      %1359 = vrot.lane.b32.xlu0 %v554, 80
      %v1360 = vpop.permute.xlu0 %1359
      %1361 = vrot.lane.b32.xlu0 %v554, 16
      %v1362 = vpop.permute.xlu0 %1361
      %v1364 = vsel %vm558, %v1360, 0
      %v1367 = vsel %vm558, %v1362, 0
      %1369 = vmatprep.subr.bf16.mxu0 0
      %1370 = vmatpush1.bf16.xpose.msra.mxu0 %v1367
      %1371 = vmatprep.subr.bf16.mxu0 0
      %1372 = vmatpush1.bf16.xpose.msra.mxu0 0
      %1373 = vmatprep.subr.bf16.mxu0 0
      %1374 = vmatpush1.bf16.xpose.msra.mxu0 0
      %1375 = vmatprep.subr.bf16.mxu0 0
      %1376 = vmatpush1.bf16.xpose.msra.mxu0 0
      %1377 = vmatprep.subr.bf16.mxu0 0
      %1378 = vmatpush1.bf16.xpose.msra.mxu0 0
      %1379 = vmatprep.subr.bf16.mxu0 0
      %1380 = vmatpush1.bf16.xpose.msra.mxu0 0
      %1381 = vmatprep.subr.bf16.mxu0 0
      %1382 = vmatpush1.bf16.xpose.msra.mxu0 0
      %1383 = vmatprep.subr.bf16.mxu0 0
      %1384 = vmatpush1.bf16.xpose.msra.mxu0 0
      %1385 = vmatprep.subr.bf16.mxu0 0
      %1386 = vmatpush1.bf16.xpose.msra.mxu0 0
      %1387 = vmatprep.subr.bf16.mxu0 0
      %1388 = vmatpush1.bf16.xpose.msra.mxu0 0
      %1389 = vmatprep.subr.bf16.mxu0 0
      %1390 = vmatpush1.bf16.xpose.msra.mxu0 0
      %1391 = vmatprep.subr.bf16.mxu0 0
      %1392 = vmatpush1.bf16.xpose.msra.mxu0 0
      %1393 = vmatprep.subr.bf16.mxu0 0
      %1394 = vmatpush1.bf16.xpose.msra.mxu0 0
      %1395 = vmatprep.subr.bf16.mxu0 0
      %1396 = vmatpush1.bf16.xpose.msra.mxu0 0
      %1397 = vmatprep.subr.bf16.mxu0 0
      %1398 = vmatpush1.bf16.xpose.msra.mxu0 0
      %1399 = vmatprep.subr.bf16.mxu0 0
      %1400 = vmatpush1.bf16.xpose.msra.mxu0 0
      %1401 = vmatprep.mubr.bf16.mxu0 0
      %1402 = vmatmul.mubr.bf16.gmra.mrb[0].mxu0 %v1364
      %v1403 = vpop.f32.mrb[0].mxu0
      %v1404 = vadd.f32 0.0, %v1403
      %v1405 = vpop.f32.mrb[0].mxu0
      %v1406 = vpop.f32.mrb[0].mxu0
      %v1407 = vadd.f32 0.0, %v1406
      %v1408 = vpop.f32.mrb[0].mxu0
      %1409 = vdwg.mxu0
      %v1410 = vmul.f32 %v1353, 0.25
      %v1411 = vmul.f32 %v1356, 0.25
      %v1412 = vmul.f32 %v1404, 0.25
      %v1413 = vmul.f32 %v1407, 0.25
      %v1414 = vadd.f32 %v1410, %v664
      %v1415 = vadd.f32 %v1411, %v664
      %v1416 = vadd.f32 %v1412, %v664
      %v1417 = vadd.f32 %v1413, %v664
      %v1418 = vsel %vm558, %v1414, -inf
      %1419 = vmax.xlane.f32.xlu0 %v1418
      %v1420 = vpop.xlane.xlu0 %1419
      %v1421 = vsel %vm558, %v1415, -inf
      %1422 = vmax.xlane.f32.xlu0 %v1421
      %v1423 = vpop.xlane.xlu0 %1422
      %v1424 = vsel %vm558, %v1416, -inf
      %1425 = vmax.xlane.f32.xlu0 %v1424
      %v1426 = vpop.xlane.xlu0 %1425
      %v1427 = vsel %vm558, %v1417, -inf
      %1428 = vmax.xlane.f32.xlu0 %v1427
      %v1429 = vpop.xlane.xlu0 %1428
      %v1430 = vsub.f32 %v1414, %v1420
      %v1431 = vsub.f32 %v1415, %v1423
      %v1432 = vsub.f32 %v1416, %v1426
      %v1433 = vsub.f32 %v1417, %v1429
      %v1434 = vmul.f32 %v1430, 1.442695
      %v1435 = vpow.pop %v1434
      %v1436 = vmul.f32 %v1431, 1.442695
      %v1437 = vpow.pop %v1436
      %v1438 = vmul.f32 %v1432, 1.442695
      %v1439 = vpow.pop %v1438
      %v1440 = vmul.f32 %v1433, 1.442695
      %v1441 = vpow.pop %v1440
      %v1442 = vsel %vm558, %v1435, 0.0
      %1443 = vadd.xlane.f32.xlu0 %v1442
      %v1444 = vpop.xlane.xlu0 %1443
      %v1445 = vsel %vm558, %v1437, 0.0
      %1446 = vadd.xlane.f32.xlu0 %v1445
      %v1447 = vpop.xlane.xlu0 %1446
      %v1448 = vsel %vm558, %v1439, 0.0
      %1449 = vadd.xlane.f32.xlu0 %v1448
      %v1450 = vpop.xlane.xlu0 %1449
      %v1451 = vsel %vm558, %v1441, 0.0
      %1452 = vadd.xlane.f32.xlu0 %v1451
      %v1453 = vpop.xlane.xlu0 %1452
      %v1454 = vrcp.pop %v1444
      %v1455 = vrcp.pop %v1447
      %v1456 = vrcp.pop %v1450
      %v1457 = vrcp.pop %v1453
      %v1458 = vmul.f32 %v1435, %v1454
      %v1459 = vmul.f32 %v1437, %v1455
      %v1460 = vmul.f32 %v1439, %v1456
      %v1461 = vmul.f32 %v1441, %v1457
      %v1462 = vpack.c.bf16 %v1459, %v1458
      %v1463 = vpack.c.bf16 %v1461, %v1460
      %1464 = vrot.lane.b32.xlu0 %v716, 80
      %v1465 = vpop.permute.xlu0 %1464
      %v1468 = vsel %vm558, %v1462, 0
      %1470 = vmatprep.subr.bf16.mxu0 0
      %1471 = vmatpush1.bf16.msra.mxu0 %v1465
      %1472 = vmatprep.subr.bf16.mxu0 0
      %1473 = vmatpush1.bf16.msra.mxu0 0
      %1474 = vmatprep.subr.bf16.mxu0 0
      %1475 = vmatpush1.bf16.msra.mxu0 0
      %1476 = vmatprep.subr.bf16.mxu0 0
      %1477 = vmatpush1.bf16.msra.mxu0 0
      %1478 = vmatprep.subr.bf16.mxu0 0
      %1479 = vmatpush1.bf16.msra.mxu0 0
      %1480 = vmatprep.subr.bf16.mxu0 0
      %1481 = vmatpush1.bf16.msra.mxu0 0
      %1482 = vmatprep.subr.bf16.mxu0 0
      %1483 = vmatpush1.bf16.msra.mxu0 0
      %1484 = vmatprep.subr.bf16.mxu0 0
      %1485 = vmatpush1.bf16.msra.mxu0 0
      %1486 = vmatprep.subr.bf16.mxu0 0
      %1487 = vmatpush1.bf16.msra.mxu0 0
      %1488 = vmatprep.subr.bf16.mxu0 0
      %1489 = vmatpush1.bf16.msra.mxu0 0
      %1490 = vmatprep.subr.bf16.mxu0 0
      %1491 = vmatpush1.bf16.msra.mxu0 0
      %1492 = vmatprep.subr.bf16.mxu0 0
      %1493 = vmatpush1.bf16.msra.mxu0 0
      %1494 = vmatprep.subr.bf16.mxu0 0
      %1495 = vmatpush1.bf16.msra.mxu0 0
      %1496 = vmatprep.subr.bf16.mxu0 0
      %1497 = vmatpush1.bf16.msra.mxu0 0
      %1498 = vmatprep.subr.bf16.mxu0 0
      %1499 = vmatpush1.bf16.msra.mxu0 0
      %1500 = vmatprep.subr.bf16.mxu0 0
      %1501 = vmatpush1.bf16.msra.mxu0 0
      %1502 = vmatprep.mubr.bf16.mxu0 0
      %1503 = vmatmul.mubr.bf16.gmra.mrb[0].mxu0 %v1468
      %v1504 = vpop.f32.mrb[0].mxu0
      %v1505 = vadd.f32 0.0, %v1504
      %v1506 = vpop.f32.mrb[0].mxu0
      %v1507 = vpop.f32.mrb[0].mxu0
      %v1508 = vadd.f32 0.0, %v1507
      %v1509 = vpop.f32.mrb[0].mxu0
      %1510 = vdwg.mxu0
      %1511 = vrot.lane.b32.xlu0 %v717, 80
      %v1512 = vpop.permute.xlu0 %1511
      %v1515 = vsel %vm558, %v1463, 0
      %1517 = vmatprep.subr.bf16.mxu0 0
      %1518 = vmatpush1.bf16.msra.mxu0 %v1512
      %1519 = vmatprep.subr.bf16.mxu0 0
      %1520 = vmatpush1.bf16.msra.mxu0 0
      %1521 = vmatprep.subr.bf16.mxu0 0
      %1522 = vmatpush1.bf16.msra.mxu0 0
      %1523 = vmatprep.subr.bf16.mxu0 0
      %1524 = vmatpush1.bf16.msra.mxu0 0
      %1525 = vmatprep.subr.bf16.mxu0 0
      %1526 = vmatpush1.bf16.msra.mxu0 0
      %1527 = vmatprep.subr.bf16.mxu0 0
      %1528 = vmatpush1.bf16.msra.mxu0 0
      %1529 = vmatprep.subr.bf16.mxu0 0
      %1530 = vmatpush1.bf16.msra.mxu0 0
      %1531 = vmatprep.subr.bf16.mxu0 0
      %1532 = vmatpush1.bf16.msra.mxu0 0
      %1533 = vmatprep.subr.bf16.mxu0 0
      %1534 = vmatpush1.bf16.msra.mxu0 0
      %1535 = vmatprep.subr.bf16.mxu0 0
      %1536 = vmatpush1.bf16.msra.mxu0 0
      %1537 = vmatprep.subr.bf16.mxu0 0
      %1538 = vmatpush1.bf16.msra.mxu0 0
      %1539 = vmatprep.subr.bf16.mxu0 0
      %1540 = vmatpush1.bf16.msra.mxu0 0
      %1541 = vmatprep.subr.bf16.mxu0 0
      %1542 = vmatpush1.bf16.msra.mxu0 0
      %1543 = vmatprep.subr.bf16.mxu0 0
      %1544 = vmatpush1.bf16.msra.mxu0 0
      %1545 = vmatprep.subr.bf16.mxu0 0
      %1546 = vmatpush1.bf16.msra.mxu0 0
      %1547 = vmatprep.subr.bf16.mxu0 0
      %1548 = vmatpush1.bf16.msra.mxu0 0
      %1549 = vmatprep.mubr.bf16.mxu0 0
      %1550 = vmatmul.mubr.bf16.gmra.mrb[0].mxu0 %v1515
      %v1551 = vpop.f32.mrb[0].mxu0
      %v1552 = vadd.f32 0.0, %v1551
      %v1553 = vpop.f32.mrb[0].mxu0
      %v1554 = vpop.f32.mrb[0].mxu0
      %v1555 = vadd.f32 0.0, %v1554
      %v1556 = vpop.f32.mrb[0].mxu0
      %1557 = vdwg.mxu0
      %1562 = vrot.lane.b32.xlu0 %v1004, 16
      %v1563 = vpop.permute.xlu0 %1562
      %1564 = vrot.lane.b32.xlu0 %v1007, 16
      %v1565 = vpop.permute.xlu0 %1564
      %1566 = vrot.lane.b32.xlu0 %v1052, 16
      %v1567 = vpop.permute.xlu0 %1566
      %1568 = vrot.lane.b32.xlu0 %v1055, 16
      %v1569 = vpop.permute.xlu0 %1568
      %1578 = vrot.lane.b32.xlu0 %v1255, 32
      %v1579 = vpop.permute.xlu0 %1578
      %1580 = vrot.lane.b32.xlu0 %v1258, 32
      %v1581 = vpop.permute.xlu0 %1580
      %1582 = vrot.lane.b32.xlu0 %v1302, 32
      %v1583 = vpop.permute.xlu0 %1582
      %1584 = vrot.lane.b32.xlu0 %v1305, 32
      %v1585 = vpop.permute.xlu0 %1584
      %1594 = vrot.lane.b32.xlu0 %v1505, 48
      %v1595 = vpop.permute.xlu0 %1594
      %1596 = vrot.lane.b32.xlu0 %v1508, 48
      %v1597 = vpop.permute.xlu0 %1596
      %1598 = vrot.lane.b32.xlu0 %v1552, 48
      %v1599 = vpop.permute.xlu0 %1598
      %1600 = vrot.lane.b32.xlu0 %v1555, 48
      %v1601 = vpop.permute.xlu0 %1600
      %v1606 = vsel %vm558, %v756, %v1563
      %v1607 = vsel %vm558, %v759, %v1565
      %v1608 = vsel %vm558, %v800, %v1567
      %v1609 = vsel %vm558, %v803, %v1569
      %vm1610 = vcmask 261120
      %v1611 = vsel %vm1610, %v1606, %v1579
      %v1612 = vsel %vm1610, %v1607, %v1581
      %v1613 = vsel %vm1610, %v1608, %v1583
      %v1614 = vsel %vm1610, %v1609, %v1585
      %vm1615 = vcmask 392192
      %v1616 = vsel %vm1615, %v1611, %v1595
      %v1617 = vsel %vm1615, %v1612, %v1597
      %v1618 = vsel %vm1615, %v1613, %v1599
      %v1619 = vsel %vm1615, %v1614, %v1601
      %v1620 = vpack.c.bf16 %v1617, %v1616
      %v1621 = vpack.c.bf16 %v1619, %v1618
      %v1622 = vld [vmem:[%s333] sm:$0xf]
      %v1623 = vld [vmem:[%s333 + $0x4] sm:$0xf]
      %v1624 = vld [vmem:[%s333 + $0x8] sm:$0xf]
      %v1625 = vld [vmem:[%s333 + $0xc] sm:$0xf]
      %v1626 = vld [vmem:[%s333 + $0x10] sm:$0xf]
      %v1627 = vld [vmem:[%s333 + $0x14] sm:$0xf]
      %v1628 = vld [vmem:[%s333 + $0x18] sm:$0xf]
      %v1629 = vld [vmem:[%s333 + $0x1c] sm:$0xf]
      %v1630 = vlaneseq
      %v1631 = vshrl.u32 %v1630, 7
      %v1632 = vsub.s32 3, %v1631
      %v1633 = vrot.slane %v362, %v1632
      %v1642 = vunpack.c.l.b16 %v1622
      %v1643 = vunpack.c.l.b16 %v1623
      %v1644 = vunpack.c.l.b16 %v1624
      %v1645 = vunpack.c.l.b16 %v1625
      %v1646 = vunpack.c.l.b16 %v1626
      %v1647 = vunpack.c.l.b16 %v1627
      %v1648 = vunpack.c.l.b16 %v1628
      %v1649 = vunpack.c.l.b16 %v1629
      %v1650 = vpack.c.b16 %v1643, %v1642
      %v1651 = vpack.c.b16 %v1645, %v1644
      %v1652 = vpack.c.b16 %v1647, %v1646
      %v1653 = vpack.c.b16 %v1649, %v1648
      %v1659 = vsel %vm366, %v1620, 0
      %v1662 = vsel %vm366, %v1621, 0
      %1664 = vmatprep.subr.bf16.mxu0 0
      %1665 = vmatpush1.bf16.msra.mxu0 %v1650
      %1666 = vmatprep.subr.bf16.mxu0 0
      %1667 = vmatpush1.bf16.msra.mxu0 %v1651
      %1668 = vmatprep.subr.bf16.mxu0 0
      %1669 = vmatpush1.bf16.msra.mxu0 %v1652
      %1670 = vmatprep.subr.bf16.mxu0 0
      %1671 = vmatpush1.bf16.msra.mxu0 %v1653
      %1672 = vmatprep.subr.bf16.mxu0 0
      %1673 = vmatpush1.bf16.msra.mxu0 0
      %1674 = vmatprep.subr.bf16.mxu0 0
      %1675 = vmatpush1.bf16.msra.mxu0 0
      %1676 = vmatprep.subr.bf16.mxu0 0
      %1677 = vmatpush1.bf16.msra.mxu0 0
      %1678 = vmatprep.subr.bf16.mxu0 0
      %1679 = vmatpush1.bf16.msra.mxu0 0
      %1680 = vmatprep.subr.bf16.mxu0 0
      %1681 = vmatpush1.bf16.msra.mxu0 0
      %1682 = vmatprep.subr.bf16.mxu0 0
      %1683 = vmatpush1.bf16.msra.mxu0 0
      %1684 = vmatprep.subr.bf16.mxu0 0
      %1685 = vmatpush1.bf16.msra.mxu0 0
      %1686 = vmatprep.subr.bf16.mxu0 0
      %1687 = vmatpush1.bf16.msra.mxu0 0
      %1688 = vmatprep.subr.bf16.mxu0 0
      %1689 = vmatpush1.bf16.msra.mxu0 0
      %1690 = vmatprep.subr.bf16.mxu0 0
      %1691 = vmatpush1.bf16.msra.mxu0 0
      %1692 = vmatprep.subr.bf16.mxu0 0
      %1693 = vmatpush1.bf16.msra.mxu0 0
      %1694 = vmatprep.subr.bf16.mxu0 0
      %1695 = vmatpush1.bf16.msra.mxu0 0
      %1696 = vmatprep.mubr.bf16.mxu0 0
      %1697 = vmatmul.mubr.bf16.gmra.mrb[0].mxu0 %v1659
      %v1698 = vpop.f32.mrb[0].mxu0
      %v1699 = vadd.f32 %v1633, %v1698
      %v1700 = vpop.f32.mrb[0].mxu0
      %v1701 = vpop.f32.mrb[0].mxu0
      %v1702 = vadd.f32 %v1633, %v1701
      %v1703 = vpop.f32.mrb[0].mxu0
      %1704 = vmatprep.mubr.bf16.mxu0 0
      %1705 = vmatmul.mubr.bf16.gmra.mrb[0].mxu0 %v1662
      %v1706 = vpop.f32.mrb[0].mxu0
      %v1707 = vadd.f32 %v1633, %v1706
      %v1708 = vpop.f32.mrb[0].mxu0
      %v1709 = vpop.f32.mrb[0].mxu0
      %v1710 = vadd.f32 %v1633, %v1709
      %v1711 = vpop.f32.mrb[0].mxu0
      %1712 = vdwg.mxu0
      %v1713 = vlaneseq
      %v1714 = vshrl.u32 %v1713, 7
      %v1715 = vsub.s32 4, %v1714
      %v1716 = vrot.slane %v362, %v1715
      %v1717 = vmul.f32 %v1716, %v1699
      %v1718 = vmul.f32 %v1716, %v1702
      %v1719 = vmul.f32 %v1716, %v1707
      %v1720 = vmul.f32 %v1716, %v1710
      %v1721 = vadd.f32 %v358, %v1717
      %v1722 = vadd.f32 %v359, %v1718
      %v1723 = vadd.f32 %v360, %v1719
      %v1724 = vadd.f32 %v361, %v1720
      %v1725 = vsel %vm366, %v1721, 0.0
      %1726 = vadd.xlane.f32.xlu0 %v1725
      %v1727 = vpop.xlane.xlu0 %1726
      %v1728 = vsel %vm366, %v1722, 0.0
      %1729 = vadd.xlane.f32.xlu0 %v1728
      %v1730 = vpop.xlane.xlu0 %1729
      %v1731 = vsel %vm366, %v1723, 0.0
      %1732 = vadd.xlane.f32.xlu0 %v1731
      %v1733 = vpop.xlane.xlu0 %1732
      %v1734 = vsel %vm366, %v1724, 0.0
      %1735 = vadd.xlane.f32.xlu0 %v1734
      %v1736 = vpop.xlane.xlu0 %1735
      %v1737 = vmul.f32 %v1727, %v379
      %v1738 = vmul.f32 %v1730, %v379
      %v1739 = vmul.f32 %v1733, %v379
      %v1740 = vmul.f32 %v1736, %v379
      %v1741 = vsub.f32 %v1721, %v1737
      %v1742 = vsub.f32 %v1722, %v1738
      %v1743 = vsub.f32 %v1723, %v1739
      %v1744 = vsub.f32 %v1724, %v1740
      %v1745 = vmul.f32 %v1741, %v1741
      %v1746 = vmul.f32 %v1742, %v1742
      %v1747 = vmul.f32 %v1743, %v1743
      %v1748 = vmul.f32 %v1744, %v1744
      %v1749 = vsel %vm366, %v1745, 0.0
      %1750 = vadd.xlane.f32.xlu0 %v1749
      %v1751 = vpop.xlane.xlu0 %1750
      %v1752 = vsel %vm366, %v1746, 0.0
      %1753 = vadd.xlane.f32.xlu0 %v1752
      %v1754 = vpop.xlane.xlu0 %1753
      %v1755 = vsel %vm366, %v1747, 0.0
      %1756 = vadd.xlane.f32.xlu0 %v1755
      %v1757 = vpop.xlane.xlu0 %1756
      %v1758 = vsel %vm366, %v1748, 0.0
      %1759 = vadd.xlane.f32.xlu0 %v1758
      %v1760 = vpop.xlane.xlu0 %1759
      %v1761 = vmul.f32 %v1751, %v379
      %v1762 = vmul.f32 %v1754, %v379
      %v1763 = vmul.f32 %v1757, %v379
      %v1764 = vmul.f32 %v1760, %v379
      %v1765 = vadd.f32 %v1761, 1e-06
      %v1766 = vadd.f32 %v1762, 1e-06
      %v1767 = vadd.f32 %v1763, 1e-06
      %v1768 = vadd.f32 %v1764, 1e-06
      %v1769 = vrsqrt.pop %v1765
      %v1770 = vrsqrt.pop %v1766
      %v1771 = vrsqrt.pop %v1767
      %v1772 = vrsqrt.pop %v1768
      %v1773 = vmul.f32 %v1741, %v1769
      %v1774 = vmul.f32 %v1742, %v1770
      %v1775 = vmul.f32 %v1743, %v1771
      %v1776 = vmul.f32 %v1744, %v1772
      %v1777 = vlaneseq
      %v1778 = vshrl.u32 %v1777, 7
      %v1779 = vsub.s32 5, %v1778
      %v1780 = vrot.slane %v362, %v1779
      %v1781 = vmul.f32 %v1773, %v1780
      %v1782 = vmul.f32 %v1774, %v1780
      %v1783 = vmul.f32 %v1775, %v1780
      %v1784 = vmul.f32 %v1776, %v1780
      %v1785 = vlaneseq
      %v1786 = vshrl.u32 %v1785, 7
      %v1787 = vsub.s32 6, %v1786
      %v1788 = vrot.slane %v362, %v1787
      %v1789 = vadd.f32 %v1781, %v1788
      %v1790 = vadd.f32 %v1782, %v1788
      %v1791 = vadd.f32 %v1783, %v1788
      %v1792 = vadd.f32 %v1784, %v1788
      %v1793 = vpack.c.bf16 %v1790, %v1789
      %v1794 = vpack.c.bf16 %v1792, %v1791
      %v1795 = vld [vmem:[%s338] sm:$0xff]
      %v1796 = vld [vmem:[%s338 + $0x8] sm:$0xff]
      %v1797 = vld [vmem:[%s338 + $0x10] sm:$0xff]
      %v1798 = vld [vmem:[%s338 + $0x18] sm:$0xff]
      %v1799 = vld [vmem:[%s338 + $0x20] sm:$0xff]
      %v1800 = vld [vmem:[%s338 + $0x28] sm:$0xff]
      %v1801 = vld [vmem:[%s338 + $0x30] sm:$0xff]
      %v1802 = vld [vmem:[%s338 + $0x38] sm:$0xff]
      %v1803 = vlaneseq
      %v1804 = vshrl.u32 %v1803, 7
      %v1805 = vsub.s32 7, %v1804
      %v1806 = vrot.slane %v362, %v1805
      %v1807 = vlaneseq
      %v1808 = vshrl.u32 %v1807, 7
      %v1809 = vsub.s32 7, %v1808
      %v1810 = vrot.slane %v363, %v1809
      %v1819 = vunpack.c.l.b16 %v1795
      %v1820 = vunpack.c.h.b16 %v1795
      %v1821 = vunpack.c.l.b16 %v1796
      %v1822 = vunpack.c.h.b16 %v1796
      %v1823 = vunpack.c.l.b16 %v1797
      %v1824 = vunpack.c.h.b16 %v1797
      %v1825 = vunpack.c.l.b16 %v1798
      %v1826 = vunpack.c.h.b16 %v1798
      %v1827 = vunpack.c.l.b16 %v1799
      %v1828 = vunpack.c.h.b16 %v1799
      %v1829 = vunpack.c.l.b16 %v1800
      %v1830 = vunpack.c.h.b16 %v1800
      %v1831 = vunpack.c.l.b16 %v1801
      %v1832 = vunpack.c.h.b16 %v1801
      %v1833 = vunpack.c.l.b16 %v1802
      %v1834 = vunpack.c.h.b16 %v1802
      %v1835 = vpack.c.b16 %v1821, %v1819
      %v1836 = vpack.c.b16 %v1822, %v1820
      %v1837 = vpack.c.b16 %v1825, %v1823
      %v1838 = vpack.c.b16 %v1826, %v1824
      %v1839 = vpack.c.b16 %v1829, %v1827
      %v1840 = vpack.c.b16 %v1830, %v1828
      %v1841 = vpack.c.b16 %v1833, %v1831
      %v1842 = vpack.c.b16 %v1834, %v1832
      %v1852 = vsel %vm366, %v1793, 0
      %v1855 = vsel %vm366, %v1794, 0
      %1857 = vmatprep.subr.bf16.mxu0 %v1836
      %1858 = vmatpush1.bf16.msra.mxu0 %v1835
      %1859 = vmatprep.subr.bf16.mxu0 %v1838
      %1860 = vmatpush1.bf16.msra.mxu0 %v1837
      %1861 = vmatprep.subr.bf16.mxu0 %v1840
      %1862 = vmatpush1.bf16.msra.mxu0 %v1839
      %1863 = vmatprep.subr.bf16.mxu0 %v1842
      %1864 = vmatpush1.bf16.msra.mxu0 %v1841
      %1865 = vmatprep.subr.bf16.mxu0 0
      %1866 = vmatpush1.bf16.msra.mxu0 0
      %1867 = vmatprep.subr.bf16.mxu0 0
      %1868 = vmatpush1.bf16.msra.mxu0 0
      %1869 = vmatprep.subr.bf16.mxu0 0
      %1870 = vmatpush1.bf16.msra.mxu0 0
      %1871 = vmatprep.subr.bf16.mxu0 0
      %1872 = vmatpush1.bf16.msra.mxu0 0
      %1873 = vmatprep.subr.bf16.mxu0 0
      %1874 = vmatpush1.bf16.msra.mxu0 0
      %1875 = vmatprep.subr.bf16.mxu0 0
      %1876 = vmatpush1.bf16.msra.mxu0 0
      %1877 = vmatprep.subr.bf16.mxu0 0
      %1878 = vmatpush1.bf16.msra.mxu0 0
      %1879 = vmatprep.subr.bf16.mxu0 0
      %1880 = vmatpush1.bf16.msra.mxu0 0
      %1881 = vmatprep.subr.bf16.mxu0 0
      %1882 = vmatpush1.bf16.msra.mxu0 0
      %1883 = vmatprep.subr.bf16.mxu0 0
      %1884 = vmatpush1.bf16.msra.mxu0 0
      %1885 = vmatprep.subr.bf16.mxu0 0
      %1886 = vmatpush1.bf16.msra.mxu0 0
      %1887 = vmatprep.subr.bf16.mxu0 0
      %1888 = vmatpush1.bf16.msra.mxu0 0
      %1889 = vmatprep.mubr.bf16.mxu0 0
      %1890 = vmatmul.mubr.bf16.gmra.mrb[0].mxu0 %v1852
      %v1891 = vpop.f32.mrb[0].mxu0
      %v1892 = vadd.f32 %v1806, %v1891
      %v1893 = vpop.f32.mrb[0].mxu0
      %v1894 = vadd.f32 %v1810, %v1893
      %v1895 = vpop.f32.mrb[0].mxu0
      %v1896 = vadd.f32 %v1806, %v1895
      %v1897 = vpop.f32.mrb[0].mxu0
      %v1898 = vadd.f32 %v1810, %v1897
      %1899 = vmatprep.mubr.bf16.mxu0 0
      %1900 = vmatmul.mubr.bf16.gmra.mrb[0].mxu0 %v1855
      %v1901 = vpop.f32.mrb[0].mxu0
      %v1902 = vadd.f32 %v1806, %v1901
      %v1903 = vpop.f32.mrb[0].mxu0
      %v1904 = vadd.f32 %v1810, %v1903
      %v1905 = vpop.f32.mrb[0].mxu0
      %v1906 = vadd.f32 %v1806, %v1905
      %v1907 = vpop.f32.mrb[0].mxu0
      %v1908 = vadd.f32 %v1810, %v1907
      %1909 = vdwg.mxu0
      %v1910 = vmul.f32 %v1892, %v1892
      %v1911 = vmul.f32 %v1894, %v1894
      %v1912 = vmul.f32 %v1896, %v1896
      %v1913 = vmul.f32 %v1898, %v1898
      %v1914 = vmul.f32 %v1902, %v1902
      %v1915 = vmul.f32 %v1904, %v1904
      %v1916 = vmul.f32 %v1906, %v1906
      %v1917 = vmul.f32 %v1908, %v1908
      %v1918 = vmul.f32 %v1892, %v1910
      %v1919 = vmul.f32 %v1894, %v1911
      %v1920 = vmul.f32 %v1896, %v1912
      %v1921 = vmul.f32 %v1898, %v1913
      %v1922 = vmul.f32 %v1902, %v1914
      %v1923 = vmul.f32 %v1904, %v1915
      %v1924 = vmul.f32 %v1906, %v1916
      %v1925 = vmul.f32 %v1908, %v1917
      %v1926 = vmul.f32 %v1918, 0.044715
      %v1927 = vmul.f32 %v1919, 0.044715
      %v1928 = vmul.f32 %v1920, 0.044715
      %v1929 = vmul.f32 %v1921, 0.044715
      %v1930 = vmul.f32 %v1922, 0.044715
      %v1931 = vmul.f32 %v1923, 0.044715
      %v1932 = vmul.f32 %v1924, 0.044715
      %v1933 = vmul.f32 %v1925, 0.044715
      %v1934 = vadd.f32 %v1892, %v1926
      %v1935 = vadd.f32 %v1894, %v1927
      %v1936 = vadd.f32 %v1896, %v1928
      %v1937 = vadd.f32 %v1898, %v1929
      %v1938 = vadd.f32 %v1902, %v1930
      %v1939 = vadd.f32 %v1904, %v1931
      %v1940 = vadd.f32 %v1906, %v1932
      %v1941 = vadd.f32 %v1908, %v1933
      %v1942 = vmul.f32 %v1934, 0.7978846
      %v1943 = vmul.f32 %v1935, 0.7978846
      %v1944 = vmul.f32 %v1936, 0.7978846
      %v1945 = vmul.f32 %v1937, 0.7978846
      %v1946 = vmul.f32 %v1938, 0.7978846
      %v1947 = vmul.f32 %v1939, 0.7978846
      %v1948 = vmul.f32 %v1940, 0.7978846
      %v1949 = vmul.f32 %v1941, 0.7978846
      %v1950 = vtanh.pop %v1942
      %v1951 = vtanh.pop %v1943
      %v1952 = vtanh.pop %v1944
      %v1953 = vtanh.pop %v1945
      %v1954 = vtanh.pop %v1946
      %v1955 = vtanh.pop %v1947
      %v1956 = vtanh.pop %v1948
      %v1957 = vtanh.pop %v1949
      %v1958 = vadd.f32 %v1950, 1.0
      %v1959 = vadd.f32 %v1951, 1.0
      %v1960 = vadd.f32 %v1952, 1.0
      %v1961 = vadd.f32 %v1953, 1.0
      %v1962 = vadd.f32 %v1954, 1.0
      %v1963 = vadd.f32 %v1955, 1.0
      %v1964 = vadd.f32 %v1956, 1.0
      %v1965 = vadd.f32 %v1957, 1.0
      %v1966 = vmul.f32 %v1958, 0.5
      %v1967 = vmul.f32 %v1959, 0.5
      %v1968 = vmul.f32 %v1960, 0.5
      %v1969 = vmul.f32 %v1961, 0.5
      %v1970 = vmul.f32 %v1962, 0.5
      %v1971 = vmul.f32 %v1963, 0.5
      %v1972 = vmul.f32 %v1964, 0.5
      %v1973 = vmul.f32 %v1965, 0.5
      %v1974 = vmul.f32 %v1892, %v1966
      %v1975 = vmul.f32 %v1894, %v1967
      %v1976 = vmul.f32 %v1896, %v1968
      %v1977 = vmul.f32 %v1898, %v1969
      %v1978 = vmul.f32 %v1902, %v1970
      %v1979 = vmul.f32 %v1904, %v1971
      %v1980 = vmul.f32 %v1906, %v1972
      %v1981 = vmul.f32 %v1908, %v1973
      %v1982 = vpack.c.bf16 %v1976, %v1974
      %v1983 = vpack.c.bf16 %v1977, %v1975
      %v1984 = vpack.c.bf16 %v1980, %v1978
      %v1985 = vpack.c.bf16 %v1981, %v1979
      %v1986 = vld [vmem:[%s343] sm:$0xf]
      %v1987 = vld [vmem:[%s343 + $0x4] sm:$0xf]
      %v1988 = vld [vmem:[%s343 + $0x8] sm:$0xf]
      %v1989 = vld [vmem:[%s343 + $0xc] sm:$0xf]
      %v1990 = vld [vmem:[%s343 + $0x10] sm:$0xf]
      %v1991 = vld [vmem:[%s343 + $0x14] sm:$0xf]
      %v1992 = vld [vmem:[%s343 + $0x18] sm:$0xf]
      %v1993 = vld [vmem:[%s343 + $0x1c] sm:$0xf]
      %v1994 = vld [vmem:[%s343 + $0x20] sm:$0xf]
      %v1995 = vld [vmem:[%s343 + $0x24] sm:$0xf]
      %v1996 = vld [vmem:[%s343 + $0x28] sm:$0xf]
      %v1997 = vld [vmem:[%s343 + $0x2c] sm:$0xf]
      %v1998 = vld [vmem:[%s343 + $0x30] sm:$0xf]
      %v1999 = vld [vmem:[%s343 + $0x34] sm:$0xf]
      %v2000 = vld [vmem:[%s343 + $0x38] sm:$0xf]
      %v2001 = vld [vmem:[%s343 + $0x3c] sm:$0xf]
      %v2002 = vld [vmem:[%s343 + $0x40] sm:$0xf]
      %v2003 = vld [vmem:[%s343 + $0x44] sm:$0xf]
      %v2004 = vld [vmem:[%s343 + $0x48] sm:$0xf]
      %v2005 = vld [vmem:[%s343 + $0x4c] sm:$0xf]
      %v2006 = vld [vmem:[%s343 + $0x50] sm:$0xf]
      %v2007 = vld [vmem:[%s343 + $0x54] sm:$0xf]
      %v2008 = vld [vmem:[%s343 + $0x58] sm:$0xf]
      %v2009 = vld [vmem:[%s343 + $0x5c] sm:$0xf]
      %v2010 = vld [vmem:[%s343 + $0x60] sm:$0xf]
      %v2011 = vld [vmem:[%s343 + $0x64] sm:$0xf]
      %v2012 = vld [vmem:[%s343 + $0x68] sm:$0xf]
      %v2013 = vld [vmem:[%s343 + $0x6c] sm:$0xf]
      %v2014 = vld [vmem:[%s343 + $0x70] sm:$0xf]
      %v2015 = vld [vmem:[%s343 + $0x74] sm:$0xf]
      %v2016 = vld [vmem:[%s343 + $0x78] sm:$0xf]
      %v2017 = vld [vmem:[%s343 + $0x7c] sm:$0xf]
      %v2018 = vlaneseq
      %v2019 = vshrl.u32 %v2018, 7
      %v2020 = vsub.s32 0, %v2019
      %v2021 = vrot.slane %v364, %v2020
      %v2054 = vunpack.c.l.b16 %v1986
      %v2055 = vunpack.c.l.b16 %v1987
      %v2056 = vunpack.c.l.b16 %v1988
      %v2057 = vunpack.c.l.b16 %v1989
      %v2058 = vunpack.c.l.b16 %v1990
      %v2059 = vunpack.c.l.b16 %v1991
      %v2060 = vunpack.c.l.b16 %v1992
      %v2061 = vunpack.c.l.b16 %v1993
      %v2062 = vunpack.c.l.b16 %v1994
      %v2063 = vunpack.c.l.b16 %v1995
      %v2064 = vunpack.c.l.b16 %v1996
      %v2065 = vunpack.c.l.b16 %v1997
      %v2066 = vunpack.c.l.b16 %v1998
      %v2067 = vunpack.c.l.b16 %v1999
      %v2068 = vunpack.c.l.b16 %v2000
      %v2069 = vunpack.c.l.b16 %v2001
      %v2070 = vunpack.c.l.b16 %v2002
      %v2071 = vunpack.c.l.b16 %v2003
      %v2072 = vunpack.c.l.b16 %v2004
      %v2073 = vunpack.c.l.b16 %v2005
      %v2074 = vunpack.c.l.b16 %v2006
      %v2075 = vunpack.c.l.b16 %v2007
      %v2076 = vunpack.c.l.b16 %v2008
      %v2077 = vunpack.c.l.b16 %v2009
      %v2078 = vunpack.c.l.b16 %v2010
      %v2079 = vunpack.c.l.b16 %v2011
      %v2080 = vunpack.c.l.b16 %v2012
      %v2081 = vunpack.c.l.b16 %v2013
      %v2082 = vunpack.c.l.b16 %v2014
      %v2083 = vunpack.c.l.b16 %v2015
      %v2084 = vunpack.c.l.b16 %v2016
      %v2085 = vunpack.c.l.b16 %v2017
      %v2086 = vpack.c.b16 %v2055, %v2054
      %v2087 = vpack.c.b16 %v2057, %v2056
      %v2088 = vpack.c.b16 %v2059, %v2058
      %v2089 = vpack.c.b16 %v2061, %v2060
      %v2090 = vpack.c.b16 %v2063, %v2062
      %v2091 = vpack.c.b16 %v2065, %v2064
      %v2092 = vpack.c.b16 %v2067, %v2066
      %v2093 = vpack.c.b16 %v2069, %v2068
      %v2094 = vpack.c.b16 %v2071, %v2070
      %v2095 = vpack.c.b16 %v2073, %v2072
      %v2096 = vpack.c.b16 %v2075, %v2074
      %v2097 = vpack.c.b16 %v2077, %v2076
      %v2098 = vpack.c.b16 %v2079, %v2078
      %v2099 = vpack.c.b16 %v2081, %v2080
      %v2100 = vpack.c.b16 %v2083, %v2082
      %v2101 = vpack.c.b16 %v2085, %v2084
      %2118 = vmatprep.subr.bf16.mxu0 0
      %2119 = vmatpush1.bf16.msra.mxu0 %v2086
      %2120 = vmatprep.subr.bf16.mxu0 0
      %2121 = vmatpush1.bf16.msra.mxu0 %v2087
      %2122 = vmatprep.subr.bf16.mxu0 0
      %2123 = vmatpush1.bf16.msra.mxu0 %v2088
      %2124 = vmatprep.subr.bf16.mxu0 0
      %2125 = vmatpush1.bf16.msra.mxu0 %v2089
      %2126 = vmatprep.subr.bf16.mxu0 0
      %2127 = vmatpush1.bf16.msra.mxu0 %v2090
      %2128 = vmatprep.subr.bf16.mxu0 0
      %2129 = vmatpush1.bf16.msra.mxu0 %v2091
      %2130 = vmatprep.subr.bf16.mxu0 0
      %2131 = vmatpush1.bf16.msra.mxu0 %v2092
      %2132 = vmatprep.subr.bf16.mxu0 0
      %2133 = vmatpush1.bf16.msra.mxu0 %v2093
      %2134 = vmatprep.subr.bf16.mxu0 0
      %2135 = vmatpush1.bf16.msra.mxu0 %v2094
      %2136 = vmatprep.subr.bf16.mxu0 0
      %2137 = vmatpush1.bf16.msra.mxu0 %v2095
      %2138 = vmatprep.subr.bf16.mxu0 0
      %2139 = vmatpush1.bf16.msra.mxu0 %v2096
      %2140 = vmatprep.subr.bf16.mxu0 0
      %2141 = vmatpush1.bf16.msra.mxu0 %v2097
      %2142 = vmatprep.subr.bf16.mxu0 0
      %2143 = vmatpush1.bf16.msra.mxu0 %v2098
      %2144 = vmatprep.subr.bf16.mxu0 0
      %2145 = vmatpush1.bf16.msra.mxu0 %v2099
      %2146 = vmatprep.subr.bf16.mxu0 0
      %2147 = vmatpush1.bf16.msra.mxu0 %v2100
      %2148 = vmatprep.subr.bf16.mxu0 0
      %2149 = vmatpush1.bf16.msra.mxu0 %v2101
      %2150 = vmatprep.mubr.bf16.mxu0 %v1983
      %2151 = vmatmul.mubr.bf16.gmra.mrb[0].mxu0 %v1982
      %v2152 = vpop.f32.mrb[0].mxu0
      %v2153 = vadd.f32 %v2021, %v2152
      %v2154 = vpop.f32.mrb[0].mxu0
      %v2155 = vpop.f32.mrb[0].mxu0
      %v2156 = vadd.f32 %v2021, %v2155
      %v2157 = vpop.f32.mrb[0].mxu0
      %2158 = vmatprep.mubr.bf16.mxu0 %v1985
      %2159 = vmatmul.mubr.bf16.gmra.mrb[0].mxu0 %v1984
      %v2160 = vpop.f32.mrb[0].mxu0
      %v2161 = vadd.f32 %v2021, %v2160
      %v2162 = vpop.f32.mrb[0].mxu0
      %v2163 = vpop.f32.mrb[0].mxu0
      %v2164 = vadd.f32 %v2021, %v2163
      %v2165 = vpop.f32.mrb[0].mxu0
      %2166 = vdwg.mxu0
      %v2167 = vlaneseq
      %v2168 = vshrl.u32 %v2167, 7
      %v2169 = vsub.s32 1, %v2168
      %v2170 = vrot.slane %v364, %v2169
      %v2171 = vmul.f32 %v2170, %v2153
      %v2172 = vmul.f32 %v2170, %v2156
      %v2173 = vmul.f32 %v2170, %v2161
      %v2174 = vmul.f32 %v2170, %v2164
      %v2175 = vadd.f32 %v1721, %v2171
      %v2176 = vadd.f32 %v1722, %v2172
      %v2177 = vadd.f32 %v1723, %v2173
      %v2178 = vadd.f32 %v1724, %v2174
      %2179 = vst.msk [vmem:[#allocation2] sm:$0xff] %vm366, %v2175
      %2180 = vst.msk [vmem:[#allocation2 + $0x8] sm:$0xff] %vm366, %v2176
      %2181 = vst.msk [vmem:[#allocation2 + $0x10] sm:$0xff] %vm366, %v2177
      %2182 = vst.msk [vmem:[#allocation2 + $0x18] sm:$0xff] %vm366, %v2178
      %p2183 = scmp.eq.s32.totalorder %s18, 1
      // Predicated region
      $region53: #{uni_multitask_forward.4} parent=47 // pred_check
        %p2184 = pneg %p2183
      $region54: #{uni_multitask_forward.4} parent=47 // pred_check_branch
        %2186 = sbr.rel (%p2184) target = $region56
      $region55: #{uni_multitask_forward.4} parent=47 // pred_region
        %2187 = vst.msk [vmem:[%s7] sm:$0xff] %vm366, %v2175
        %2188 = vst.msk [vmem:[%s7 + $0x8] sm:$0xff] %vm366, %v2177
      $region56: #{uni_multitask_forward.4} parent=47 // pred_fallthru
        _
      // Predicated region
      $region57: #{uni_multitask_forward.4} parent=47 // pred_check
        %p2189 = pneg %p203
      $region58: #{uni_multitask_forward.4} parent=47 // pred_check_branch
        %2191 = sbr.rel (%p2189) target = $region60
      $region59: #{uni_multitask_forward.4} parent=47 // pred_region
        _
      $region60: #{uni_multitask_forward.4} parent=47 // pred_fallthru
        _
      // Predicated region
      $region61: #{uni_multitask_forward.4} parent=47 // pred_check
        %p2192 = pneg %p203
      $region62: #{uni_multitask_forward.4} parent=47 // pred_check_branch
        %2194 = sbr.rel (%p2192) target = $region64
      $region63: #{uni_multitask_forward.4} parent=47 // pred_region
        _
      $region64: #{uni_multitask_forward.4} parent=47 // pred_fallthru
        _
    $region48: #{uni_multitask_forward.4} parent=5 // pred_fallthru
      _
    %p2195 = scmp.le.s32.totalorder 2, %s13
    // Predicated region
    $region65: #{uni_multitask_forward.4} parent=5 // pred_check
      %p2196 = pneg %p2195
    $region66: #{uni_multitask_forward.4} parent=5 // pred_check_branch
      %2198 = sbr.rel (%p2196) target = $region68
    $region67: #{uni_multitask_forward.4} parent=5 // pred_region
      %s2199 = ssub.s32 %s13, 2
    $region68: #{uni_multitask_forward.4} parent=5 // pred_fallthru
      _
  $region6: #{uni_multitask_forward.4} parent=0 // loop_footer
    %s17 = sadd.s32 1, %s13
  $region7: #{uni_multitask_forward.4} parent=0 // loop_footer_branch
    %12 = sbr.rel target = $region3
  $region8: #{uni_multitask_forward.4} parent=0 // loop_exit
    _

</llo_original>
